<compile_context>
chip_gen: v6e
topology: v6e:2x2x1
jax: 0.10.0
libtpu: 0.0.40
codegen_flags: <defaults>
</compile_context>

<pallas_src>
import jax
import jax.numpy as jnp
from jax import lax
from jax.experimental import pallas as pl
from jax.experimental.pallas import tpu as pltpu

Z_DIM = 2              # DD_VAE default z_dim
CAT = 10               # categories per latent dim
IN_DIM = 784           # 28x28 flattened images
IN_PAD = 896           # 7 * 128 : lane-dense padding of the 784-wide dims
LATENT = Z_DIM * CAT   # flattened latent code width (20)


def _round_up(n, m):
    return ((n + m - 1) // m) * m


def _cdiv(a, b):
    return -(-a // b)


def dd_vae_kernel(x_ref, g_ref,
                  ew1, eb1, ew2, eb2, ew3, eb3,
                  dw1, db1, dw2, db2, dw3, db3,
                  vae_out, ae_out, simplex_out,
                  zstack):
    tb = x_ref.shape[0]               # batch tile (static)
    bf = jnp.bfloat16

    # ---------------- Encoder: 896(pad of 784) -> 512 -> 256 -> 20 ----------
    x = x_ref[...]                    # already bf16
    h = jnp.dot(x, ew1[...], preferred_element_type=jnp.float32) + eb1[...]
    h = jnp.maximum(h, 0.0).astype(bf)
    h = jnp.dot(h, ew2[...], preferred_element_type=jnp.float32) + eb2[...]
    h = jnp.maximum(h, 0.0).astype(bf)
    logits = jnp.dot(h, ew3[...], preferred_element_type=jnp.float32) + eb3[...]  # (tb, 20) f32

    g = g_ref[...]                    # Gumbel noise, (tb, 20) f32
    pert = logits + g                 # Gumbel-max perturbed logits

    # ------ vectorized per-group softmax + Gumbel-max one-hot sampling ------
    # All ops are full (tb, LATENT) vector ops; stores are single full-width
    # writes (no lane-offset masked partial stores).
    lane = lax.broadcasted_iota(jnp.int32, (tb, LATENT), 1)
    lane_f = lane.astype(jnp.float32)
    neg_inf = jnp.float32(-jnp.inf)

    # Per-group (segment) maxima of logits / perturbed logits, scattered back
    # to every lane of the group.
    m_full = jnp.full((tb, LATENT), neg_inf, jnp.float32)
    pm_full = jnp.full((tb, LATENT), neg_inf, jnp.float32)
    for z in range(Z_DIM):
        in_g = (lane >= z * CAT) & (lane < (z + 1) * CAT)
        m_z = jnp.max(jnp.where(in_g, logits, neg_inf), axis=-1, keepdims=True)
        pm_z = jnp.max(jnp.where(in_g, pert, neg_inf), axis=-1, keepdims=True)
        m_full = jnp.where(in_g, m_z, m_full)
        pm_full = jnp.where(in_g, pm_z, pm_full)

    e = jnp.exp(logits - m_full)      # stable exp, <= 1

    # Per-group denominators and argmax lane (lowest index wins on ties).
    den_full = jnp.ones((tb, LATENT), jnp.float32)
    idx_full = jnp.zeros((tb, LATENT), jnp.float32)
    for z in range(Z_DIM):
        in_g = (lane >= z * CAT) & (lane < (z + 1) * CAT)
        den_z = jnp.sum(jnp.where(in_g, e, 0.0), axis=-1, keepdims=True)
        cand = jnp.where(in_g & (pert >= pm_full), lane_f, jnp.float32(LATENT))
        idx_z = jnp.min(cand, axis=-1, keepdims=True)
        den_full = jnp.where(in_g, den_z, den_full)
        idx_full = jnp.where(in_g, idx_z, idx_full)

    p = e / den_full                                  # exact softmax (rows sum to 1)
    simplex_out[...] = p                              # simplex_S output (f32)
    zstack[:tb, :] = (lane_f == idx_full).astype(bf)  # strict one-hot sample (VAE path)
    zstack[tb:, :] = p.astype(bf)                     # simplex latent (AE path)

    # ------- Fused decoders (shared weights): 20 -> 256 -> 512 -> 896 -------
    # Rows [0:tb] = one-hot latent (VAE path), rows [tb:2tb] = simplex (AE path)
    zb = zstack[...]                                  # (2*tb, 20) bf16
    h1 = jnp.dot(zb, dw1[...], preferred_element_type=jnp.float32) + db1[...]
    h1 = jnp.maximum(h1, 0.0).astype(bf)
    h2 = jnp.dot(h1, dw2[...], preferred_element_type=jnp.float32) + db2[...]
    h2 = jnp.maximum(h2, 0.0).astype(bf)
    out = jnp.dot(h2, dw3[...], preferred_element_type=jnp.float32) + db3[...]
    out = jax.nn.sigmoid(out)                         # f32 sigmoid (v5e-safe)
    out = out.astype(vae_out.dtype)                   # bf16 writeback (halves HBM)

    vae_out[...] = out[:tb]
    ae_out[...] = out[tb:]


def _choose_tile(B, tile_cap):
    """Batch tile: as large as the cap allows, but with >= 2 grid steps when the
    batch permits (v7x megacore), snapped to a multiple of 128 when >= 128."""
    b8 = _round_up(max(B, 1), 8)
    cap = max(8, (int(tile_cap) // 8) * 8)
    half = _round_up(_cdiv(b8, 2), 8)        # forces >= 2 steps for b8 > 8
    tile = min(cap, half)
    if tile >= 128:
        tile = (tile // 128) * 128           # 128-aligned MXU M-streams
    tile = max(tile, 8)
    n_steps = _cdiv(b8, tile)
    return tile, n_steps * tile


def _vmem_limit_bytes(tile_b, weight_bytes):
    """Rough per-step VMEM footprint (double-buffered blocks + f32 activations),
    with slack; 20-wide arrays are counted as 128 lanes (layout padding)."""
    act = tile_b * (512 + 256) * 4 + 2 * tile_b * (256 + 512 + IN_PAD) * 4
    io_in = 2 * (tile_b * IN_PAD * 2 + tile_b * 128 * 4)          # x, g (2 bufs)
    io_out = 2 * (2 * tile_b * IN_PAD * 2 + tile_b * 128 * 4)     # 3 outputs (2 bufs)
    scratch = 2 * tile_b * 128 * 2
    est = 2 * weight_bytes + act + io_in + io_out + scratch
    return int(min(max(est * 1.5 + (16 << 20), 32 << 20), 100 << 20))


def dd_vae_forward(x, gumbel, params, tile_b=512, out_dtype=jnp.bfloat16):
    """Returns (x_rec_vae, x_rec_ae, simplex_S) exactly like DD_VAE.forward.

    Reconstructions are returned in `out_dtype` (default bfloat16 to keep the
    kernel's HBM writeback halved end-to-end; pass jnp.float32 for f32)."""
    B = x.shape[0]
    TILE_B, B_pad = _choose_tile(B, tile_b)
    n_steps = B_pad // TILE_B

    (ew1, eb1, ew2, eb2, ew3, eb3, dw1, db1, dw2, db2, dw3, db3) = params

    bf = jnp.bfloat16
    # Pad batch + the 784-wide dims to lane-dense shapes; weights -> bf16.
    xp = jnp.pad(x, ((0, B_pad - B), (0, IN_PAD - IN_DIM))).astype(bf)
    gp = jnp.pad(gumbel, ((0, B_pad - B), (0, 0))).astype(jnp.float32)

    ew1p = jnp.pad(ew1, ((0, IN_PAD - IN_DIM), (0, 0))).astype(bf)
    dw3p = jnp.pad(dw3, ((0, 0), (0, IN_PAD - IN_DIM))).astype(bf)
    db3p = jnp.pad(db3, ((0, 0), (0, IN_PAD - IN_DIM))).astype(jnp.float32)

    # TODO(synk): decoder_equal_weights=False would need a second decoder weight
    # set and two separate decoder passes; the module default (True) is fused here.
    wparams = (ew1p, eb1.astype(jnp.float32),
               ew2.astype(bf), eb2.astype(jnp.float32),
               ew3.astype(bf), eb3.astype(jnp.float32),
               dw1.astype(bf), db1.astype(jnp.float32),
               dw2.astype(bf), db2.astype(jnp.float32),
               dw3p, db3p)
    weight_bytes = sum(int(w.size) * w.dtype.itemsize for w in wparams)

    def row_spec(width):
        return pl.BlockSpec((TILE_B, width), lambda i: (i, 0))

    def resident_spec(shape):
        # Constant index_map -> the block stays VMEM-resident across grid steps.
        return pl.BlockSpec(shape, lambda i: (0, 0))

    in_specs = ([row_spec(IN_PAD), row_spec(LATENT)]
                + [resident_spec(w.shape) for w in wparams])
    out_specs = (row_spec(IN_PAD), row_spec(IN_PAD), row_spec(LATENT))
    out_shapes = (
        jax.ShapeDtypeStruct((B_pad, IN_PAD), jnp.bfloat16),   # x_rec_vae (bf16 writeback)
        jax.ShapeDtypeStruct((B_pad, IN_PAD), jnp.bfloat16),   # x_rec_ae
        jax.ShapeDtypeStruct((B_pad, LATENT), jnp.float32),    # simplex_S
    )

    flops = (2 * B_pad * (IN_PAD * 512 + 512 * 256 + 256 * LATENT)
             + 2 * (2 * B_pad) * (LATENT * 256 + 256 * 512 + 512 * IN_PAD))
    transcendentals = B_pad * LATENT + 2 * B_pad * IN_PAD
    bytes_accessed = (int(xp.size) * 2 + int(gp.size) * 4 + weight_bytes
                      + 2 * B_pad * IN_PAD * 2 + B_pad * LATENT * 4)

    fn = pl.pallas_call(
        dd_vae_kernel,
        out_shape=out_shapes,
        grid=(n_steps,),
        in_specs=in_specs,
        out_specs=out_specs,
        scratch_shapes=[pltpu.VMEM((2 * TILE_B, LATENT), jnp.bfloat16)],
        compiler_params=pltpu.CompilerParams(
            dimension_semantics=("parallel",),
            vmem_limit_bytes=_vmem_limit_bytes(TILE_B, weight_bytes)),
        cost_estimate=pl.CostEstimate(flops=flops,
                                      transcendentals=transcendentals,
                                      bytes_accessed=bytes_accessed),
    )
    vae_p, ae_p, simplex_p = fn(xp, gp, *wparams)

    x_rec_vae = vae_p[:B, :IN_DIM].astype(out_dtype)
    x_rec_ae = ae_p[:B, :IN_DIM].astype(out_dtype)
    simplex_S = simplex_p[:B].reshape(B, Z_DIM, CAT)
    return x_rec_vae, x_rec_ae, simplex_S


def init_linear(key, fan_in, fan_out):
    """Deterministic PyTorch-style (Kaiming-uniform) Linear init, stored (in, out)."""
    k = 1.0 / jnp.sqrt(jnp.float32(fan_in))
    wk, bk = jax.random.split(key)
    W = jax.random.uniform(wk, (fan_in, fan_out), jnp.float32, -k, k)
    b = jax.random.uniform(bk, (1, fan_out), jnp.float32, -k, k)
    return W, b


def _ref_deterministic(x, params):
    """Pure-JAX f32 reference for the deterministic parts (simplex + AE path)."""
    ew1, eb1, ew2, eb2, ew3, eb3, dw1, db1, dw2, db2, dw3, db3 = params
    h = jnp.maximum(x @ ew1 + eb1, 0.0)
    h = jnp.maximum(h @ ew2 + eb2, 0.0)
    logits = h @ ew3 + eb3
    simplex = jax.nn.softmax(logits.reshape(x.shape[0], Z_DIM, CAT), axis=-1)
    z_ae = simplex.reshape(x.shape[0], LATENT)
    h1 = jnp.maximum(z_ae @ dw1 + db1, 0.0)
    h2 = jnp.maximum(h1 @ dw2 + db2, 0.0)
    x_rec_ae = jax.nn.sigmoid(h2 @ dw3 + db3)
    return x_rec_ae, simplex


# TODO(synk): Adam optimizers, BCE/KL losses and .backward() in optimize_* /
# dirichlet_sampling are training-only and not part of the forward pass.

if __name__ == "__main__":
    key = jax.random.PRNGKey(0)
    kx, kg, kp = jax.random.split(key, 3)

    B = 2
    # MNIST-like flattened inputs in [0, 1)
    x = jax.random.uniform(kx, (B, IN_DIM), jnp.float32)
    # Gumbel noise for the in-kernel categorical (Gumbel-max) sampling
    gumbel = jax.random.gumbel(kg, (B, LATENT), dtype=jnp.float32)

    keys = jax.random.split(kp, 6)
    ew1, eb1 = init_linear(keys[0], IN_DIM, 512)
    ew2, eb2 = init_linear(keys[1], 512, 256)
    ew3, eb3 = init_linear(keys[2], 256, LATENT)
    dw1, db1 = init_linear(keys[3], LATENT, 256)
    dw2, db2 = init_linear(keys[4], 256, 512)
    dw3, db3 = init_linear(keys[5], 512, IN_DIM)
    params = (ew1, eb1, ew2, eb2, ew3, eb3, dw1, db1, dw2, db2, dw3, db3)

    x_rec_vae, x_rec_ae, simplex_S = dd_vae_forward(x, gumbel, params)
    jax.block_until_ready((x_rec_vae, x_rec_ae, simplex_S))

    assert x_rec_vae.shape == (B, IN_DIM)
    assert x_rec_ae.shape == (B, IN_DIM)
    assert simplex_S.shape == (B, Z_DIM, CAT)
    # Exact softmax divide -> rows sum to 1 (f32 rounding); reconstructions in [0,1]
    assert bool(jnp.allclose(simplex_S.sum(-1), 1.0, atol=1e-3))
    assert bool(jnp.all((x_rec_vae >= 0.0) & (x_rec_vae <= 1.0)))
    assert bool(jnp.all((x_rec_ae >= 0.0) & (x_rec_ae <= 1.0)))
    # Each one-hot-driven VAE reconstruction row must be a valid probability map
    assert bool(jnp.all(jnp.isfinite(x_rec_vae.astype(jnp.float32))))

    # Deterministic paths vs pure-f32 JAX reference (loose tol: bf16 MXU matmuls
    # and bf16 output writeback)
    ref_ae, ref_simplex = _ref_deterministic(x, params)
    assert bool(jnp.allclose(simplex_S, ref_simplex, atol=5e-2))
    assert bool(jnp.allclose(x_rec_ae.astype(jnp.float32), ref_ae, atol=5e-2))

    # Exercise a multi-step grid + batch padding path (B not a tile multiple).
    B2 = 20
    x2 = jax.random.uniform(jax.random.PRNGKey(1), (B2, IN_DIM), jnp.float32)
    g2 = jax.random.gumbel(jax.random.PRNGKey(2), (B2, LATENT), dtype=jnp.float32)
    v2, a2, s2 = dd_vae_forward(x2, g2, params, tile_b=8)
    jax.block_until_ready((v2, a2, s2))
    assert v2.shape == (B2, IN_DIM) and a2.shape == (B2, IN_DIM)
    assert s2.shape == (B2, Z_DIM, CAT)
    assert bool(jnp.allclose(s2.sum(-1), 1.0, atol=1e-3))

    print("KERNEL_OK")
</pallas_src>

<mosaic_0001>
module attributes {stable_mosaic.version = 11 : i64} {
  func.func @dd_vae_kernel(%arg0: i32, %arg1: memref<8x896xbf16, #tpu.memory_space<vmem>>, %arg2: memref<8x20xf32, #tpu.memory_space<vmem>>, %arg3: memref<896x512xbf16, #tpu.memory_space<vmem>>, %arg4: memref<1x512xf32, #tpu.memory_space<vmem>>, %arg5: memref<512x256xbf16, #tpu.memory_space<vmem>>, %arg6: memref<1x256xf32, #tpu.memory_space<vmem>>, %arg7: memref<256x20xbf16, #tpu.memory_space<vmem>>, %arg8: memref<1x20xf32, #tpu.memory_space<vmem>>, %arg9: memref<20x256xbf16, #tpu.memory_space<vmem>>, %arg10: memref<1x256xf32, #tpu.memory_space<vmem>>, %arg11: memref<256x512xbf16, #tpu.memory_space<vmem>>, %arg12: memref<1x512xf32, #tpu.memory_space<vmem>>, %arg13: memref<512x896xbf16, #tpu.memory_space<vmem>>, %arg14: memref<1x896xf32, #tpu.memory_space<vmem>>, %arg15: memref<8x896xbf16, #tpu.memory_space<vmem>>, %arg16: memref<8x896xbf16, #tpu.memory_space<vmem>>, %arg17: memref<8x20xf32, #tpu.memory_space<vmem>>, %arg18: memref<16x20xbf16, #tpu.memory_space<vmem>>) attributes {dimension_semantics = [#tpu.dimension_semantics<parallel>], iteration_bounds = array<i64: 1>, scalar_prefetch = 0 : i64, scratch_operands = 1 : i64, tpu.core_type = #tpu.core_type<tc>, window_params = [{transform_indices = @transform_0, window_bounds = array<i64: 8, 896>}, {transform_indices = @transform_1, window_bounds = array<i64: 8, 20>}, {pipeline_mode = #tpu.pipeline_mode<synchronous>, transform_indices = @transform_2, window_bounds = array<i64: 896, 512>}, {pipeline_mode = #tpu.pipeline_mode<synchronous>, transform_indices = @transform_3, window_bounds = array<i64: 1, 512>}, {pipeline_mode = #tpu.pipeline_mode<synchronous>, transform_indices = @transform_4, window_bounds = array<i64: 512, 256>}, {pipeline_mode = #tpu.pipeline_mode<synchronous>, transform_indices = @transform_5, window_bounds = array<i64: 1, 256>}, {pipeline_mode = #tpu.pipeline_mode<synchronous>, transform_indices = @transform_6, window_bounds = array<i64: 256, 20>}, {pipeline_mode = #tpu.pipeline_mode<synchronous>, transform_indices = @transform_7, window_bounds = array<i64: 1, 20>}, {pipeline_mode = #tpu.pipeline_mode<synchronous>, transform_indices = @transform_8, window_bounds = array<i64: 20, 256>}, {pipeline_mode = #tpu.pipeline_mode<synchronous>, transform_indices = @transform_9, window_bounds = array<i64: 1, 256>}, {pipeline_mode = #tpu.pipeline_mode<synchronous>, transform_indices = @transform_10, window_bounds = array<i64: 256, 512>}, {pipeline_mode = #tpu.pipeline_mode<synchronous>, transform_indices = @transform_11, window_bounds = array<i64: 1, 512>}, {pipeline_mode = #tpu.pipeline_mode<synchronous>, transform_indices = @transform_12, window_bounds = array<i64: 512, 896>}, {pipeline_mode = #tpu.pipeline_mode<synchronous>, transform_indices = @transform_13, window_bounds = array<i64: 1, 896>}, {transform_indices = @transform_14, window_bounds = array<i64: 8, 896>}, {transform_indices = @transform_15, window_bounds = array<i64: 8, 896>}, {transform_indices = @transform_16, window_bounds = array<i64: 8, 20>}]} {
    %c0 = arith.constant 0 : index
    %c0_0 = arith.constant 0 : index
    %0 = vector.load %arg1[%c0, %c0_0] : memref<8x896xbf16, #tpu.memory_space<vmem>>, vector<8x896xbf16>
    %c0_1 = arith.constant 0 : index
    %c0_2 = arith.constant 0 : index
    %1 = vector.load %arg3[%c0_1, %c0_2] : memref<896x512xbf16, #tpu.memory_space<vmem>>, vector<896x512xbf16>
    %cst = arith.constant dense<0.000000e+00> : vector<8x512xf32>
    %2 = tpu.matmul %0, %1, %cst {dimension_numbers = #tpu.dot_dimension_numbers<[1], [0], [0], [1], [0, 0, 1, 1], [], []>} : vector<8x896xbf16>, vector<896x512xbf16>, vector<8x512xf32> -> vector<8x512xf32>
    %c0_3 = arith.constant 0 : index
    %c0_4 = arith.constant 0 : index
    %3 = vector.load %arg4[%c0_3, %c0_4] : memref<1x512xf32, #tpu.memory_space<vmem>>, vector<1x512xf32>
    %4 = vector.broadcast %3 : vector<1x512xf32> to vector<8x512xf32>
    %5 = arith.addf %2, %4 : vector<8x512xf32>
    %cst_5 = arith.constant 0.000000e+00 : f32
    %6 = vector.broadcast %cst_5 : f32 to vector<8x512xf32>
    %7 = arith.maximumf %5, %6 : vector<8x512xf32>
    %8 = arith.truncf %7 : vector<8x512xf32> to vector<8x512xbf16>
    %c0_6 = arith.constant 0 : index
    %c0_7 = arith.constant 0 : index
    %9 = vector.load %arg5[%c0_6, %c0_7] : memref<512x256xbf16, #tpu.memory_space<vmem>>, vector<512x256xbf16>
    %cst_8 = arith.constant dense<0.000000e+00> : vector<8x256xf32>
    %10 = tpu.matmul %8, %9, %cst_8 {dimension_numbers = #tpu.dot_dimension_numbers<[1], [0], [0], [1], [0, 0, 1, 1], [], []>} : vector<8x512xbf16>, vector<512x256xbf16>, vector<8x256xf32> -> vector<8x256xf32>
    %c0_9 = arith.constant 0 : index
    %c0_10 = arith.constant 0 : index
    %11 = vector.load %arg6[%c0_9, %c0_10] : memref<1x256xf32, #tpu.memory_space<vmem>>, vector<1x256xf32>
    %12 = vector.broadcast %11 : vector<1x256xf32> to vector<8x256xf32>
    %13 = arith.addf %10, %12 : vector<8x256xf32>
    %cst_11 = arith.constant 0.000000e+00 : f32
    %14 = vector.broadcast %cst_11 : f32 to vector<8x256xf32>
    %15 = arith.maximumf %13, %14 : vector<8x256xf32>
    %16 = arith.truncf %15 : vector<8x256xf32> to vector<8x256xbf16>
    %c0_12 = arith.constant 0 : index
    %c0_13 = arith.constant 0 : index
    %17 = vector.load %arg7[%c0_12, %c0_13] : memref<256x20xbf16, #tpu.memory_space<vmem>>, vector<256x20xbf16>
    %cst_14 = arith.constant dense<0.000000e+00> : vector<8x20xf32>
    %18 = tpu.matmul %16, %17, %cst_14 {dimension_numbers = #tpu.dot_dimension_numbers<[1], [0], [0], [1], [0, 0, 1, 1], [], []>} : vector<8x256xbf16>, vector<256x20xbf16>, vector<8x20xf32> -> vector<8x20xf32>
    %c0_15 = arith.constant 0 : index
    %c0_16 = arith.constant 0 : index
    %19 = vector.load %arg8[%c0_15, %c0_16] : memref<1x20xf32, #tpu.memory_space<vmem>>, vector<1x20xf32>
    %20 = vector.broadcast %19 : vector<1x20xf32> to vector<8x20xf32>
    %21 = arith.addf %18, %20 : vector<8x20xf32>
    %c0_17 = arith.constant 0 : index
    %c0_18 = arith.constant 0 : index
    %22 = vector.load %arg2[%c0_17, %c0_18] : memref<8x20xf32, #tpu.memory_space<vmem>>, vector<8x20xf32>
    %23 = arith.addf %21, %22 : vector<8x20xf32>
    %24 = tpu.iota {dimensions = array<i32: 1>} : vector<8x20xi32>
    %25 = arith.sitofp %24 : vector<8x20xi32> to vector<8x20xf32>
    %cst_19 = arith.constant 0xFF800000 : f32
    %26 = vector.broadcast %cst_19 : f32 to vector<8x20xf32>
    %cst_20 = arith.constant 0xFF800000 : f32
    %27 = vector.broadcast %cst_20 : f32 to vector<8x20xf32>
    %c0_i32 = arith.constant 0 : i32
    %28 = vector.broadcast %c0_i32 : i32 to vector<8x20xi32>
    %29 = arith.cmpi sge, %24, %28 : vector<8x20xi32>
    %c10_i32 = arith.constant 10 : i32
    %30 = vector.broadcast %c10_i32 : i32 to vector<8x20xi32>
    %31 = arith.cmpi slt, %24, %30 : vector<8x20xi32>
    %32 = arith.andi %29, %31 : vector<8x20xi1>
    %cst_21 = arith.constant 0xFF800000 : f32
    %33 = vector.broadcast %cst_21 : f32 to vector<8x20xf32>
    %34 = arith.select %32, %21, %33 : vector<8x20xi1>, vector<8x20xf32>
    %cst_22 = arith.constant dense<0xFF800000> : vector<8xf32>
    %35 = vector.multi_reduction <maximumf>, %34, %cst_22 [1] : vector<8x20xf32> to vector<8xf32>
    %36 = vector.shape_cast %35 : vector<8xf32> to vector<8x1xf32>
    %cst_23 = arith.constant 0xFF800000 : f32
    %37 = vector.broadcast %cst_23 : f32 to vector<8x20xf32>
    %38 = arith.select %32, %23, %37 : vector<8x20xi1>, vector<8x20xf32>
    %cst_24 = arith.constant dense<0xFF800000> : vector<8xf32>
    %39 = vector.multi_reduction <maximumf>, %38, %cst_24 [1] : vector<8x20xf32> to vector<8xf32>
    %40 = vector.shape_cast %39 : vector<8xf32> to vector<8x1xf32>
    %41 = vector.shape_cast %36 : vector<8x1xf32> to vector<8x1xf32>
    %42 = vector.broadcast %41 : vector<8x1xf32> to vector<8x20xf32>
    %43 = arith.select %32, %42, %26 : vector<8x20xi1>, vector<8x20xf32>
    %44 = vector.shape_cast %40 : vector<8x1xf32> to vector<8x1xf32>
    %45 = vector.broadcast %44 : vector<8x1xf32> to vector<8x20xf32>
    %46 = arith.select %32, %45, %27 : vector<8x20xi1>, vector<8x20xf32>
    %c10_i32_25 = arith.constant 10 : i32
    %47 = vector.broadcast %c10_i32_25 : i32 to vector<8x20xi32>
    %48 = arith.cmpi sge, %24, %47 : vector<8x20xi32>
    %c20_i32 = arith.constant 20 : i32
    %49 = vector.broadcast %c20_i32 : i32 to vector<8x20xi32>
    %50 = arith.cmpi slt, %24, %49 : vector<8x20xi32>
    %51 = arith.andi %48, %50 : vector<8x20xi1>
    %cst_26 = arith.constant 0xFF800000 : f32
    %52 = vector.broadcast %cst_26 : f32 to vector<8x20xf32>
    %53 = arith.select %51, %21, %52 : vector<8x20xi1>, vector<8x20xf32>
    %cst_27 = arith.constant dense<0xFF800000> : vector<8xf32>
    %54 = vector.multi_reduction <maximumf>, %53, %cst_27 [1] : vector<8x20xf32> to vector<8xf32>
    %55 = vector.shape_cast %54 : vector<8xf32> to vector<8x1xf32>
    %cst_28 = arith.constant 0xFF800000 : f32
    %56 = vector.broadcast %cst_28 : f32 to vector<8x20xf32>
    %57 = arith.select %51, %23, %56 : vector<8x20xi1>, vector<8x20xf32>
    %cst_29 = arith.constant dense<0xFF800000> : vector<8xf32>
    %58 = vector.multi_reduction <maximumf>, %57, %cst_29 [1] : vector<8x20xf32> to vector<8xf32>
    %59 = vector.shape_cast %58 : vector<8xf32> to vector<8x1xf32>
    %60 = vector.shape_cast %55 : vector<8x1xf32> to vector<8x1xf32>
    %61 = vector.broadcast %60 : vector<8x1xf32> to vector<8x20xf32>
    %62 = arith.select %51, %61, %43 : vector<8x20xi1>, vector<8x20xf32>
    %63 = vector.shape_cast %59 : vector<8x1xf32> to vector<8x1xf32>
    %64 = vector.broadcast %63 : vector<8x1xf32> to vector<8x20xf32>
    %65 = arith.select %51, %64, %46 : vector<8x20xi1>, vector<8x20xf32>
    %66 = arith.subf %21, %62 : vector<8x20xf32>
    %67 = math.exp %66 : vector<8x20xf32>
    %cst_30 = arith.constant 1.000000e+00 : f32
    %68 = vector.broadcast %cst_30 : f32 to vector<8x20xf32>
    %cst_31 = arith.constant 0.000000e+00 : f32
    %69 = vector.broadcast %cst_31 : f32 to vector<8x20xf32>
    %c0_i32_32 = arith.constant 0 : i32
    %70 = vector.broadcast %c0_i32_32 : i32 to vector<8x20xi32>
    %71 = arith.cmpi sge, %24, %70 : vector<8x20xi32>
    %c10_i32_33 = arith.constant 10 : i32
    %72 = vector.broadcast %c10_i32_33 : i32 to vector<8x20xi32>
    %73 = arith.cmpi slt, %24, %72 : vector<8x20xi32>
    %74 = arith.andi %71, %73 : vector<8x20xi1>
    %cst_34 = arith.constant 0.000000e+00 : f32
    %75 = vector.broadcast %cst_34 : f32 to vector<8x20xf32>
    %76 = arith.select %74, %67, %75 : vector<8x20xi1>, vector<8x20xf32>
    %cst_35 = arith.constant dense<0.000000e+00> : vector<8xf32>
    %77 = vector.multi_reduction <add>, %76, %cst_35 [1] : vector<8x20xf32> to vector<8xf32>
    %78 = vector.shape_cast %77 : vector<8xf32> to vector<8x1xf32>
    %79 = arith.cmpf oge, %23, %65 : vector<8x20xf32>
    %80 = arith.andi %74, %79 : vector<8x20xi1>
    %cst_36 = arith.constant 2.000000e+01 : f32
    %81 = vector.broadcast %cst_36 : f32 to vector<8x20xf32>
    %82 = arith.select %80, %25, %81 : vector<8x20xi1>, vector<8x20xf32>
    %cst_37 = arith.constant dense<0x7F800000> : vector<8xf32>
    %83 = vector.multi_reduction <minimumf>, %82, %cst_37 [1] : vector<8x20xf32> to vector<8xf32>
    %84 = vector.shape_cast %83 : vector<8xf32> to vector<8x1xf32>
    %85 = vector.shape_cast %78 : vector<8x1xf32> to vector<8x1xf32>
    %86 = vector.broadcast %85 : vector<8x1xf32> to vector<8x20xf32>
    %87 = arith.select %74, %86, %68 : vector<8x20xi1>, vector<8x20xf32>
    %88 = vector.shape_cast %84 : vector<8x1xf32> to vector<8x1xf32>
    %89 = vector.broadcast %88 : vector<8x1xf32> to vector<8x20xf32>
    %90 = arith.select %74, %89, %69 : vector<8x20xi1>, vector<8x20xf32>
    %c10_i32_38 = arith.constant 10 : i32
    %91 = vector.broadcast %c10_i32_38 : i32 to vector<8x20xi32>
    %92 = arith.cmpi sge, %24, %91 : vector<8x20xi32>
    %c20_i32_39 = arith.constant 20 : i32
    %93 = vector.broadcast %c20_i32_39 : i32 to vector<8x20xi32>
    %94 = arith.cmpi slt, %24, %93 : vector<8x20xi32>
    %95 = arith.andi %92, %94 : vector<8x20xi1>
    %cst_40 = arith.constant 0.000000e+00 : f32
    %96 = vector.broadcast %cst_40 : f32 to vector<8x20xf32>
    %97 = arith.select %95, %67, %96 : vector<8x20xi1>, vector<8x20xf32>
    %cst_41 = arith.constant dense<0.000000e+00> : vector<8xf32>
    %98 = vector.multi_reduction <add>, %97, %cst_41 [1] : vector<8x20xf32> to vector<8xf32>
    %99 = vector.shape_cast %98 : vector<8xf32> to vector<8x1xf32>
    %100 = arith.cmpf oge, %23, %65 : vector<8x20xf32>
    %101 = arith.andi %95, %100 : vector<8x20xi1>
    %cst_42 = arith.constant 2.000000e+01 : f32
    %102 = vector.broadcast %cst_42 : f32 to vector<8x20xf32>
    %103 = arith.select %101, %25, %102 : vector<8x20xi1>, vector<8x20xf32>
    %cst_43 = arith.constant dense<0x7F800000> : vector<8xf32>
    %104 = vector.multi_reduction <minimumf>, %103, %cst_43 [1] : vector<8x20xf32> to vector<8xf32>
    %105 = vector.shape_cast %104 : vector<8xf32> to vector<8x1xf32>
    %106 = vector.shape_cast %99 : vector<8x1xf32> to vector<8x1xf32>
    %107 = vector.broadcast %106 : vector<8x1xf32> to vector<8x20xf32>
    %108 = arith.select %95, %107, %87 : vector<8x20xi1>, vector<8x20xf32>
    %109 = vector.shape_cast %105 : vector<8x1xf32> to vector<8x1xf32>
    %110 = vector.broadcast %109 : vector<8x1xf32> to vector<8x20xf32>
    %111 = arith.select %95, %110, %90 : vector<8x20xi1>, vector<8x20xf32>
    %112 = arith.divf %67, %108 : vector<8x20xf32>
    %c0_44 = arith.constant 0 : index
    %c0_45 = arith.constant 0 : index
    %113 = vector.load %arg17[%c0_44, %c0_45] : memref<8x20xf32, #tpu.memory_space<vmem>>, vector<8x20xf32>
    tpu.vector_store %arg17[%c0_44, %c0_45], %112 {strides = array<i32>} : memref<8x20xf32, #tpu.memory_space<vmem>>, vector<8x20xf32>,
    %114 = arith.cmpf oeq, %25, %111 : vector<8x20xf32>
    %115 = arith.extui %114 : vector<8x20xi1> to vector<8x20xi32>
    %116 = arith.sitofp %115 : vector<8x20xi32> to vector<8x20xf32>
    %117 = arith.truncf %116 : vector<8x20xf32> to vector<8x20xbf16>
    %c0_46 = arith.constant 0 : index
    %c0_47 = arith.constant 0 : index
    %118 = vector.load %arg18[%c0_46, %c0_47] : memref<16x20xbf16, #tpu.memory_space<vmem>>, vector<8x20xbf16>
    tpu.vector_store %arg18[%c0_46, %c0_47], %117 {strides = array<i32>} : memref<16x20xbf16, #tpu.memory_space<vmem>>, vector<8x20xbf16>,
    %119 = arith.truncf %112 : vector<8x20xf32> to vector<8x20xbf16>
    %c8 = arith.constant 8 : index
    %c0_48 = arith.constant 0 : index
    %120 = vector.load %arg18[%c8, %c0_48] : memref<16x20xbf16, #tpu.memory_space<vmem>>, vector<8x20xbf16>
    tpu.vector_store %arg18[%c8, %c0_48], %119 {strides = array<i32>} : memref<16x20xbf16, #tpu.memory_space<vmem>>, vector<8x20xbf16>,
    %c0_49 = arith.constant 0 : index
    %c0_50 = arith.constant 0 : index
    %121 = vector.load %arg18[%c0_49, %c0_50] : memref<16x20xbf16, #tpu.memory_space<vmem>>, vector<16x20xbf16>
    %c0_51 = arith.constant 0 : index
    %c0_52 = arith.constant 0 : index
    %122 = vector.load %arg9[%c0_51, %c0_52] : memref<20x256xbf16, #tpu.memory_space<vmem>>, vector<20x256xbf16>
    %cst_53 = arith.constant dense<0.000000e+00> : vector<16x256xf32>
    %123 = tpu.matmul %121, %122, %cst_53 {dimension_numbers = #tpu.dot_dimension_numbers<[1], [0], [0], [1], [0, 0, 1, 1], [], []>} : vector<16x20xbf16>, vector<20x256xbf16>, vector<16x256xf32> -> vector<16x256xf32>
    %c0_54 = arith.constant 0 : index
    %c0_55 = arith.constant 0 : index
    %124 = vector.load %arg10[%c0_54, %c0_55] : memref<1x256xf32, #tpu.memory_space<vmem>>, vector<1x256xf32>
    %125 = vector.broadcast %124 : vector<1x256xf32> to vector<16x256xf32>
    %126 = arith.addf %123, %125 : vector<16x256xf32>
    %cst_56 = arith.constant 0.000000e+00 : f32
    %127 = vector.broadcast %cst_56 : f32 to vector<16x256xf32>
    %128 = arith.maximumf %126, %127 : vector<16x256xf32>
    %129 = arith.truncf %128 : vector<16x256xf32> to vector<16x256xbf16>
    %c0_57 = arith.constant 0 : index
    %c0_58 = arith.constant 0 : index
    %130 = vector.load %arg11[%c0_57, %c0_58] : memref<256x512xbf16, #tpu.memory_space<vmem>>, vector<256x512xbf16>
    %cst_59 = arith.constant dense<0.000000e+00> : vector<16x512xf32>
    %131 = tpu.matmul %129, %130, %cst_59 {dimension_numbers = #tpu.dot_dimension_numbers<[1], [0], [0], [1], [0, 0, 1, 1], [], []>} : vector<16x256xbf16>, vector<256x512xbf16>, vector<16x512xf32> -> vector<16x512xf32>
    %c0_60 = arith.constant 0 : index
    %c0_61 = arith.constant 0 : index
    %132 = vector.load %arg12[%c0_60, %c0_61] : memref<1x512xf32, #tpu.memory_space<vmem>>, vector<1x512xf32>
    %133 = vector.broadcast %132 : vector<1x512xf32> to vector<16x512xf32>
    %134 = arith.addf %131, %133 : vector<16x512xf32>
    %cst_62 = arith.constant 0.000000e+00 : f32
    %135 = vector.broadcast %cst_62 : f32 to vector<16x512xf32>
    %136 = arith.maximumf %134, %135 : vector<16x512xf32>
    %137 = arith.truncf %136 : vector<16x512xf32> to vector<16x512xbf16>
    %c0_63 = arith.constant 0 : index
    %c0_64 = arith.constant 0 : index
    %138 = vector.load %arg13[%c0_63, %c0_64] : memref<512x896xbf16, #tpu.memory_space<vmem>>, vector<512x896xbf16>
    %cst_65 = arith.constant dense<0.000000e+00> : vector<16x896xf32>
    %139 = tpu.matmul %137, %138, %cst_65 {dimension_numbers = #tpu.dot_dimension_numbers<[1], [0], [0], [1], [0, 0, 1, 1], [], []>} : vector<16x512xbf16>, vector<512x896xbf16>, vector<16x896xf32> -> vector<16x896xf32>
    %c0_66 = arith.constant 0 : index
    %c0_67 = arith.constant 0 : index
    %140 = vector.load %arg14[%c0_66, %c0_67] : memref<1x896xf32, #tpu.memory_space<vmem>>, vector<1x896xf32>
    %141 = vector.broadcast %140 : vector<1x896xf32> to vector<16x896xf32>
    %142 = arith.addf %139, %141 : vector<16x896xf32>
    %143 = arith.negf %142 : vector<16x896xf32>
    %144 = math.exp %143 : vector<16x896xf32>
    %cst_68 = arith.constant 1.000000e+00 : f32
    %145 = vector.broadcast %cst_68 : f32 to vector<16x896xf32>
    %146 = arith.addf %145, %144 : vector<16x896xf32>
    %147 = arith.divf %145, %146 : vector<16x896xf32>
    %148 = arith.truncf %147 : vector<16x896xf32> to vector<16x896xbf16>
    %149 = vector.extract_strided_slice %148 {offsets = [0, 0], sizes = [8, 896], strides = [1, 1]} : vector<16x896xbf16> to vector<8x896xbf16>
    %c0_69 = arith.constant 0 : index
    %c0_70 = arith.constant 0 : index
    %150 = vector.load %arg15[%c0_69, %c0_70] : memref<8x896xbf16, #tpu.memory_space<vmem>>, vector<8x896xbf16>
    tpu.vector_store %arg15[%c0_69, %c0_70], %149 {strides = array<i32>} : memref<8x896xbf16, #tpu.memory_space<vmem>>, vector<8x896xbf16>,
    %151 = vector.extract_strided_slice %148 {offsets = [8, 0], sizes = [8, 896], strides = [1, 1]} : vector<16x896xbf16> to vector<8x896xbf16>
    %c0_71 = arith.constant 0 : index
    %c0_72 = arith.constant 0 : index
    %152 = vector.load %arg16[%c0_71, %c0_72] : memref<8x896xbf16, #tpu.memory_space<vmem>>, vector<8x896xbf16>
    tpu.vector_store %arg16[%c0_71, %c0_72], %151 {strides = array<i32>} : memref<8x896xbf16, #tpu.memory_space<vmem>>, vector<8x896xbf16>,
    return
  }
  func.func @transform_0(%arg0: i32) -> (i32, i32) {
    %c0_i32 = arith.constant 0 : i32
    %c0_i32_0 = arith.constant 0 : i32
    return %arg0, %c0_i32 : i32, i32
  }
  func.func @transform_1(%arg0: i32) -> (i32, i32) {
    %c0_i32 = arith.constant 0 : i32
    %c0_i32_0 = arith.constant 0 : i32
    return %arg0, %c0_i32 : i32, i32
  }
  func.func @transform_2(%arg0: i32) -> (i32, i32) {
    %c0_i32 = arith.constant 0 : i32
    %c0_i32_0 = arith.constant 0 : i32
    %c0_i32_1 = arith.constant 0 : i32
    return %c0_i32, %c0_i32_0 : i32, i32
  }
  func.func @transform_3(%arg0: i32) -> (i32, i32) {
    %c0_i32 = arith.constant 0 : i32
    %c0_i32_0 = arith.constant 0 : i32
    %c0_i32_1 = arith.constant 0 : i32
    return %c0_i32, %c0_i32_0 : i32, i32
  }
  func.func @transform_4(%arg0: i32) -> (i32, i32) {
    %c0_i32 = arith.constant 0 : i32
    %c0_i32_0 = arith.constant 0 : i32
    %c0_i32_1 = arith.constant 0 : i32
    return %c0_i32, %c0_i32_0 : i32, i32
  }
  func.func @transform_5(%arg0: i32) -> (i32, i32) {
    %c0_i32 = arith.constant 0 : i32
    %c0_i32_0 = arith.constant 0 : i32
    %c0_i32_1 = arith.constant 0 : i32
    return %c0_i32, %c0_i32_0 : i32, i32
  }
  func.func @transform_6(%arg0: i32) -> (i32, i32) {
    %c0_i32 = arith.constant 0 : i32
    %c0_i32_0 = arith.constant 0 : i32
    %c0_i32_1 = arith.constant 0 : i32
    return %c0_i32, %c0_i32_0 : i32, i32
  }
  func.func @transform_7(%arg0: i32) -> (i32, i32) {
    %c0_i32 = arith.constant 0 : i32
    %c0_i32_0 = arith.constant 0 : i32
    %c0_i32_1 = arith.constant 0 : i32
    return %c0_i32, %c0_i32_0 : i32, i32
  }
  func.func @transform_8(%arg0: i32) -> (i32, i32) {
    %c0_i32 = arith.constant 0 : i32
    %c0_i32_0 = arith.constant 0 : i32
    %c0_i32_1 = arith.constant 0 : i32
    return %c0_i32, %c0_i32_0 : i32, i32
  }
  func.func @transform_9(%arg0: i32) -> (i32, i32) {
    %c0_i32 = arith.constant 0 : i32
    %c0_i32_0 = arith.constant 0 : i32
    %c0_i32_1 = arith.constant 0 : i32
    return %c0_i32, %c0_i32_0 : i32, i32
  }
  func.func @transform_10(%arg0: i32) -> (i32, i32) {
    %c0_i32 = arith.constant 0 : i32
    %c0_i32_0 = arith.constant 0 : i32
    %c0_i32_1 = arith.constant 0 : i32
    return %c0_i32, %c0_i32_0 : i32, i32
  }
  func.func @transform_11(%arg0: i32) -> (i32, i32) {
    %c0_i32 = arith.constant 0 : i32
    %c0_i32_0 = arith.constant 0 : i32
    %c0_i32_1 = arith.constant 0 : i32
    return %c0_i32, %c0_i32_0 : i32, i32
  }
  func.func @transform_12(%arg0: i32) -> (i32, i32) {
    %c0_i32 = arith.constant 0 : i32
    %c0_i32_0 = arith.constant 0 : i32
    %c0_i32_1 = arith.constant 0 : i32
    return %c0_i32, %c0_i32_0 : i32, i32
  }
  func.func @transform_13(%arg0: i32) -> (i32, i32) {
    %c0_i32 = arith.constant 0 : i32
    %c0_i32_0 = arith.constant 0 : i32
    %c0_i32_1 = arith.constant 0 : i32
    return %c0_i32, %c0_i32_0 : i32, i32
  }
  func.func @transform_14(%arg0: i32) -> (i32, i32) {
    %c0_i32 = arith.constant 0 : i32
    %c0_i32_0 = arith.constant 0 : i32
    return %arg0, %c0_i32 : i32, i32
  }
  func.func @transform_15(%arg0: i32) -> (i32, i32) {
    %c0_i32 = arith.constant 0 : i32
    %c0_i32_0 = arith.constant 0 : i32
    return %arg0, %c0_i32 : i32, i32
  }
  func.func @transform_16(%arg0: i32) -> (i32, i32) {
    %c0_i32 = arith.constant 0 : i32
    %c0_i32_0 = arith.constant 0 : i32
    return %arg0, %c0_i32 : i32, i32
  }
}

</mosaic_0001>

<llo_original>
// kernel: tpu_custom_call.1
$region0: #{tpu_custom_call.1}
  #allocation0 [shape = 'u32[]', space=smem, size = 0x4, offset = 0x4, fixed_abs, tag = 'smem constant byte address 0x4 - core index']
  #allocation1 [shape = 'u32[144,128]{1,0:T(1,128)}', space=vmem, size = 0x12000, scoped, tag = 'internal scratch']
  #allocation2 [shape = 'bf16[16,20]{1,0:T(8,128)(2,1)}', space=vmem, size = 0x1000, scoped, tag = 'scratch operand']
  %s0 = inlined_call_operand.vmem [shape: bf16[8,896], index: 0, kind: input, shape index: {}]
  %s1 = inlined_call_operand.vmem [shape: f32[8,20], index: 1, kind: input, shape index: {}]
  %s2 = inlined_call_operand.hbm [shape: bf16[896,512], index: 2, kind: input, shape index: {}]
  %s3 = inlined_call_operand.vmem [shape: f32[1,512], index: 3, kind: input, shape index: {}]
  %s4 = inlined_call_operand.hbm [shape: bf16[512,256], index: 4, kind: input, shape index: {}]
  %s5 = inlined_call_operand.vmem [shape: f32[1,256], index: 5, kind: input, shape index: {}]
  %s6 = inlined_call_operand.vmem [shape: bf16[256,20], index: 6, kind: input, shape index: {}]
  %s7 = inlined_call_operand.vmem [shape: f32[1,20], index: 7, kind: input, shape index: {}]
  %s8 = inlined_call_operand.vmem [shape: bf16[20,256], index: 8, kind: input, shape index: {}]
  %s9 = inlined_call_operand.vmem [shape: f32[1,256], index: 9, kind: input, shape index: {}]
  %s10 = inlined_call_operand.hbm [shape: bf16[256,512], index: 10, kind: input, shape index: {}]
  %s11 = inlined_call_operand.vmem [shape: f32[1,512], index: 11, kind: input, shape index: {}]
  %s12 = inlined_call_operand.hbm [shape: bf16[512,896], index: 12, kind: input, shape index: {}]
  %s13 = inlined_call_operand.vmem [shape: f32[1,896], index: 13, kind: input, shape index: {}]
  %s14 = inlined_call_operand.hbm [shape: bf16[8,896], index: 14, kind: output, shape index: {0}]
  %s15 = inlined_call_operand.hbm [shape: bf16[8,896], index: 15, kind: output, shape index: {1}]
  %s16 = inlined_call_operand.hbm [shape: f32[8,20], index: 16, kind: output, shape index: {2}]
  %17 = xla_tuple %s14, %s15, %s16
  %s18 = sld [smem:[#allocation0]]
  $region98: #{tpu_custom_call.1} parent=0
    _
  %s20 = ssub.s32 1, %s18
  %s21 = scalar_select 0, %s20, %s18
  $region1: #{tpu_custom_call.1} parent=0
    #allocation3 [shape = 'u8[917504]{0}', space=vmem, size = 0xe0000, scoped, tag = 'input window, operand 2, single buffered']
    #allocation4 [shape = 's32[1]{0}', space=sflag, size = 0x4, scoped, tag = 'scoped memory for tpu_custom_call.1']
    #allocation5 [shape = 's32[1]{0}', space=sflag, size = 0x4, scoped, tag = 'scoped memory for tpu_custom_call.1']
    #allocation6 [shape = 'u8[262144]{0}', space=vmem, size = 0x40000, scoped, tag = 'input window, operand 4, single buffered']
    #allocation7 [shape = 's32[1]{0}', space=sflag, size = 0x4, scoped, tag = 'scoped memory for tpu_custom_call.1']
    #allocation8 [shape = 'u8[262144]{0}', space=vmem, size = 0x40000, scoped, tag = 'input window, operand 10, single buffered']
    #allocation9 [shape = 'u8[917504]{0}', space=vmem, size = 0xe0000, scoped, tag = 'input window, operand 12, single buffered']
    #allocation10 [shape = 's32[1]{0}', space=sflag, size = 0x4, scoped, tag = 'scoped memory for tpu_custom_call.1']
    #allocation11 [shape = 'u8[14336]{0}', space=vmem, size = 0x3800, scoped, tag = 'output window, operand 0, single buffered']
    #allocation12 [shape = 'u8[14336]{0}', space=vmem, size = 0x3800, scoped, tag = 'output window, operand 1, single buffered']
    #allocation13 [shape = 's32[1]{0}', space=sflag, size = 0x4, scoped, tag = 'scoped memory for tpu_custom_call.1']
    #allocation14 [shape = 'u8[4096]{0}', space=vmem, size = 0x1000, scoped, tag = 'output window, operand 2, single buffered']
    %22 = vsyncpa [#allocation4], 0
    %23 = vsyncpa [#allocation7], 0
    %24 = vsyncpa [#allocation10], 0
    %25 = vsyncpa [#allocation5], 0
    %26 = vsyncpa [#allocation13], 0
    // Predicated region
    $region2: #{tpu_custom_call.1} parent=1 // pred_check
      _
    $region3: #{tpu_custom_call.1} parent=1 // pred_check_branch
      %28 = sbr.rel (0) target = $region5
    $region4: #{tpu_custom_call.1} parent=1 // pred_region
      _
    $region5: #{tpu_custom_call.1} parent=1 // pred_fallthru
      _
    // Predicated region
    $region6: #{tpu_custom_call.1} parent=1 // pred_check
      _
    $region7: #{tpu_custom_call.1} parent=1 // pred_check_branch
      %30 = sbr.rel (0) target = $region9
    $region8: #{tpu_custom_call.1} parent=1 // pred_region
      _
    $region9: #{tpu_custom_call.1} parent=1 // pred_fallthru
      _
    // Predicated region
    $region10: #{tpu_custom_call.1} parent=1 // pred_check
      _
    $region11: #{tpu_custom_call.1} parent=1 // pred_check_branch
      %32 = sbr.rel (0) target = $region13
    $region12: #{tpu_custom_call.1} parent=1 // pred_region
      %s34 = ssub.s32 28672, 28672
      %35 = vsyncadd [#allocation4], %s34
      %s36 = sshll.u32 [#allocation3], 4
      %s37 = int_to_ptr.vmem [resolvable:$true] %s36
      %42 = dma.hbm_to_vmem [thread:$0]  %s2, 28672, %s37, [#allocation4], 256, 256, 16
    $region13: #{tpu_custom_call.1} parent=1 // pred_fallthru
      _
    // Predicated region
    $region14: #{tpu_custom_call.1} parent=1 // pred_check
      _
    $region15: #{tpu_custom_call.1} parent=1 // pred_check_branch
      %44 = sbr.rel (0) target = $region17
    $region16: #{tpu_custom_call.1} parent=1 // pred_region
      _
    $region17: #{tpu_custom_call.1} parent=1 // pred_fallthru
      _
    // Predicated region
    $region18: #{tpu_custom_call.1} parent=1 // pred_check
      _
    $region19: #{tpu_custom_call.1} parent=1 // pred_check_branch
      %46 = sbr.rel (0) target = $region21
    $region20: #{tpu_custom_call.1} parent=1 // pred_region
      %s48 = ssub.s32 8192, 8192
      %49 = vsyncadd [#allocation7], %s48
      %s50 = sshll.u32 [#allocation6], 4
      %s51 = int_to_ptr.vmem [resolvable:$true] %s50
      %56 = dma.hbm_to_vmem [thread:$0]  %s4, 8192, %s51, [#allocation7], 128, 128, 8
    $region21: #{tpu_custom_call.1} parent=1 // pred_fallthru
      _
    // Predicated region
    $region22: #{tpu_custom_call.1} parent=1 // pred_check
      _
    $region23: #{tpu_custom_call.1} parent=1 // pred_check_branch
      %58 = sbr.rel (0) target = $region25
    $region24: #{tpu_custom_call.1} parent=1 // pred_region
      _
    $region25: #{tpu_custom_call.1} parent=1 // pred_fallthru
      _
    // Predicated region
    $region26: #{tpu_custom_call.1} parent=1 // pred_check
      _
    $region27: #{tpu_custom_call.1} parent=1 // pred_check_branch
      %60 = sbr.rel (0) target = $region29
    $region28: #{tpu_custom_call.1} parent=1 // pred_region
      _
    $region29: #{tpu_custom_call.1} parent=1 // pred_fallthru
      _
    // Predicated region
    $region30: #{tpu_custom_call.1} parent=1 // pred_check
      _
    $region31: #{tpu_custom_call.1} parent=1 // pred_check_branch
      %62 = sbr.rel (0) target = $region33
    $region32: #{tpu_custom_call.1} parent=1 // pred_region
      _
    $region33: #{tpu_custom_call.1} parent=1 // pred_fallthru
      _
    // Predicated region
    $region34: #{tpu_custom_call.1} parent=1 // pred_check
      _
    $region35: #{tpu_custom_call.1} parent=1 // pred_check_branch
      %64 = sbr.rel (0) target = $region37
    $region36: #{tpu_custom_call.1} parent=1 // pred_region
      _
    $region37: #{tpu_custom_call.1} parent=1 // pred_fallthru
      _
    // Predicated region
    $region38: #{tpu_custom_call.1} parent=1 // pred_check
      _
    $region39: #{tpu_custom_call.1} parent=1 // pred_check_branch
      %66 = sbr.rel (0) target = $region41
    $region40: #{tpu_custom_call.1} parent=1 // pred_region
      _
    $region41: #{tpu_custom_call.1} parent=1 // pred_fallthru
      _
    // Predicated region
    $region42: #{tpu_custom_call.1} parent=1 // pred_check
      _
    $region43: #{tpu_custom_call.1} parent=1 // pred_check_branch
      %68 = sbr.rel (0) target = $region45
    $region44: #{tpu_custom_call.1} parent=1 // pred_region
      %s70 = ssub.s32 8192, 8192
      %71 = vsyncadd [#allocation7], %s70
      %s72 = sshll.u32 [#allocation8], 4
      %s73 = int_to_ptr.vmem [resolvable:$true] %s72
      %78 = dma.hbm_to_vmem [thread:$0]  %s10, 8192, %s73, [#allocation7], 256, 256, 16
    $region45: #{tpu_custom_call.1} parent=1 // pred_fallthru
      _
    // Predicated region
    $region46: #{tpu_custom_call.1} parent=1 // pred_check
      _
    $region47: #{tpu_custom_call.1} parent=1 // pred_check_branch
      %80 = sbr.rel (0) target = $region49
    $region48: #{tpu_custom_call.1} parent=1 // pred_region
      _
    $region49: #{tpu_custom_call.1} parent=1 // pred_fallthru
      _
    // Predicated region
    $region50: #{tpu_custom_call.1} parent=1 // pred_check
      _
    $region51: #{tpu_custom_call.1} parent=1 // pred_check_branch
      %82 = sbr.rel (0) target = $region53
    $region52: #{tpu_custom_call.1} parent=1 // pred_region
      %s84 = ssub.s32 28672, 28672
      %85 = vsyncadd [#allocation10], %s84
      %s86 = sshll.u32 [#allocation9], 4
      %s87 = int_to_ptr.vmem [resolvable:$true] %s86
      %92 = dma.hbm_to_vmem [thread:$0]  %s12, 28672, %s87, [#allocation10], 448, 448, 28
    $region53: #{tpu_custom_call.1} parent=1 // pred_fallthru
      _
    // Predicated region
    $region54: #{tpu_custom_call.1} parent=1 // pred_check
      _
    $region55: #{tpu_custom_call.1} parent=1 // pred_check_branch
      %94 = sbr.rel (0) target = $region57
    $region56: #{tpu_custom_call.1} parent=1 // pred_region
      _
    $region57: #{tpu_custom_call.1} parent=1 // pred_fallthru
      _
    // Predicated region
    $region58: #{tpu_custom_call.1} parent=1 // pred_check
      _
    $region59: #{tpu_custom_call.1} parent=1 // pred_check_branch
      %96 = sbr.rel (0) target = $region61
    $region60: #{tpu_custom_call.1} parent=1 // pred_region
      %97 = dma.done [#allocation4], 28672
    $region61: #{tpu_custom_call.1} parent=1 // pred_fallthru
      _
    // Predicated region
    $region62: #{tpu_custom_call.1} parent=1 // pred_check
      _
    $region63: #{tpu_custom_call.1} parent=1 // pred_check_branch
      %99 = sbr.rel (0) target = $region65
    $region64: #{tpu_custom_call.1} parent=1 // pred_region
      %100 = dma.done [#allocation7], 8192
    $region65: #{tpu_custom_call.1} parent=1 // pred_fallthru
      _
    // Predicated region
    $region66: #{tpu_custom_call.1} parent=1 // pred_check
      _
    $region67: #{tpu_custom_call.1} parent=1 // pred_check_branch
      %102 = sbr.rel (0) target = $region69
    $region68: #{tpu_custom_call.1} parent=1 // pred_region
      %103 = dma.done [#allocation7], 8192
    $region69: #{tpu_custom_call.1} parent=1 // pred_fallthru
      _
    // Predicated region
    $region70: #{tpu_custom_call.1} parent=1 // pred_check
      _
    $region71: #{tpu_custom_call.1} parent=1 // pred_check_branch
      %105 = sbr.rel (0) target = $region73
    $region72: #{tpu_custom_call.1} parent=1 // pred_region
      %106 = dma.done [#allocation10], 28672
    $region73: #{tpu_custom_call.1} parent=1 // pred_fallthru
      _
    %v108 = vld [vmem:[%s0] sm:$0xff]
    %v109 = vld [vmem:[%s0 + $0x8] sm:$0xff]
    %v110 = vld [vmem:[%s0 + $0x10] sm:$0xff]
    %v111 = vld [vmem:[%s0 + $0x18] sm:$0xf]
    %v112 = vld [vmem:[#allocation3] sm:$0xff]
    %v113 = vld [vmem:[#allocation3 + $0x8] sm:$0xff]
    %v114 = vld [vmem:[#allocation3 + $0x10] sm:$0xff]
    %v115 = vld [vmem:[#allocation3 + $0x18] sm:$0xff]
    %v116 = vld [vmem:[#allocation3 + $0x20] sm:$0xff]
    %v117 = vld [vmem:[#allocation3 + $0x28] sm:$0xff]
    %v118 = vld [vmem:[#allocation3 + $0x30] sm:$0xff]
    %v119 = vld [vmem:[#allocation3 + $0x38] sm:$0xff]
    %v120 = vld [vmem:[#allocation3 + $0x40] sm:$0xff]
    %v121 = vld [vmem:[#allocation3 + $0x48] sm:$0xff]
    %v122 = vld [vmem:[#allocation3 + $0x50] sm:$0xff]
    %v123 = vld [vmem:[#allocation3 + $0x58] sm:$0xff]
    %v124 = vld [vmem:[#allocation3 + $0x60] sm:$0xff]
    %v125 = vld [vmem:[#allocation3 + $0x68] sm:$0xff]
    %v126 = vld [vmem:[#allocation3 + $0x70] sm:$0xff]
    %v127 = vld [vmem:[#allocation3 + $0x78] sm:$0xff]
    %v128 = vld [vmem:[#allocation3 + $0x80] sm:$0xff]
    %v129 = vld [vmem:[#allocation3 + $0x88] sm:$0xff]
    %v130 = vld [vmem:[#allocation3 + $0x90] sm:$0xff]
    %v131 = vld [vmem:[#allocation3 + $0x98] sm:$0xff]
    %v132 = vld [vmem:[#allocation3 + $0xa0] sm:$0xff]
    %v133 = vld [vmem:[#allocation3 + $0xa8] sm:$0xff]
    %v134 = vld [vmem:[#allocation3 + $0xb0] sm:$0xff]
    %v135 = vld [vmem:[#allocation3 + $0xb8] sm:$0xff]
    %v136 = vld [vmem:[#allocation3 + $0xc0] sm:$0xff]
    %v137 = vld [vmem:[#allocation3 + $0xc8] sm:$0xff]
    %v138 = vld [vmem:[#allocation3 + $0xd0] sm:$0xff]
    %v139 = vld [vmem:[#allocation3 + $0xd8] sm:$0xff]
    %v140 = vld [vmem:[#allocation3 + $0xe0] sm:$0xff]
    %v141 = vld [vmem:[#allocation3 + $0xe8] sm:$0xff]
    %v142 = vld [vmem:[#allocation3 + $0xf0] sm:$0xff]
    %v143 = vld [vmem:[#allocation3 + $0xf8] sm:$0xff]
    %v144 = vld [vmem:[#allocation3 + $0x100] sm:$0xff]
    %v145 = vld [vmem:[#allocation3 + $0x108] sm:$0xff]
    %v146 = vld [vmem:[#allocation3 + $0x110] sm:$0xff]
    %v147 = vld [vmem:[#allocation3 + $0x118] sm:$0xff]
    %v148 = vld [vmem:[#allocation3 + $0x120] sm:$0xff]
    %v149 = vld [vmem:[#allocation3 + $0x128] sm:$0xff]
    %v150 = vld [vmem:[#allocation3 + $0x130] sm:$0xff]
    %v151 = vld [vmem:[#allocation3 + $0x138] sm:$0xff]
    %v152 = vld [vmem:[#allocation3 + $0x140] sm:$0xff]
    %v153 = vld [vmem:[#allocation3 + $0x148] sm:$0xff]
    %v154 = vld [vmem:[#allocation3 + $0x150] sm:$0xff]
    %v155 = vld [vmem:[#allocation3 + $0x158] sm:$0xff]
    %v156 = vld [vmem:[#allocation3 + $0x160] sm:$0xff]
    %v157 = vld [vmem:[#allocation3 + $0x168] sm:$0xff]
    %v158 = vld [vmem:[#allocation3 + $0x170] sm:$0xff]
    %v159 = vld [vmem:[#allocation3 + $0x178] sm:$0xff]
    %v160 = vld [vmem:[#allocation3 + $0x180] sm:$0xff]
    %v161 = vld [vmem:[#allocation3 + $0x188] sm:$0xff]
    %v162 = vld [vmem:[#allocation3 + $0x190] sm:$0xff]
    %v163 = vld [vmem:[#allocation3 + $0x198] sm:$0xff]
    %v164 = vld [vmem:[#allocation3 + $0x1a0] sm:$0xff]
    %v165 = vld [vmem:[#allocation3 + $0x1a8] sm:$0xff]
    %v166 = vld [vmem:[#allocation3 + $0x1b0] sm:$0xff]
    %v167 = vld [vmem:[#allocation3 + $0x1b8] sm:$0xff]
    %v168 = vld [vmem:[#allocation3 + $0x1c0] sm:$0xff]
    %v169 = vld [vmem:[#allocation3 + $0x1c8] sm:$0xff]
    %v170 = vld [vmem:[#allocation3 + $0x1d0] sm:$0xff]
    %v171 = vld [vmem:[#allocation3 + $0x1d8] sm:$0xff]
    %v172 = vld [vmem:[#allocation3 + $0x1e0] sm:$0xff]
    %v173 = vld [vmem:[#allocation3 + $0x1e8] sm:$0xff]
    %v174 = vld [vmem:[#allocation3 + $0x1f0] sm:$0xff]
    %v175 = vld [vmem:[#allocation3 + $0x1f8] sm:$0xff]
    %v176 = vld [vmem:[#allocation3 + $0x200] sm:$0xff]
    %v177 = vld [vmem:[#allocation3 + $0x208] sm:$0xff]
    %v178 = vld [vmem:[#allocation3 + $0x210] sm:$0xff]
    %v179 = vld [vmem:[#allocation3 + $0x218] sm:$0xff]
    %v180 = vld [vmem:[#allocation3 + $0x220] sm:$0xff]
    %v181 = vld [vmem:[#allocation3 + $0x228] sm:$0xff]
    %v182 = vld [vmem:[#allocation3 + $0x230] sm:$0xff]
    %v183 = vld [vmem:[#allocation3 + $0x238] sm:$0xff]
    %v184 = vld [vmem:[#allocation3 + $0x240] sm:$0xff]
    %v185 = vld [vmem:[#allocation3 + $0x248] sm:$0xff]
    %v186 = vld [vmem:[#allocation3 + $0x250] sm:$0xff]
    %v187 = vld [vmem:[#allocation3 + $0x258] sm:$0xff]
    %v188 = vld [vmem:[#allocation3 + $0x260] sm:$0xff]
    %v189 = vld [vmem:[#allocation3 + $0x268] sm:$0xff]
    %v190 = vld [vmem:[#allocation3 + $0x270] sm:$0xff]
    %v191 = vld [vmem:[#allocation3 + $0x278] sm:$0xff]
    %v192 = vld [vmem:[#allocation3 + $0x280] sm:$0xff]
    %v193 = vld [vmem:[#allocation3 + $0x288] sm:$0xff]
    %v194 = vld [vmem:[#allocation3 + $0x290] sm:$0xff]
    %v195 = vld [vmem:[#allocation3 + $0x298] sm:$0xff]
    %v196 = vld [vmem:[#allocation3 + $0x2a0] sm:$0xff]
    %v197 = vld [vmem:[#allocation3 + $0x2a8] sm:$0xff]
    %v198 = vld [vmem:[#allocation3 + $0x2b0] sm:$0xff]
    %v199 = vld [vmem:[#allocation3 + $0x2b8] sm:$0xff]
    %v200 = vld [vmem:[#allocation3 + $0x2c0] sm:$0xff]
    %v201 = vld [vmem:[#allocation3 + $0x2c8] sm:$0xff]
    %v202 = vld [vmem:[#allocation3 + $0x2d0] sm:$0xff]
    %v203 = vld [vmem:[#allocation3 + $0x2d8] sm:$0xff]
    %v204 = vld [vmem:[#allocation3 + $0x2e0] sm:$0xff]
    %v205 = vld [vmem:[#allocation3 + $0x2e8] sm:$0xff]
    %v206 = vld [vmem:[#allocation3 + $0x2f0] sm:$0xff]
    %v207 = vld [vmem:[#allocation3 + $0x2f8] sm:$0xff]
    %v208 = vld [vmem:[#allocation3 + $0x300] sm:$0xff]
    %v209 = vld [vmem:[#allocation3 + $0x308] sm:$0xff]
    %v210 = vld [vmem:[#allocation3 + $0x310] sm:$0xff]
    %v211 = vld [vmem:[#allocation3 + $0x318] sm:$0xff]
    %v212 = vld [vmem:[#allocation3 + $0x320] sm:$0xff]
    %v213 = vld [vmem:[#allocation3 + $0x328] sm:$0xff]
    %v214 = vld [vmem:[#allocation3 + $0x330] sm:$0xff]
    %v215 = vld [vmem:[#allocation3 + $0x338] sm:$0xff]
    %v216 = vld [vmem:[#allocation3 + $0x340] sm:$0xff]
    %v217 = vld [vmem:[#allocation3 + $0x348] sm:$0xff]
    %v218 = vld [vmem:[#allocation3 + $0x350] sm:$0xff]
    %v219 = vld [vmem:[#allocation3 + $0x358] sm:$0xff]
    %v220 = vld [vmem:[#allocation3 + $0x360] sm:$0xff]
    %v221 = vld [vmem:[#allocation3 + $0x368] sm:$0xff]
    %v222 = vld [vmem:[#allocation3 + $0x370] sm:$0xff]
    %v223 = vld [vmem:[#allocation3 + $0x378] sm:$0xff]
    %v224 = vld [vmem:[#allocation3 + $0x380] sm:$0xff]
    %v225 = vld [vmem:[#allocation3 + $0x388] sm:$0xff]
    %v226 = vld [vmem:[#allocation3 + $0x390] sm:$0xff]
    %v227 = vld [vmem:[#allocation3 + $0x398] sm:$0xff]
    %v228 = vld [vmem:[#allocation3 + $0x3a0] sm:$0xff]
    %v229 = vld [vmem:[#allocation3 + $0x3a8] sm:$0xff]
    %v230 = vld [vmem:[#allocation3 + $0x3b0] sm:$0xff]
    %v231 = vld [vmem:[#allocation3 + $0x3b8] sm:$0xff]
    %v232 = vld [vmem:[#allocation3 + $0x3c0] sm:$0xff]
    %v233 = vld [vmem:[#allocation3 + $0x3c8] sm:$0xff]
    %v234 = vld [vmem:[#allocation3 + $0x3d0] sm:$0xff]
    %v235 = vld [vmem:[#allocation3 + $0x3d8] sm:$0xff]
    %v236 = vld [vmem:[#allocation3 + $0x3e0] sm:$0xff]
    %v237 = vld [vmem:[#allocation3 + $0x3e8] sm:$0xff]
    %v238 = vld [vmem:[#allocation3 + $0x3f0] sm:$0xff]
    %v239 = vld [vmem:[#allocation3 + $0x3f8] sm:$0xff]
    %v240 = vld [vmem:[#allocation3 + $0x400] sm:$0xff]
    %v241 = vld [vmem:[#allocation3 + $0x408] sm:$0xff]
    %v242 = vld [vmem:[#allocation3 + $0x410] sm:$0xff]
    %v243 = vld [vmem:[#allocation3 + $0x418] sm:$0xff]
    %v244 = vld [vmem:[#allocation3 + $0x420] sm:$0xff]
    %v245 = vld [vmem:[#allocation3 + $0x428] sm:$0xff]
    %v246 = vld [vmem:[#allocation3 + $0x430] sm:$0xff]
    %v247 = vld [vmem:[#allocation3 + $0x438] sm:$0xff]
    %v248 = vld [vmem:[#allocation3 + $0x440] sm:$0xff]
    %v249 = vld [vmem:[#allocation3 + $0x448] sm:$0xff]
    %v250 = vld [vmem:[#allocation3 + $0x450] sm:$0xff]
    %v251 = vld [vmem:[#allocation3 + $0x458] sm:$0xff]
    %v252 = vld [vmem:[#allocation3 + $0x460] sm:$0xff]
    %v253 = vld [vmem:[#allocation3 + $0x468] sm:$0xff]
    %v254 = vld [vmem:[#allocation3 + $0x470] sm:$0xff]
    %v255 = vld [vmem:[#allocation3 + $0x478] sm:$0xff]
    %v256 = vld [vmem:[#allocation3 + $0x480] sm:$0xff]
    %v257 = vld [vmem:[#allocation3 + $0x488] sm:$0xff]
    %v258 = vld [vmem:[#allocation3 + $0x490] sm:$0xff]
    %v259 = vld [vmem:[#allocation3 + $0x498] sm:$0xff]
    %v260 = vld [vmem:[#allocation3 + $0x4a0] sm:$0xff]
    %v261 = vld [vmem:[#allocation3 + $0x4a8] sm:$0xff]
    %v262 = vld [vmem:[#allocation3 + $0x4b0] sm:$0xff]
    %v263 = vld [vmem:[#allocation3 + $0x4b8] sm:$0xff]
    %v264 = vld [vmem:[#allocation3 + $0x4c0] sm:$0xff]
    %v265 = vld [vmem:[#allocation3 + $0x4c8] sm:$0xff]
    %v266 = vld [vmem:[#allocation3 + $0x4d0] sm:$0xff]
    %v267 = vld [vmem:[#allocation3 + $0x4d8] sm:$0xff]
    %v268 = vld [vmem:[#allocation3 + $0x4e0] sm:$0xff]
    %v269 = vld [vmem:[#allocation3 + $0x4e8] sm:$0xff]
    %v270 = vld [vmem:[#allocation3 + $0x4f0] sm:$0xff]
    %v271 = vld [vmem:[#allocation3 + $0x4f8] sm:$0xff]
    %v272 = vld [vmem:[#allocation3 + $0x500] sm:$0xff]
    %v273 = vld [vmem:[#allocation3 + $0x508] sm:$0xff]
    %v274 = vld [vmem:[#allocation3 + $0x510] sm:$0xff]
    %v275 = vld [vmem:[#allocation3 + $0x518] sm:$0xff]
    %v276 = vld [vmem:[#allocation3 + $0x520] sm:$0xff]
    %v277 = vld [vmem:[#allocation3 + $0x528] sm:$0xff]
    %v278 = vld [vmem:[#allocation3 + $0x530] sm:$0xff]
    %v279 = vld [vmem:[#allocation3 + $0x538] sm:$0xff]
    %v280 = vld [vmem:[#allocation3 + $0x540] sm:$0xff]
    %v281 = vld [vmem:[#allocation3 + $0x548] sm:$0xff]
    %v282 = vld [vmem:[#allocation3 + $0x550] sm:$0xff]
    %v283 = vld [vmem:[#allocation3 + $0x558] sm:$0xff]
    %v284 = vld [vmem:[#allocation3 + $0x560] sm:$0xff]
    %v285 = vld [vmem:[#allocation3 + $0x568] sm:$0xff]
    %v286 = vld [vmem:[#allocation3 + $0x570] sm:$0xff]
    %v287 = vld [vmem:[#allocation3 + $0x578] sm:$0xff]
    %v288 = vld [vmem:[#allocation3 + $0x580] sm:$0xff]
    %v289 = vld [vmem:[#allocation3 + $0x588] sm:$0xff]
    %v290 = vld [vmem:[#allocation3 + $0x590] sm:$0xff]
    %v291 = vld [vmem:[#allocation3 + $0x598] sm:$0xff]
    %v292 = vld [vmem:[#allocation3 + $0x5a0] sm:$0xff]
    %v293 = vld [vmem:[#allocation3 + $0x5a8] sm:$0xff]
    %v294 = vld [vmem:[#allocation3 + $0x5b0] sm:$0xff]
    %v295 = vld [vmem:[#allocation3 + $0x5b8] sm:$0xff]
    %v296 = vld [vmem:[#allocation3 + $0x5c0] sm:$0xff]
    %v297 = vld [vmem:[#allocation3 + $0x5c8] sm:$0xff]
    %v298 = vld [vmem:[#allocation3 + $0x5d0] sm:$0xff]
    %v299 = vld [vmem:[#allocation3 + $0x5d8] sm:$0xff]
    %v300 = vld [vmem:[#allocation3 + $0x5e0] sm:$0xff]
    %v301 = vld [vmem:[#allocation3 + $0x5e8] sm:$0xff]
    %v302 = vld [vmem:[#allocation3 + $0x5f0] sm:$0xff]
    %v303 = vld [vmem:[#allocation3 + $0x5f8] sm:$0xff]
    %v304 = vld [vmem:[#allocation3 + $0x600] sm:$0xff]
    %v305 = vld [vmem:[#allocation3 + $0x608] sm:$0xff]
    %v306 = vld [vmem:[#allocation3 + $0x610] sm:$0xff]
    %v307 = vld [vmem:[#allocation3 + $0x618] sm:$0xff]
    %v308 = vld [vmem:[#allocation3 + $0x620] sm:$0xff]
    %v309 = vld [vmem:[#allocation3 + $0x628] sm:$0xff]
    %v310 = vld [vmem:[#allocation3 + $0x630] sm:$0xff]
    %v311 = vld [vmem:[#allocation3 + $0x638] sm:$0xff]
    %v312 = vld [vmem:[#allocation3 + $0x640] sm:$0xff]
    %v313 = vld [vmem:[#allocation3 + $0x648] sm:$0xff]
    %v314 = vld [vmem:[#allocation3 + $0x650] sm:$0xff]
    %v315 = vld [vmem:[#allocation3 + $0x658] sm:$0xff]
    %v316 = vld [vmem:[#allocation3 + $0x660] sm:$0xff]
    %v317 = vld [vmem:[#allocation3 + $0x668] sm:$0xff]
    %v318 = vld [vmem:[#allocation3 + $0x670] sm:$0xff]
    %v319 = vld [vmem:[#allocation3 + $0x678] sm:$0xff]
    %v320 = vld [vmem:[#allocation3 + $0x680] sm:$0xff]
    %v321 = vld [vmem:[#allocation3 + $0x688] sm:$0xff]
    %v322 = vld [vmem:[#allocation3 + $0x690] sm:$0xff]
    %v323 = vld [vmem:[#allocation3 + $0x698] sm:$0xff]
    %v324 = vld [vmem:[#allocation3 + $0x6a0] sm:$0xff]
    %v325 = vld [vmem:[#allocation3 + $0x6a8] sm:$0xff]
    %v326 = vld [vmem:[#allocation3 + $0x6b0] sm:$0xff]
    %v327 = vld [vmem:[#allocation3 + $0x6b8] sm:$0xff]
    %v328 = vld [vmem:[#allocation3 + $0x6c0] sm:$0xff]
    %v329 = vld [vmem:[#allocation3 + $0x6c8] sm:$0xff]
    %v330 = vld [vmem:[#allocation3 + $0x6d0] sm:$0xff]
    %v331 = vld [vmem:[#allocation3 + $0x6d8] sm:$0xff]
    %v332 = vld [vmem:[#allocation3 + $0x6e0] sm:$0xff]
    %v333 = vld [vmem:[#allocation3 + $0x6e8] sm:$0xff]
    %v334 = vld [vmem:[#allocation3 + $0x6f0] sm:$0xff]
    %v335 = vld [vmem:[#allocation3 + $0x6f8] sm:$0xff]
    %v336 = vld [vmem:[%s3] sm:$0xf]
    %v338 = vlaneseq
    %v339 = vshrl.u32 %v338, 7
    %v340 = vsub.s32 0, %v339
    %v341 = vrot.slane %v336, %v340
    %v342 = vlaneseq
    %v343 = vshrl.u32 %v342, 7
    %v344 = vsub.s32 1, %v343
    %v345 = vrot.slane %v336, %v344
    %v346 = vlaneseq
    %v347 = vshrl.u32 %v346, 7
    %v348 = vsub.s32 2, %v347
    %v349 = vrot.slane %v336, %v348
    %v350 = vlaneseq
    %v351 = vshrl.u32 %v350, 7
    %v352 = vsub.s32 3, %v351
    %v353 = vrot.slane %v336, %v352
    %v362 = vunpack.c.l.b16 %v108
    %v363 = vunpack.c.h.b16 %v108
    %v364 = vunpack.c.l.b16 %v109
    %v365 = vunpack.c.h.b16 %v109
    %v366 = vunpack.c.l.b16 %v110
    %v367 = vunpack.c.h.b16 %v110
    %v368 = vunpack.c.l.b16 %v111
    %v369 = vpack.c.b16 %v362, %v362
    %v370 = vpack.c.b16 %v363, %v363
    %v371 = vpack.c.b16 %v364, %v364
    %v372 = vpack.c.b16 %v365, %v365
    %v373 = vpack.c.b16 %v366, %v366
    %v374 = vpack.c.b16 %v367, %v367
    %v375 = vpack.c.b16 %v368, %v368
    %v607 = vunpack.c.l.b16 %v112
    %v608 = vunpack.c.h.b16 %v112
    %v609 = vunpack.c.l.b16 %v113
    %v610 = vunpack.c.h.b16 %v113
    %v611 = vunpack.c.l.b16 %v114
    %v612 = vunpack.c.h.b16 %v114
    %v613 = vunpack.c.l.b16 %v115
    %v614 = vunpack.c.h.b16 %v115
    %v615 = vunpack.c.l.b16 %v116
    %v616 = vunpack.c.h.b16 %v116
    %v617 = vunpack.c.l.b16 %v117
    %v618 = vunpack.c.h.b16 %v117
    %v619 = vunpack.c.l.b16 %v118
    %v620 = vunpack.c.h.b16 %v118
    %v621 = vunpack.c.l.b16 %v119
    %v622 = vunpack.c.h.b16 %v119
    %v623 = vunpack.c.l.b16 %v120
    %v624 = vunpack.c.h.b16 %v120
    %v625 = vunpack.c.l.b16 %v121
    %v626 = vunpack.c.h.b16 %v121
    %v627 = vunpack.c.l.b16 %v122
    %v628 = vunpack.c.h.b16 %v122
    %v629 = vunpack.c.l.b16 %v123
    %v630 = vunpack.c.h.b16 %v123
    %v631 = vunpack.c.l.b16 %v124
    %v632 = vunpack.c.h.b16 %v124
    %v633 = vunpack.c.l.b16 %v125
    %v634 = vunpack.c.h.b16 %v125
    %v635 = vunpack.c.l.b16 %v126
    %v636 = vunpack.c.h.b16 %v126
    %v637 = vunpack.c.l.b16 %v127
    %v638 = vunpack.c.h.b16 %v127
    %v639 = vunpack.c.l.b16 %v128
    %v640 = vunpack.c.h.b16 %v128
    %v641 = vunpack.c.l.b16 %v129
    %v642 = vunpack.c.h.b16 %v129
    %v643 = vunpack.c.l.b16 %v130
    %v644 = vunpack.c.h.b16 %v130
    %v645 = vunpack.c.l.b16 %v131
    %v646 = vunpack.c.h.b16 %v131
    %v647 = vunpack.c.l.b16 %v132
    %v648 = vunpack.c.h.b16 %v132
    %v649 = vunpack.c.l.b16 %v133
    %v650 = vunpack.c.h.b16 %v133
    %v651 = vunpack.c.l.b16 %v134
    %v652 = vunpack.c.h.b16 %v134
    %v653 = vunpack.c.l.b16 %v135
    %v654 = vunpack.c.h.b16 %v135
    %v655 = vunpack.c.l.b16 %v136
    %v656 = vunpack.c.h.b16 %v136
    %v657 = vunpack.c.l.b16 %v137
    %v658 = vunpack.c.h.b16 %v137
    %v659 = vunpack.c.l.b16 %v138
    %v660 = vunpack.c.h.b16 %v138
    %v661 = vunpack.c.l.b16 %v139
    %v662 = vunpack.c.h.b16 %v139
    %v663 = vunpack.c.l.b16 %v140
    %v664 = vunpack.c.h.b16 %v140
    %v665 = vunpack.c.l.b16 %v141
    %v666 = vunpack.c.h.b16 %v141
    %v667 = vunpack.c.l.b16 %v142
    %v668 = vunpack.c.h.b16 %v142
    %v669 = vunpack.c.l.b16 %v143
    %v670 = vunpack.c.h.b16 %v143
    %v671 = vunpack.c.l.b16 %v144
    %v672 = vunpack.c.h.b16 %v144
    %v673 = vunpack.c.l.b16 %v145
    %v674 = vunpack.c.h.b16 %v145
    %v675 = vunpack.c.l.b16 %v146
    %v676 = vunpack.c.h.b16 %v146
    %v677 = vunpack.c.l.b16 %v147
    %v678 = vunpack.c.h.b16 %v147
    %v679 = vunpack.c.l.b16 %v148
    %v680 = vunpack.c.h.b16 %v148
    %v681 = vunpack.c.l.b16 %v149
    %v682 = vunpack.c.h.b16 %v149
    %v683 = vunpack.c.l.b16 %v150
    %v684 = vunpack.c.h.b16 %v150
    %v685 = vunpack.c.l.b16 %v151
    %v686 = vunpack.c.h.b16 %v151
    %v687 = vunpack.c.l.b16 %v152
    %v688 = vunpack.c.h.b16 %v152
    %v689 = vunpack.c.l.b16 %v153
    %v690 = vunpack.c.h.b16 %v153
    %v691 = vunpack.c.l.b16 %v154
    %v692 = vunpack.c.h.b16 %v154
    %v693 = vunpack.c.l.b16 %v155
    %v694 = vunpack.c.h.b16 %v155
    %v695 = vunpack.c.l.b16 %v156
    %v696 = vunpack.c.h.b16 %v156
    %v697 = vunpack.c.l.b16 %v157
    %v698 = vunpack.c.h.b16 %v157
    %v699 = vunpack.c.l.b16 %v158
    %v700 = vunpack.c.h.b16 %v158
    %v701 = vunpack.c.l.b16 %v159
    %v702 = vunpack.c.h.b16 %v159
    %v703 = vunpack.c.l.b16 %v160
    %v704 = vunpack.c.h.b16 %v160
    %v705 = vunpack.c.l.b16 %v161
    %v706 = vunpack.c.h.b16 %v161
    %v707 = vunpack.c.l.b16 %v162
    %v708 = vunpack.c.h.b16 %v162
    %v709 = vunpack.c.l.b16 %v163
    %v710 = vunpack.c.h.b16 %v163
    %v711 = vunpack.c.l.b16 %v164
    %v712 = vunpack.c.h.b16 %v164
    %v713 = vunpack.c.l.b16 %v165
    %v714 = vunpack.c.h.b16 %v165
    %v715 = vunpack.c.l.b16 %v166
    %v716 = vunpack.c.h.b16 %v166
    %v717 = vunpack.c.l.b16 %v167
    %v718 = vunpack.c.h.b16 %v167
    %v719 = vunpack.c.l.b16 %v168
    %v720 = vunpack.c.h.b16 %v168
    %v721 = vunpack.c.l.b16 %v169
    %v722 = vunpack.c.h.b16 %v169
    %v723 = vunpack.c.l.b16 %v170
    %v724 = vunpack.c.h.b16 %v170
    %v725 = vunpack.c.l.b16 %v171
    %v726 = vunpack.c.h.b16 %v171
    %v727 = vunpack.c.l.b16 %v172
    %v728 = vunpack.c.h.b16 %v172
    %v729 = vunpack.c.l.b16 %v173
    %v730 = vunpack.c.h.b16 %v173
    %v731 = vunpack.c.l.b16 %v174
    %v732 = vunpack.c.h.b16 %v174
    %v733 = vunpack.c.l.b16 %v175
    %v734 = vunpack.c.h.b16 %v175
    %v735 = vunpack.c.l.b16 %v176
    %v736 = vunpack.c.h.b16 %v176
    %v737 = vunpack.c.l.b16 %v177
    %v738 = vunpack.c.h.b16 %v177
    %v739 = vunpack.c.l.b16 %v178
    %v740 = vunpack.c.h.b16 %v178
    %v741 = vunpack.c.l.b16 %v179
    %v742 = vunpack.c.h.b16 %v179
    %v743 = vunpack.c.l.b16 %v180
    %v744 = vunpack.c.h.b16 %v180
    %v745 = vunpack.c.l.b16 %v181
    %v746 = vunpack.c.h.b16 %v181
    %v747 = vunpack.c.l.b16 %v182
    %v748 = vunpack.c.h.b16 %v182
    %v749 = vunpack.c.l.b16 %v183
    %v750 = vunpack.c.h.b16 %v183
    %v751 = vunpack.c.l.b16 %v184
    %v752 = vunpack.c.h.b16 %v184
    %v753 = vunpack.c.l.b16 %v185
    %v754 = vunpack.c.h.b16 %v185
    %v755 = vunpack.c.l.b16 %v186
    %v756 = vunpack.c.h.b16 %v186
    %v757 = vunpack.c.l.b16 %v187
    %v758 = vunpack.c.h.b16 %v187
    %v759 = vunpack.c.l.b16 %v188
    %v760 = vunpack.c.h.b16 %v188
    %v761 = vunpack.c.l.b16 %v189
    %v762 = vunpack.c.h.b16 %v189
    %v763 = vunpack.c.l.b16 %v190
    %v764 = vunpack.c.h.b16 %v190
    %v765 = vunpack.c.l.b16 %v191
    %v766 = vunpack.c.h.b16 %v191
    %v767 = vunpack.c.l.b16 %v192
    %v768 = vunpack.c.h.b16 %v192
    %v769 = vunpack.c.l.b16 %v193
    %v770 = vunpack.c.h.b16 %v193
    %v771 = vunpack.c.l.b16 %v194
    %v772 = vunpack.c.h.b16 %v194
    %v773 = vunpack.c.l.b16 %v195
    %v774 = vunpack.c.h.b16 %v195
    %v775 = vunpack.c.l.b16 %v196
    %v776 = vunpack.c.h.b16 %v196
    %v777 = vunpack.c.l.b16 %v197
    %v778 = vunpack.c.h.b16 %v197
    %v779 = vunpack.c.l.b16 %v198
    %v780 = vunpack.c.h.b16 %v198
    %v781 = vunpack.c.l.b16 %v199
    %v782 = vunpack.c.h.b16 %v199
    %v783 = vunpack.c.l.b16 %v200
    %v784 = vunpack.c.h.b16 %v200
    %v785 = vunpack.c.l.b16 %v201
    %v786 = vunpack.c.h.b16 %v201
    %v787 = vunpack.c.l.b16 %v202
    %v788 = vunpack.c.h.b16 %v202
    %v789 = vunpack.c.l.b16 %v203
    %v790 = vunpack.c.h.b16 %v203
    %v791 = vunpack.c.l.b16 %v204
    %v792 = vunpack.c.h.b16 %v204
    %v793 = vunpack.c.l.b16 %v205
    %v794 = vunpack.c.h.b16 %v205
    %v795 = vunpack.c.l.b16 %v206
    %v796 = vunpack.c.h.b16 %v206
    %v797 = vunpack.c.l.b16 %v207
    %v798 = vunpack.c.h.b16 %v207
    %v799 = vunpack.c.l.b16 %v208
    %v800 = vunpack.c.h.b16 %v208
    %v801 = vunpack.c.l.b16 %v209
    %v802 = vunpack.c.h.b16 %v209
    %v803 = vunpack.c.l.b16 %v210
    %v804 = vunpack.c.h.b16 %v210
    %v805 = vunpack.c.l.b16 %v211
    %v806 = vunpack.c.h.b16 %v211
    %v807 = vunpack.c.l.b16 %v212
    %v808 = vunpack.c.h.b16 %v212
    %v809 = vunpack.c.l.b16 %v213
    %v810 = vunpack.c.h.b16 %v213
    %v811 = vunpack.c.l.b16 %v214
    %v812 = vunpack.c.h.b16 %v214
    %v813 = vunpack.c.l.b16 %v215
    %v814 = vunpack.c.h.b16 %v215
    %v815 = vunpack.c.l.b16 %v216
    %v816 = vunpack.c.h.b16 %v216
    %v817 = vunpack.c.l.b16 %v217
    %v818 = vunpack.c.h.b16 %v217
    %v819 = vunpack.c.l.b16 %v218
    %v820 = vunpack.c.h.b16 %v218
    %v821 = vunpack.c.l.b16 %v219
    %v822 = vunpack.c.h.b16 %v219
    %v823 = vunpack.c.l.b16 %v220
    %v824 = vunpack.c.h.b16 %v220
    %v825 = vunpack.c.l.b16 %v221
    %v826 = vunpack.c.h.b16 %v221
    %v827 = vunpack.c.l.b16 %v222
    %v828 = vunpack.c.h.b16 %v222
    %v829 = vunpack.c.l.b16 %v223
    %v830 = vunpack.c.h.b16 %v223
    %v831 = vunpack.c.l.b16 %v224
    %v832 = vunpack.c.h.b16 %v224
    %v833 = vunpack.c.l.b16 %v225
    %v834 = vunpack.c.h.b16 %v225
    %v835 = vunpack.c.l.b16 %v226
    %v836 = vunpack.c.h.b16 %v226
    %v837 = vunpack.c.l.b16 %v227
    %v838 = vunpack.c.h.b16 %v227
    %v839 = vunpack.c.l.b16 %v228
    %v840 = vunpack.c.h.b16 %v228
    %v841 = vunpack.c.l.b16 %v229
    %v842 = vunpack.c.h.b16 %v229
    %v843 = vunpack.c.l.b16 %v230
    %v844 = vunpack.c.h.b16 %v230
    %v845 = vunpack.c.l.b16 %v231
    %v846 = vunpack.c.h.b16 %v231
    %v847 = vunpack.c.l.b16 %v232
    %v848 = vunpack.c.h.b16 %v232
    %v849 = vunpack.c.l.b16 %v233
    %v850 = vunpack.c.h.b16 %v233
    %v851 = vunpack.c.l.b16 %v234
    %v852 = vunpack.c.h.b16 %v234
    %v853 = vunpack.c.l.b16 %v235
    %v854 = vunpack.c.h.b16 %v235
    %v855 = vunpack.c.l.b16 %v236
    %v856 = vunpack.c.h.b16 %v236
    %v857 = vunpack.c.l.b16 %v237
    %v858 = vunpack.c.h.b16 %v237
    %v859 = vunpack.c.l.b16 %v238
    %v860 = vunpack.c.h.b16 %v238
    %v861 = vunpack.c.l.b16 %v239
    %v862 = vunpack.c.h.b16 %v239
    %v863 = vunpack.c.l.b16 %v240
    %v864 = vunpack.c.h.b16 %v240
    %v865 = vunpack.c.l.b16 %v241
    %v866 = vunpack.c.h.b16 %v241
    %v867 = vunpack.c.l.b16 %v242
    %v868 = vunpack.c.h.b16 %v242
    %v869 = vunpack.c.l.b16 %v243
    %v870 = vunpack.c.h.b16 %v243
    %v871 = vunpack.c.l.b16 %v244
    %v872 = vunpack.c.h.b16 %v244
    %v873 = vunpack.c.l.b16 %v245
    %v874 = vunpack.c.h.b16 %v245
    %v875 = vunpack.c.l.b16 %v246
    %v876 = vunpack.c.h.b16 %v246
    %v877 = vunpack.c.l.b16 %v247
    %v878 = vunpack.c.h.b16 %v247
    %v879 = vunpack.c.l.b16 %v248
    %v880 = vunpack.c.h.b16 %v248
    %v881 = vunpack.c.l.b16 %v249
    %v882 = vunpack.c.h.b16 %v249
    %v883 = vunpack.c.l.b16 %v250
    %v884 = vunpack.c.h.b16 %v250
    %v885 = vunpack.c.l.b16 %v251
    %v886 = vunpack.c.h.b16 %v251
    %v887 = vunpack.c.l.b16 %v252
    %v888 = vunpack.c.h.b16 %v252
    %v889 = vunpack.c.l.b16 %v253
    %v890 = vunpack.c.h.b16 %v253
    %v891 = vunpack.c.l.b16 %v254
    %v892 = vunpack.c.h.b16 %v254
    %v893 = vunpack.c.l.b16 %v255
    %v894 = vunpack.c.h.b16 %v255
    %v895 = vunpack.c.l.b16 %v256
    %v896 = vunpack.c.h.b16 %v256
    %v897 = vunpack.c.l.b16 %v257
    %v898 = vunpack.c.h.b16 %v257
    %v899 = vunpack.c.l.b16 %v258
    %v900 = vunpack.c.h.b16 %v258
    %v901 = vunpack.c.l.b16 %v259
    %v902 = vunpack.c.h.b16 %v259
    %v903 = vunpack.c.l.b16 %v260
    %v904 = vunpack.c.h.b16 %v260
    %v905 = vunpack.c.l.b16 %v261
    %v906 = vunpack.c.h.b16 %v261
    %v907 = vunpack.c.l.b16 %v262
    %v908 = vunpack.c.h.b16 %v262
    %v909 = vunpack.c.l.b16 %v263
    %v910 = vunpack.c.h.b16 %v263
    %v911 = vunpack.c.l.b16 %v264
    %v912 = vunpack.c.h.b16 %v264
    %v913 = vunpack.c.l.b16 %v265
    %v914 = vunpack.c.h.b16 %v265
    %v915 = vunpack.c.l.b16 %v266
    %v916 = vunpack.c.h.b16 %v266
    %v917 = vunpack.c.l.b16 %v267
    %v918 = vunpack.c.h.b16 %v267
    %v919 = vunpack.c.l.b16 %v268
    %v920 = vunpack.c.h.b16 %v268
    %v921 = vunpack.c.l.b16 %v269
    %v922 = vunpack.c.h.b16 %v269
    %v923 = vunpack.c.l.b16 %v270
    %v924 = vunpack.c.h.b16 %v270
    %v925 = vunpack.c.l.b16 %v271
    %v926 = vunpack.c.h.b16 %v271
    %v927 = vunpack.c.l.b16 %v272
    %v928 = vunpack.c.h.b16 %v272
    %v929 = vunpack.c.l.b16 %v273
    %v930 = vunpack.c.h.b16 %v273
    %v931 = vunpack.c.l.b16 %v274
    %v932 = vunpack.c.h.b16 %v274
    %v933 = vunpack.c.l.b16 %v275
    %v934 = vunpack.c.h.b16 %v275
    %v935 = vunpack.c.l.b16 %v276
    %v936 = vunpack.c.h.b16 %v276
    %v937 = vunpack.c.l.b16 %v277
    %v938 = vunpack.c.h.b16 %v277
    %v939 = vunpack.c.l.b16 %v278
    %v940 = vunpack.c.h.b16 %v278
    %v941 = vunpack.c.l.b16 %v279
    %v942 = vunpack.c.h.b16 %v279
    %v943 = vunpack.c.l.b16 %v280
    %v944 = vunpack.c.h.b16 %v280
    %v945 = vunpack.c.l.b16 %v281
    %v946 = vunpack.c.h.b16 %v281
    %v947 = vunpack.c.l.b16 %v282
    %v948 = vunpack.c.h.b16 %v282
    %v949 = vunpack.c.l.b16 %v283
    %v950 = vunpack.c.h.b16 %v283
    %v951 = vunpack.c.l.b16 %v284
    %v952 = vunpack.c.h.b16 %v284
    %v953 = vunpack.c.l.b16 %v285
    %v954 = vunpack.c.h.b16 %v285
    %v955 = vunpack.c.l.b16 %v286
    %v956 = vunpack.c.h.b16 %v286
    %v957 = vunpack.c.l.b16 %v287
    %v958 = vunpack.c.h.b16 %v287
    %v959 = vunpack.c.l.b16 %v288
    %v960 = vunpack.c.h.b16 %v288
    %v961 = vunpack.c.l.b16 %v289
    %v962 = vunpack.c.h.b16 %v289
    %v963 = vunpack.c.l.b16 %v290
    %v964 = vunpack.c.h.b16 %v290
    %v965 = vunpack.c.l.b16 %v291
    %v966 = vunpack.c.h.b16 %v291
    %v967 = vunpack.c.l.b16 %v292
    %v968 = vunpack.c.h.b16 %v292
    %v969 = vunpack.c.l.b16 %v293
    %v970 = vunpack.c.h.b16 %v293
    %v971 = vunpack.c.l.b16 %v294
    %v972 = vunpack.c.h.b16 %v294
    %v973 = vunpack.c.l.b16 %v295
    %v974 = vunpack.c.h.b16 %v295
    %v975 = vunpack.c.l.b16 %v296
    %v976 = vunpack.c.h.b16 %v296
    %v977 = vunpack.c.l.b16 %v297
    %v978 = vunpack.c.h.b16 %v297
    %v979 = vunpack.c.l.b16 %v298
    %v980 = vunpack.c.h.b16 %v298
    %v981 = vunpack.c.l.b16 %v299
    %v982 = vunpack.c.h.b16 %v299
    %v983 = vunpack.c.l.b16 %v300
    %v984 = vunpack.c.h.b16 %v300
    %v985 = vunpack.c.l.b16 %v301
    %v986 = vunpack.c.h.b16 %v301
    %v987 = vunpack.c.l.b16 %v302
    %v988 = vunpack.c.h.b16 %v302
    %v989 = vunpack.c.l.b16 %v303
    %v990 = vunpack.c.h.b16 %v303
    %v991 = vunpack.c.l.b16 %v304
    %v992 = vunpack.c.h.b16 %v304
    %v993 = vunpack.c.l.b16 %v305
    %v994 = vunpack.c.h.b16 %v305
    %v995 = vunpack.c.l.b16 %v306
    %v996 = vunpack.c.h.b16 %v306
    %v997 = vunpack.c.l.b16 %v307
    %v998 = vunpack.c.h.b16 %v307
    %v999 = vunpack.c.l.b16 %v308
    %v1000 = vunpack.c.h.b16 %v308
    %v1001 = vunpack.c.l.b16 %v309
    %v1002 = vunpack.c.h.b16 %v309
    %v1003 = vunpack.c.l.b16 %v310
    %v1004 = vunpack.c.h.b16 %v310
    %v1005 = vunpack.c.l.b16 %v311
    %v1006 = vunpack.c.h.b16 %v311
    %v1007 = vunpack.c.l.b16 %v312
    %v1008 = vunpack.c.h.b16 %v312
    %v1009 = vunpack.c.l.b16 %v313
    %v1010 = vunpack.c.h.b16 %v313
    %v1011 = vunpack.c.l.b16 %v314
    %v1012 = vunpack.c.h.b16 %v314
    %v1013 = vunpack.c.l.b16 %v315
    %v1014 = vunpack.c.h.b16 %v315
    %v1015 = vunpack.c.l.b16 %v316
    %v1016 = vunpack.c.h.b16 %v316
    %v1017 = vunpack.c.l.b16 %v317
    %v1018 = vunpack.c.h.b16 %v317
    %v1019 = vunpack.c.l.b16 %v318
    %v1020 = vunpack.c.h.b16 %v318
    %v1021 = vunpack.c.l.b16 %v319
    %v1022 = vunpack.c.h.b16 %v319
    %v1023 = vunpack.c.l.b16 %v320
    %v1024 = vunpack.c.h.b16 %v320
    %v1025 = vunpack.c.l.b16 %v321
    %v1026 = vunpack.c.h.b16 %v321
    %v1027 = vunpack.c.l.b16 %v322
    %v1028 = vunpack.c.h.b16 %v322
    %v1029 = vunpack.c.l.b16 %v323
    %v1030 = vunpack.c.h.b16 %v323
    %v1031 = vunpack.c.l.b16 %v324
    %v1032 = vunpack.c.h.b16 %v324
    %v1033 = vunpack.c.l.b16 %v325
    %v1034 = vunpack.c.h.b16 %v325
    %v1035 = vunpack.c.l.b16 %v326
    %v1036 = vunpack.c.h.b16 %v326
    %v1037 = vunpack.c.l.b16 %v327
    %v1038 = vunpack.c.h.b16 %v327
    %v1039 = vunpack.c.l.b16 %v328
    %v1040 = vunpack.c.h.b16 %v328
    %v1041 = vunpack.c.l.b16 %v329
    %v1042 = vunpack.c.h.b16 %v329
    %v1043 = vunpack.c.l.b16 %v330
    %v1044 = vunpack.c.h.b16 %v330
    %v1045 = vunpack.c.l.b16 %v331
    %v1046 = vunpack.c.h.b16 %v331
    %v1047 = vunpack.c.l.b16 %v332
    %v1048 = vunpack.c.h.b16 %v332
    %v1049 = vunpack.c.l.b16 %v333
    %v1050 = vunpack.c.h.b16 %v333
    %v1051 = vunpack.c.l.b16 %v334
    %v1052 = vunpack.c.h.b16 %v334
    %v1053 = vunpack.c.l.b16 %v335
    %v1054 = vunpack.c.h.b16 %v335
    %v1055 = vpack.c.b16 %v611, %v607
    %v1056 = vpack.c.b16 %v612, %v608
    %v1057 = vpack.c.b16 %v613, %v609
    %v1058 = vpack.c.b16 %v614, %v610
    %v1059 = vpack.c.b16 %v619, %v615
    %v1060 = vpack.c.b16 %v620, %v616
    %v1061 = vpack.c.b16 %v621, %v617
    %v1062 = vpack.c.b16 %v622, %v618
    %v1063 = vpack.c.b16 %v627, %v623
    %v1064 = vpack.c.b16 %v628, %v624
    %v1065 = vpack.c.b16 %v629, %v625
    %v1066 = vpack.c.b16 %v630, %v626
    %v1067 = vpack.c.b16 %v635, %v631
    %v1068 = vpack.c.b16 %v636, %v632
    %v1069 = vpack.c.b16 %v637, %v633
    %v1070 = vpack.c.b16 %v638, %v634
    %v1071 = vpack.c.b16 %v643, %v639
    %v1072 = vpack.c.b16 %v644, %v640
    %v1073 = vpack.c.b16 %v645, %v641
    %v1074 = vpack.c.b16 %v646, %v642
    %v1075 = vpack.c.b16 %v651, %v647
    %v1076 = vpack.c.b16 %v652, %v648
    %v1077 = vpack.c.b16 %v653, %v649
    %v1078 = vpack.c.b16 %v654, %v650
    %v1079 = vpack.c.b16 %v659, %v655
    %v1080 = vpack.c.b16 %v660, %v656
    %v1081 = vpack.c.b16 %v661, %v657
    %v1082 = vpack.c.b16 %v662, %v658
    %v1083 = vpack.c.b16 %v667, %v663
    %v1084 = vpack.c.b16 %v668, %v664
    %v1085 = vpack.c.b16 %v669, %v665
    %v1086 = vpack.c.b16 %v670, %v666
    %v1087 = vpack.c.b16 %v675, %v671
    %v1088 = vpack.c.b16 %v676, %v672
    %v1089 = vpack.c.b16 %v677, %v673
    %v1090 = vpack.c.b16 %v678, %v674
    %v1091 = vpack.c.b16 %v683, %v679
    %v1092 = vpack.c.b16 %v684, %v680
    %v1093 = vpack.c.b16 %v685, %v681
    %v1094 = vpack.c.b16 %v686, %v682
    %v1095 = vpack.c.b16 %v691, %v687
    %v1096 = vpack.c.b16 %v692, %v688
    %v1097 = vpack.c.b16 %v693, %v689
    %v1098 = vpack.c.b16 %v694, %v690
    %v1099 = vpack.c.b16 %v699, %v695
    %v1100 = vpack.c.b16 %v700, %v696
    %v1101 = vpack.c.b16 %v701, %v697
    %v1102 = vpack.c.b16 %v702, %v698
    %v1103 = vpack.c.b16 %v707, %v703
    %v1104 = vpack.c.b16 %v708, %v704
    %v1105 = vpack.c.b16 %v709, %v705
    %v1106 = vpack.c.b16 %v710, %v706
    %v1107 = vpack.c.b16 %v715, %v711
    %v1108 = vpack.c.b16 %v716, %v712
    %v1109 = vpack.c.b16 %v717, %v713
    %v1110 = vpack.c.b16 %v718, %v714
    %v1111 = vpack.c.b16 %v723, %v719
    %v1112 = vpack.c.b16 %v724, %v720
    %v1113 = vpack.c.b16 %v725, %v721
    %v1114 = vpack.c.b16 %v726, %v722
    %v1115 = vpack.c.b16 %v731, %v727
    %v1116 = vpack.c.b16 %v732, %v728
    %v1117 = vpack.c.b16 %v733, %v729
    %v1118 = vpack.c.b16 %v734, %v730
    %v1119 = vpack.c.b16 %v739, %v735
    %v1120 = vpack.c.b16 %v740, %v736
    %v1121 = vpack.c.b16 %v741, %v737
    %v1122 = vpack.c.b16 %v742, %v738
    %v1123 = vpack.c.b16 %v747, %v743
    %v1124 = vpack.c.b16 %v748, %v744
    %v1125 = vpack.c.b16 %v749, %v745
    %v1126 = vpack.c.b16 %v750, %v746
    %v1127 = vpack.c.b16 %v755, %v751
    %v1128 = vpack.c.b16 %v756, %v752
    %v1129 = vpack.c.b16 %v757, %v753
    %v1130 = vpack.c.b16 %v758, %v754
    %v1131 = vpack.c.b16 %v763, %v759
    %v1132 = vpack.c.b16 %v764, %v760
    %v1133 = vpack.c.b16 %v765, %v761
    %v1134 = vpack.c.b16 %v766, %v762
    %v1135 = vpack.c.b16 %v771, %v767
    %v1136 = vpack.c.b16 %v772, %v768
    %v1137 = vpack.c.b16 %v773, %v769
    %v1138 = vpack.c.b16 %v774, %v770
    %v1139 = vpack.c.b16 %v779, %v775
    %v1140 = vpack.c.b16 %v780, %v776
    %v1141 = vpack.c.b16 %v781, %v777
    %v1142 = vpack.c.b16 %v782, %v778
    %v1143 = vpack.c.b16 %v787, %v783
    %v1144 = vpack.c.b16 %v788, %v784
    %v1145 = vpack.c.b16 %v789, %v785
    %v1146 = vpack.c.b16 %v790, %v786
    %v1147 = vpack.c.b16 %v795, %v791
    %v1148 = vpack.c.b16 %v796, %v792
    %v1149 = vpack.c.b16 %v797, %v793
    %v1150 = vpack.c.b16 %v798, %v794
    %v1151 = vpack.c.b16 %v803, %v799
    %v1152 = vpack.c.b16 %v804, %v800
    %v1153 = vpack.c.b16 %v805, %v801
    %v1154 = vpack.c.b16 %v806, %v802
    %v1155 = vpack.c.b16 %v811, %v807
    %v1156 = vpack.c.b16 %v812, %v808
    %v1157 = vpack.c.b16 %v813, %v809
    %v1158 = vpack.c.b16 %v814, %v810
    %v1159 = vpack.c.b16 %v819, %v815
    %v1160 = vpack.c.b16 %v820, %v816
    %v1161 = vpack.c.b16 %v821, %v817
    %v1162 = vpack.c.b16 %v822, %v818
    %v1163 = vpack.c.b16 %v827, %v823
    %v1164 = vpack.c.b16 %v828, %v824
    %v1165 = vpack.c.b16 %v829, %v825
    %v1166 = vpack.c.b16 %v830, %v826
    %v1167 = vpack.c.b16 %v835, %v831
    %v1168 = vpack.c.b16 %v836, %v832
    %v1169 = vpack.c.b16 %v837, %v833
    %v1170 = vpack.c.b16 %v838, %v834
    %v1171 = vpack.c.b16 %v843, %v839
    %v1172 = vpack.c.b16 %v844, %v840
    %v1173 = vpack.c.b16 %v845, %v841
    %v1174 = vpack.c.b16 %v846, %v842
    %v1175 = vpack.c.b16 %v851, %v847
    %v1176 = vpack.c.b16 %v852, %v848
    %v1177 = vpack.c.b16 %v853, %v849
    %v1178 = vpack.c.b16 %v854, %v850
    %v1179 = vpack.c.b16 %v859, %v855
    %v1180 = vpack.c.b16 %v860, %v856
    %v1181 = vpack.c.b16 %v861, %v857
    %v1182 = vpack.c.b16 %v862, %v858
    %v1183 = vpack.c.b16 %v867, %v863
    %v1184 = vpack.c.b16 %v868, %v864
    %v1185 = vpack.c.b16 %v869, %v865
    %v1186 = vpack.c.b16 %v870, %v866
    %v1187 = vpack.c.b16 %v875, %v871
    %v1188 = vpack.c.b16 %v876, %v872
    %v1189 = vpack.c.b16 %v877, %v873
    %v1190 = vpack.c.b16 %v878, %v874
    %v1191 = vpack.c.b16 %v883, %v879
    %v1192 = vpack.c.b16 %v884, %v880
    %v1193 = vpack.c.b16 %v885, %v881
    %v1194 = vpack.c.b16 %v886, %v882
    %v1195 = vpack.c.b16 %v891, %v887
    %v1196 = vpack.c.b16 %v892, %v888
    %v1197 = vpack.c.b16 %v893, %v889
    %v1198 = vpack.c.b16 %v894, %v890
    %v1199 = vpack.c.b16 %v899, %v895
    %v1200 = vpack.c.b16 %v900, %v896
    %v1201 = vpack.c.b16 %v901, %v897
    %v1202 = vpack.c.b16 %v902, %v898
    %v1203 = vpack.c.b16 %v907, %v903
    %v1204 = vpack.c.b16 %v908, %v904
    %v1205 = vpack.c.b16 %v909, %v905
    %v1206 = vpack.c.b16 %v910, %v906
    %v1207 = vpack.c.b16 %v915, %v911
    %v1208 = vpack.c.b16 %v916, %v912
    %v1209 = vpack.c.b16 %v917, %v913
    %v1210 = vpack.c.b16 %v918, %v914
    %v1211 = vpack.c.b16 %v923, %v919
    %v1212 = vpack.c.b16 %v924, %v920
    %v1213 = vpack.c.b16 %v925, %v921
    %v1214 = vpack.c.b16 %v926, %v922
    %v1215 = vpack.c.b16 %v931, %v927
    %v1216 = vpack.c.b16 %v932, %v928
    %v1217 = vpack.c.b16 %v933, %v929
    %v1218 = vpack.c.b16 %v934, %v930
    %v1219 = vpack.c.b16 %v939, %v935
    %v1220 = vpack.c.b16 %v940, %v936
    %v1221 = vpack.c.b16 %v941, %v937
    %v1222 = vpack.c.b16 %v942, %v938
    %v1223 = vpack.c.b16 %v947, %v943
    %v1224 = vpack.c.b16 %v948, %v944
    %v1225 = vpack.c.b16 %v949, %v945
    %v1226 = vpack.c.b16 %v950, %v946
    %v1227 = vpack.c.b16 %v955, %v951
    %v1228 = vpack.c.b16 %v956, %v952
    %v1229 = vpack.c.b16 %v957, %v953
    %v1230 = vpack.c.b16 %v958, %v954
    %v1231 = vpack.c.b16 %v963, %v959
    %v1232 = vpack.c.b16 %v964, %v960
    %v1233 = vpack.c.b16 %v965, %v961
    %v1234 = vpack.c.b16 %v966, %v962
    %v1235 = vpack.c.b16 %v971, %v967
    %v1236 = vpack.c.b16 %v972, %v968
    %v1237 = vpack.c.b16 %v973, %v969
    %v1238 = vpack.c.b16 %v974, %v970
    %v1239 = vpack.c.b16 %v979, %v975
    %v1240 = vpack.c.b16 %v980, %v976
    %v1241 = vpack.c.b16 %v981, %v977
    %v1242 = vpack.c.b16 %v982, %v978
    %v1243 = vpack.c.b16 %v987, %v983
    %v1244 = vpack.c.b16 %v988, %v984
    %v1245 = vpack.c.b16 %v989, %v985
    %v1246 = vpack.c.b16 %v990, %v986
    %v1247 = vpack.c.b16 %v995, %v991
    %v1248 = vpack.c.b16 %v996, %v992
    %v1249 = vpack.c.b16 %v997, %v993
    %v1250 = vpack.c.b16 %v998, %v994
    %v1251 = vpack.c.b16 %v1003, %v999
    %v1252 = vpack.c.b16 %v1004, %v1000
    %v1253 = vpack.c.b16 %v1005, %v1001
    %v1254 = vpack.c.b16 %v1006, %v1002
    %v1255 = vpack.c.b16 %v1011, %v1007
    %v1256 = vpack.c.b16 %v1012, %v1008
    %v1257 = vpack.c.b16 %v1013, %v1009
    %v1258 = vpack.c.b16 %v1014, %v1010
    %v1259 = vpack.c.b16 %v1019, %v1015
    %v1260 = vpack.c.b16 %v1020, %v1016
    %v1261 = vpack.c.b16 %v1021, %v1017
    %v1262 = vpack.c.b16 %v1022, %v1018
    %v1263 = vpack.c.b16 %v1027, %v1023
    %v1264 = vpack.c.b16 %v1028, %v1024
    %v1265 = vpack.c.b16 %v1029, %v1025
    %v1266 = vpack.c.b16 %v1030, %v1026
    %v1267 = vpack.c.b16 %v1035, %v1031
    %v1268 = vpack.c.b16 %v1036, %v1032
    %v1269 = vpack.c.b16 %v1037, %v1033
    %v1270 = vpack.c.b16 %v1038, %v1034
    %v1271 = vpack.c.b16 %v1043, %v1039
    %v1272 = vpack.c.b16 %v1044, %v1040
    %v1273 = vpack.c.b16 %v1045, %v1041
    %v1274 = vpack.c.b16 %v1046, %v1042
    %v1275 = vpack.c.b16 %v1051, %v1047
    %v1276 = vpack.c.b16 %v1052, %v1048
    %v1277 = vpack.c.b16 %v1053, %v1049
    %v1278 = vpack.c.b16 %v1054, %v1050
    %1503 = vmatprep.subr.bf16.mxu0 %v1084
    %1504 = vmatpush1.bf16.msra.mxu0 %v1083
    %1505 = vmatprep.subr.bf16.mxu0 %v1080
    %1506 = vmatpush1.bf16.msra.mxu0 %v1079
    %1507 = vmatprep.subr.bf16.mxu0 %v1076
    %1508 = vmatpush1.bf16.msra.mxu0 %v1075
    %1509 = vmatprep.subr.bf16.mxu0 %v1072
    %1510 = vmatpush1.bf16.msra.mxu0 %v1071
    %1511 = vmatprep.subr.bf16.mxu0 %v1068
    %1512 = vmatpush1.bf16.msra.mxu0 %v1067
    %1513 = vmatprep.subr.bf16.mxu0 %v1064
    %1514 = vmatpush1.bf16.msra.mxu0 %v1063
    %1515 = vmatprep.subr.bf16.mxu0 %v1060
    %1516 = vmatpush1.bf16.msra.mxu0 %v1059
    %1517 = vmatprep.subr.bf16.mxu0 %v1056
    %1518 = vmatpush1.bf16.msra.mxu0 %v1055
    %1519 = vmatprep.subr.bf16.mxu0 %v1116
    %1520 = vmatpush2.bf16.msra.mxu0 %v1115
    %1521 = vmatprep.subr.bf16.mxu0 %v1112
    %1522 = vmatpush2.bf16.msra.mxu0 %v1111
    %1523 = vmatprep.subr.bf16.mxu0 %v1108
    %1524 = vmatpush2.bf16.msra.mxu0 %v1107
    %1525 = vmatprep.subr.bf16.mxu0 %v1104
    %1526 = vmatpush2.bf16.msra.mxu0 %v1103
    %1527 = vmatprep.subr.bf16.mxu0 %v1100
    %1528 = vmatpush2.bf16.msra.mxu0 %v1099
    %1529 = vmatprep.subr.bf16.mxu0 %v1096
    %1530 = vmatpush2.bf16.msra.mxu0 %v1095
    %1531 = vmatprep.subr.bf16.mxu0 %v1092
    %1532 = vmatpush2.bf16.msra.mxu0 %v1091
    %1533 = vmatprep.subr.bf16.mxu0 %v1088
    %1534 = vmatpush2.bf16.msra.mxu0 %v1087
    %1535 = vmatprep.mubr.bf16.mxu0 %v370
    %1536 = vmatmul.mubr.bf16.gmra.mxu0 %v369
    %v1537 = vpop.f32.mrf.mxu0
    %v1538 = vadd.f32 %v341, %v1537
    %v1539 = vpop.f32.mrf.mxu0
    %v1540 = vadd.f32 %v345, %v1539
    %v1541 = vpop.f32.mrf.mxu0
    %v1542 = vpop.f32.mrf.mxu0
    %1543 = vdwg.mxu0
    %1544 = vmatprep.subr.bf16.mxu0 %v1148
    %1545 = vmatpush1.bf16.msra.mxu0 %v1147
    %1546 = vmatprep.subr.bf16.mxu0 %v1144
    %1547 = vmatpush1.bf16.msra.mxu0 %v1143
    %1548 = vmatprep.subr.bf16.mxu0 %v1140
    %1549 = vmatpush1.bf16.msra.mxu0 %v1139
    %1550 = vmatprep.subr.bf16.mxu0 %v1136
    %1551 = vmatpush1.bf16.msra.mxu0 %v1135
    %1552 = vmatprep.subr.bf16.mxu0 %v1132
    %1553 = vmatpush1.bf16.msra.mxu0 %v1131
    %1554 = vmatprep.subr.bf16.mxu0 %v1128
    %1555 = vmatpush1.bf16.msra.mxu0 %v1127
    %1556 = vmatprep.subr.bf16.mxu0 %v1124
    %1557 = vmatpush1.bf16.msra.mxu0 %v1123
    %1558 = vmatprep.subr.bf16.mxu0 %v1120
    %1559 = vmatpush1.bf16.msra.mxu0 %v1119
    %1560 = vmatprep.subr.bf16.mxu0 %v1180
    %1561 = vmatpush2.bf16.msra.mxu0 %v1179
    %1562 = vmatprep.subr.bf16.mxu0 %v1176
    %1563 = vmatpush2.bf16.msra.mxu0 %v1175
    %1564 = vmatprep.subr.bf16.mxu0 %v1172
    %1565 = vmatpush2.bf16.msra.mxu0 %v1171
    %1566 = vmatprep.subr.bf16.mxu0 %v1168
    %1567 = vmatpush2.bf16.msra.mxu0 %v1167
    %1568 = vmatprep.subr.bf16.mxu0 %v1164
    %1569 = vmatpush2.bf16.msra.mxu0 %v1163
    %1570 = vmatprep.subr.bf16.mxu0 %v1160
    %1571 = vmatpush2.bf16.msra.mxu0 %v1159
    %1572 = vmatprep.subr.bf16.mxu0 %v1156
    %1573 = vmatpush2.bf16.msra.mxu0 %v1155
    %1574 = vmatprep.subr.bf16.mxu0 %v1152
    %1575 = vmatpush2.bf16.msra.mxu0 %v1151
    %1576 = vmatprep.mubr.bf16.mxu0 %v372
    %1577 = vmatmul.mubr.bf16.gmra.mxu0 %v371
    %v1578 = vpop.f32.mrf.mxu0
    %v1579 = vadd.f32 %v1538, %v1578
    %v1580 = vpop.f32.mrf.mxu0
    %v1581 = vadd.f32 %v1540, %v1580
    %v1582 = vpop.f32.mrf.mxu0
    %v1583 = vpop.f32.mrf.mxu0
    %1584 = vdwg.mxu0
    %1585 = vmatprep.subr.bf16.mxu0 %v1212
    %1586 = vmatpush1.bf16.msra.mxu0 %v1211
    %1587 = vmatprep.subr.bf16.mxu0 %v1208
    %1588 = vmatpush1.bf16.msra.mxu0 %v1207
    %1589 = vmatprep.subr.bf16.mxu0 %v1204
    %1590 = vmatpush1.bf16.msra.mxu0 %v1203
    %1591 = vmatprep.subr.bf16.mxu0 %v1200
    %1592 = vmatpush1.bf16.msra.mxu0 %v1199
    %1593 = vmatprep.subr.bf16.mxu0 %v1196
    %1594 = vmatpush1.bf16.msra.mxu0 %v1195
    %1595 = vmatprep.subr.bf16.mxu0 %v1192
    %1596 = vmatpush1.bf16.msra.mxu0 %v1191
    %1597 = vmatprep.subr.bf16.mxu0 %v1188
    %1598 = vmatpush1.bf16.msra.mxu0 %v1187
    %1599 = vmatprep.subr.bf16.mxu0 %v1184
    %1600 = vmatpush1.bf16.msra.mxu0 %v1183
    %1601 = vmatprep.subr.bf16.mxu0 %v1244
    %1602 = vmatpush2.bf16.msra.mxu0 %v1243
    %1603 = vmatprep.subr.bf16.mxu0 %v1240
    %1604 = vmatpush2.bf16.msra.mxu0 %v1239
    %1605 = vmatprep.subr.bf16.mxu0 %v1236
    %1606 = vmatpush2.bf16.msra.mxu0 %v1235
    %1607 = vmatprep.subr.bf16.mxu0 %v1232
    %1608 = vmatpush2.bf16.msra.mxu0 %v1231
    %1609 = vmatprep.subr.bf16.mxu0 %v1228
    %1610 = vmatpush2.bf16.msra.mxu0 %v1227
    %1611 = vmatprep.subr.bf16.mxu0 %v1224
    %1612 = vmatpush2.bf16.msra.mxu0 %v1223
    %1613 = vmatprep.subr.bf16.mxu0 %v1220
    %1614 = vmatpush2.bf16.msra.mxu0 %v1219
    %1615 = vmatprep.subr.bf16.mxu0 %v1216
    %1616 = vmatpush2.bf16.msra.mxu0 %v1215
    %1617 = vmatprep.mubr.bf16.mxu0 %v374
    %1618 = vmatmul.mubr.bf16.gmra.mxu0 %v373
    %v1619 = vpop.f32.mrf.mxu0
    %v1620 = vadd.f32 %v1579, %v1619
    %v1621 = vpop.f32.mrf.mxu0
    %v1622 = vadd.f32 %v1581, %v1621
    %v1623 = vpop.f32.mrf.mxu0
    %v1624 = vpop.f32.mrf.mxu0
    %1625 = vdwg.mxu0
    %1626 = vmatprep.subr.bf16.mxu0 %v1276
    %1627 = vmatpush1.bf16.msra.mxu0 %v1275
    %1628 = vmatprep.subr.bf16.mxu0 %v1272
    %1629 = vmatpush1.bf16.msra.mxu0 %v1271
    %1630 = vmatprep.subr.bf16.mxu0 %v1268
    %1631 = vmatpush1.bf16.msra.mxu0 %v1267
    %1632 = vmatprep.subr.bf16.mxu0 %v1264
    %1633 = vmatpush1.bf16.msra.mxu0 %v1263
    %1634 = vmatprep.subr.bf16.mxu0 %v1260
    %1635 = vmatpush1.bf16.msra.mxu0 %v1259
    %1636 = vmatprep.subr.bf16.mxu0 %v1256
    %1637 = vmatpush1.bf16.msra.mxu0 %v1255
    %1638 = vmatprep.subr.bf16.mxu0 %v1252
    %1639 = vmatpush1.bf16.msra.mxu0 %v1251
    %1640 = vmatprep.subr.bf16.mxu0 %v1248
    %1641 = vmatpush1.bf16.msra.mxu0 %v1247
    %1642 = vmatprep.subr.bf16.mxu0 0
    %1643 = vmatpush2.bf16.msra.mxu0 0
    %1644 = vmatprep.subr.bf16.mxu0 0
    %1645 = vmatpush2.bf16.msra.mxu0 0
    %1646 = vmatprep.subr.bf16.mxu0 0
    %1647 = vmatpush2.bf16.msra.mxu0 0
    %1648 = vmatprep.subr.bf16.mxu0 0
    %1649 = vmatpush2.bf16.msra.mxu0 0
    %1650 = vmatprep.subr.bf16.mxu0 0
    %1651 = vmatpush2.bf16.msra.mxu0 0
    %1652 = vmatprep.subr.bf16.mxu0 0
    %1653 = vmatpush2.bf16.msra.mxu0 0
    %1654 = vmatprep.subr.bf16.mxu0 0
    %1655 = vmatpush2.bf16.msra.mxu0 0
    %1656 = vmatprep.subr.bf16.mxu0 0
    %1657 = vmatpush2.bf16.msra.mxu0 0
    %1658 = vmatprep.mubr.bf16.mxu0 0
    %1659 = vmatmul.mubr.bf16.gmra.mxu0 %v375
    %v1660 = vpop.f32.mrf.mxu0
    %v1661 = vadd.f32 %v1620, %v1660
    %v1662 = vpop.f32.mrf.mxu0
    %v1663 = vadd.f32 %v1622, %v1662
    %v1664 = vpop.f32.mrf.mxu0
    %v1665 = vpop.f32.mrf.mxu0
    %1666 = vdwg.mxu0
    %1667 = vmatprep.subr.bf16.mxu0 %v1086
    %1668 = vmatpush1.bf16.msra.mxu0 %v1085
    %1669 = vmatprep.subr.bf16.mxu0 %v1082
    %1670 = vmatpush1.bf16.msra.mxu0 %v1081
    %1671 = vmatprep.subr.bf16.mxu0 %v1078
    %1672 = vmatpush1.bf16.msra.mxu0 %v1077
    %1673 = vmatprep.subr.bf16.mxu0 %v1074
    %1674 = vmatpush1.bf16.msra.mxu0 %v1073
    %1675 = vmatprep.subr.bf16.mxu0 %v1070
    %1676 = vmatpush1.bf16.msra.mxu0 %v1069
    %1677 = vmatprep.subr.bf16.mxu0 %v1066
    %1678 = vmatpush1.bf16.msra.mxu0 %v1065
    %1679 = vmatprep.subr.bf16.mxu0 %v1062
    %1680 = vmatpush1.bf16.msra.mxu0 %v1061
    %1681 = vmatprep.subr.bf16.mxu0 %v1058
    %1682 = vmatpush1.bf16.msra.mxu0 %v1057
    %1683 = vmatprep.subr.bf16.mxu0 %v1118
    %1684 = vmatpush2.bf16.msra.mxu0 %v1117
    %1685 = vmatprep.subr.bf16.mxu0 %v1114
    %1686 = vmatpush2.bf16.msra.mxu0 %v1113
    %1687 = vmatprep.subr.bf16.mxu0 %v1110
    %1688 = vmatpush2.bf16.msra.mxu0 %v1109
    %1689 = vmatprep.subr.bf16.mxu0 %v1106
    %1690 = vmatpush2.bf16.msra.mxu0 %v1105
    %1691 = vmatprep.subr.bf16.mxu0 %v1102
    %1692 = vmatpush2.bf16.msra.mxu0 %v1101
    %1693 = vmatprep.subr.bf16.mxu0 %v1098
    %1694 = vmatpush2.bf16.msra.mxu0 %v1097
    %1695 = vmatprep.subr.bf16.mxu0 %v1094
    %1696 = vmatpush2.bf16.msra.mxu0 %v1093
    %1697 = vmatprep.subr.bf16.mxu0 %v1090
    %1698 = vmatpush2.bf16.msra.mxu0 %v1089
    %1699 = vmatprep.mubr.bf16.mxu0 %v370
    %1700 = vmatmul.mubr.bf16.gmra.mxu0 %v369
    %v1701 = vpop.f32.mrf.mxu0
    %v1702 = vadd.f32 %v349, %v1701
    %v1703 = vpop.f32.mrf.mxu0
    %v1704 = vadd.f32 %v353, %v1703
    %v1705 = vpop.f32.mrf.mxu0
    %v1706 = vpop.f32.mrf.mxu0
    %1707 = vdwg.mxu0
    %1708 = vmatprep.subr.bf16.mxu0 %v1150
    %1709 = vmatpush1.bf16.msra.mxu0 %v1149
    %1710 = vmatprep.subr.bf16.mxu0 %v1146
    %1711 = vmatpush1.bf16.msra.mxu0 %v1145
    %1712 = vmatprep.subr.bf16.mxu0 %v1142
    %1713 = vmatpush1.bf16.msra.mxu0 %v1141
    %1714 = vmatprep.subr.bf16.mxu0 %v1138
    %1715 = vmatpush1.bf16.msra.mxu0 %v1137
    %1716 = vmatprep.subr.bf16.mxu0 %v1134
    %1717 = vmatpush1.bf16.msra.mxu0 %v1133
    %1718 = vmatprep.subr.bf16.mxu0 %v1130
    %1719 = vmatpush1.bf16.msra.mxu0 %v1129
    %1720 = vmatprep.subr.bf16.mxu0 %v1126
    %1721 = vmatpush1.bf16.msra.mxu0 %v1125
    %1722 = vmatprep.subr.bf16.mxu0 %v1122
    %1723 = vmatpush1.bf16.msra.mxu0 %v1121
    %1724 = vmatprep.subr.bf16.mxu0 %v1182
    %1725 = vmatpush2.bf16.msra.mxu0 %v1181
    %1726 = vmatprep.subr.bf16.mxu0 %v1178
    %1727 = vmatpush2.bf16.msra.mxu0 %v1177
    %1728 = vmatprep.subr.bf16.mxu0 %v1174
    %1729 = vmatpush2.bf16.msra.mxu0 %v1173
    %1730 = vmatprep.subr.bf16.mxu0 %v1170
    %1731 = vmatpush2.bf16.msra.mxu0 %v1169
    %1732 = vmatprep.subr.bf16.mxu0 %v1166
    %1733 = vmatpush2.bf16.msra.mxu0 %v1165
    %1734 = vmatprep.subr.bf16.mxu0 %v1162
    %1735 = vmatpush2.bf16.msra.mxu0 %v1161
    %1736 = vmatprep.subr.bf16.mxu0 %v1158
    %1737 = vmatpush2.bf16.msra.mxu0 %v1157
    %1738 = vmatprep.subr.bf16.mxu0 %v1154
    %1739 = vmatpush2.bf16.msra.mxu0 %v1153
    %1740 = vmatprep.mubr.bf16.mxu0 %v372
    %1741 = vmatmul.mubr.bf16.gmra.mxu0 %v371
    %v1742 = vpop.f32.mrf.mxu0
    %v1743 = vadd.f32 %v1702, %v1742
    %v1744 = vpop.f32.mrf.mxu0
    %v1745 = vadd.f32 %v1704, %v1744
    %v1746 = vpop.f32.mrf.mxu0
    %v1747 = vpop.f32.mrf.mxu0
    %1748 = vdwg.mxu0
    %1749 = vmatprep.subr.bf16.mxu0 %v1214
    %1750 = vmatpush1.bf16.msra.mxu0 %v1213
    %1751 = vmatprep.subr.bf16.mxu0 %v1210
    %1752 = vmatpush1.bf16.msra.mxu0 %v1209
    %1753 = vmatprep.subr.bf16.mxu0 %v1206
    %1754 = vmatpush1.bf16.msra.mxu0 %v1205
    %1755 = vmatprep.subr.bf16.mxu0 %v1202
    %1756 = vmatpush1.bf16.msra.mxu0 %v1201
    %1757 = vmatprep.subr.bf16.mxu0 %v1198
    %1758 = vmatpush1.bf16.msra.mxu0 %v1197
    %1759 = vmatprep.subr.bf16.mxu0 %v1194
    %1760 = vmatpush1.bf16.msra.mxu0 %v1193
    %1761 = vmatprep.subr.bf16.mxu0 %v1190
    %1762 = vmatpush1.bf16.msra.mxu0 %v1189
    %1763 = vmatprep.subr.bf16.mxu0 %v1186
    %1764 = vmatpush1.bf16.msra.mxu0 %v1185
    %1765 = vmatprep.subr.bf16.mxu0 %v1246
    %1766 = vmatpush2.bf16.msra.mxu0 %v1245
    %1767 = vmatprep.subr.bf16.mxu0 %v1242
    %1768 = vmatpush2.bf16.msra.mxu0 %v1241
    %1769 = vmatprep.subr.bf16.mxu0 %v1238
    %1770 = vmatpush2.bf16.msra.mxu0 %v1237
    %1771 = vmatprep.subr.bf16.mxu0 %v1234
    %1772 = vmatpush2.bf16.msra.mxu0 %v1233
    %1773 = vmatprep.subr.bf16.mxu0 %v1230
    %1774 = vmatpush2.bf16.msra.mxu0 %v1229
    %1775 = vmatprep.subr.bf16.mxu0 %v1226
    %1776 = vmatpush2.bf16.msra.mxu0 %v1225
    %1777 = vmatprep.subr.bf16.mxu0 %v1222
    %1778 = vmatpush2.bf16.msra.mxu0 %v1221
    %1779 = vmatprep.subr.bf16.mxu0 %v1218
    %1780 = vmatpush2.bf16.msra.mxu0 %v1217
    %1781 = vmatprep.mubr.bf16.mxu0 %v374
    %1782 = vmatmul.mubr.bf16.gmra.mxu0 %v373
    %v1783 = vpop.f32.mrf.mxu0
    %v1784 = vadd.f32 %v1743, %v1783
    %v1785 = vpop.f32.mrf.mxu0
    %v1786 = vadd.f32 %v1745, %v1785
    %v1787 = vpop.f32.mrf.mxu0
    %v1788 = vpop.f32.mrf.mxu0
    %1789 = vdwg.mxu0
    %1790 = vmatprep.subr.bf16.mxu0 %v1278
    %1791 = vmatpush1.bf16.msra.mxu0 %v1277
    %1792 = vmatprep.subr.bf16.mxu0 %v1274
    %1793 = vmatpush1.bf16.msra.mxu0 %v1273
    %1794 = vmatprep.subr.bf16.mxu0 %v1270
    %1795 = vmatpush1.bf16.msra.mxu0 %v1269
    %1796 = vmatprep.subr.bf16.mxu0 %v1266
    %1797 = vmatpush1.bf16.msra.mxu0 %v1265
    %1798 = vmatprep.subr.bf16.mxu0 %v1262
    %1799 = vmatpush1.bf16.msra.mxu0 %v1261
    %1800 = vmatprep.subr.bf16.mxu0 %v1258
    %1801 = vmatpush1.bf16.msra.mxu0 %v1257
    %1802 = vmatprep.subr.bf16.mxu0 %v1254
    %1803 = vmatpush1.bf16.msra.mxu0 %v1253
    %1804 = vmatprep.subr.bf16.mxu0 %v1250
    %1805 = vmatpush1.bf16.msra.mxu0 %v1249
    %1806 = vmatprep.subr.bf16.mxu0 0
    %1807 = vmatpush2.bf16.msra.mxu0 0
    %1808 = vmatprep.subr.bf16.mxu0 0
    %1809 = vmatpush2.bf16.msra.mxu0 0
    %1810 = vmatprep.subr.bf16.mxu0 0
    %1811 = vmatpush2.bf16.msra.mxu0 0
    %1812 = vmatprep.subr.bf16.mxu0 0
    %1813 = vmatpush2.bf16.msra.mxu0 0
    %1814 = vmatprep.subr.bf16.mxu0 0
    %1815 = vmatpush2.bf16.msra.mxu0 0
    %1816 = vmatprep.subr.bf16.mxu0 0
    %1817 = vmatpush2.bf16.msra.mxu0 0
    %1818 = vmatprep.subr.bf16.mxu0 0
    %1819 = vmatpush2.bf16.msra.mxu0 0
    %1820 = vmatprep.subr.bf16.mxu0 0
    %1821 = vmatpush2.bf16.msra.mxu0 0
    %1822 = vmatprep.mubr.bf16.mxu0 0
    %1823 = vmatmul.mubr.bf16.gmra.mxu0 %v375
    %v1824 = vpop.f32.mrf.mxu0
    %v1825 = vadd.f32 %v1784, %v1824
    %v1826 = vpop.f32.mrf.mxu0
    %v1827 = vadd.f32 %v1786, %v1826
    %v1828 = vpop.f32.mrf.mxu0
    %v1829 = vpop.f32.mrf.mxu0
    %1830 = vdwg.mxu0
    %v1831 = vmax.f32 %v1661, 0.0
    %v1832 = vmax.f32 %v1663, 0.0
    %v1833 = vmax.f32 %v1825, 0.0
    %v1834 = vmax.f32 %v1827, 0.0
    %v1835 = vpack.c.bf16 %v1831, %v1831
    %v1836 = vpack.c.bf16 %v1832, %v1832
    %v1837 = vpack.c.bf16 %v1833, %v1833
    %v1838 = vpack.c.bf16 %v1834, %v1834
    %v1839 = vld [vmem:[#allocation6] sm:$0xff]
    %v1840 = vld [vmem:[#allocation6 + $0x8] sm:$0xff]
    %v1841 = vld [vmem:[#allocation6 + $0x10] sm:$0xff]
    %v1842 = vld [vmem:[#allocation6 + $0x18] sm:$0xff]
    %v1843 = vld [vmem:[#allocation6 + $0x20] sm:$0xff]
    %v1844 = vld [vmem:[#allocation6 + $0x28] sm:$0xff]
    %v1845 = vld [vmem:[#allocation6 + $0x30] sm:$0xff]
    %v1846 = vld [vmem:[#allocation6 + $0x38] sm:$0xff]
    %v1847 = vld [vmem:[#allocation6 + $0x40] sm:$0xff]
    %v1848 = vld [vmem:[#allocation6 + $0x48] sm:$0xff]
    %v1849 = vld [vmem:[#allocation6 + $0x50] sm:$0xff]
    %v1850 = vld [vmem:[#allocation6 + $0x58] sm:$0xff]
    %v1851 = vld [vmem:[#allocation6 + $0x60] sm:$0xff]
    %v1852 = vld [vmem:[#allocation6 + $0x68] sm:$0xff]
    %v1853 = vld [vmem:[#allocation6 + $0x70] sm:$0xff]
    %v1854 = vld [vmem:[#allocation6 + $0x78] sm:$0xff]
    %v1855 = vld [vmem:[#allocation6 + $0x80] sm:$0xff]
    %v1856 = vld [vmem:[#allocation6 + $0x88] sm:$0xff]
    %v1857 = vld [vmem:[#allocation6 + $0x90] sm:$0xff]
    %v1858 = vld [vmem:[#allocation6 + $0x98] sm:$0xff]
    %v1859 = vld [vmem:[#allocation6 + $0xa0] sm:$0xff]
    %v1860 = vld [vmem:[#allocation6 + $0xa8] sm:$0xff]
    %v1861 = vld [vmem:[#allocation6 + $0xb0] sm:$0xff]
    %v1862 = vld [vmem:[#allocation6 + $0xb8] sm:$0xff]
    %v1863 = vld [vmem:[#allocation6 + $0xc0] sm:$0xff]
    %v1864 = vld [vmem:[#allocation6 + $0xc8] sm:$0xff]
    %v1865 = vld [vmem:[#allocation6 + $0xd0] sm:$0xff]
    %v1866 = vld [vmem:[#allocation6 + $0xd8] sm:$0xff]
    %v1867 = vld [vmem:[#allocation6 + $0xe0] sm:$0xff]
    %v1868 = vld [vmem:[#allocation6 + $0xe8] sm:$0xff]
    %v1869 = vld [vmem:[#allocation6 + $0xf0] sm:$0xff]
    %v1870 = vld [vmem:[#allocation6 + $0xf8] sm:$0xff]
    %v1871 = vld [vmem:[#allocation6 + $0x100] sm:$0xff]
    %v1872 = vld [vmem:[#allocation6 + $0x108] sm:$0xff]
    %v1873 = vld [vmem:[#allocation6 + $0x110] sm:$0xff]
    %v1874 = vld [vmem:[#allocation6 + $0x118] sm:$0xff]
    %v1875 = vld [vmem:[#allocation6 + $0x120] sm:$0xff]
    %v1876 = vld [vmem:[#allocation6 + $0x128] sm:$0xff]
    %v1877 = vld [vmem:[#allocation6 + $0x130] sm:$0xff]
    %v1878 = vld [vmem:[#allocation6 + $0x138] sm:$0xff]
    %v1879 = vld [vmem:[#allocation6 + $0x140] sm:$0xff]
    %v1880 = vld [vmem:[#allocation6 + $0x148] sm:$0xff]
    %v1881 = vld [vmem:[#allocation6 + $0x150] sm:$0xff]
    %v1882 = vld [vmem:[#allocation6 + $0x158] sm:$0xff]
    %v1883 = vld [vmem:[#allocation6 + $0x160] sm:$0xff]
    %v1884 = vld [vmem:[#allocation6 + $0x168] sm:$0xff]
    %v1885 = vld [vmem:[#allocation6 + $0x170] sm:$0xff]
    %v1886 = vld [vmem:[#allocation6 + $0x178] sm:$0xff]
    %v1887 = vld [vmem:[#allocation6 + $0x180] sm:$0xff]
    %v1888 = vld [vmem:[#allocation6 + $0x188] sm:$0xff]
    %v1889 = vld [vmem:[#allocation6 + $0x190] sm:$0xff]
    %v1890 = vld [vmem:[#allocation6 + $0x198] sm:$0xff]
    %v1891 = vld [vmem:[#allocation6 + $0x1a0] sm:$0xff]
    %v1892 = vld [vmem:[#allocation6 + $0x1a8] sm:$0xff]
    %v1893 = vld [vmem:[#allocation6 + $0x1b0] sm:$0xff]
    %v1894 = vld [vmem:[#allocation6 + $0x1b8] sm:$0xff]
    %v1895 = vld [vmem:[#allocation6 + $0x1c0] sm:$0xff]
    %v1896 = vld [vmem:[#allocation6 + $0x1c8] sm:$0xff]
    %v1897 = vld [vmem:[#allocation6 + $0x1d0] sm:$0xff]
    %v1898 = vld [vmem:[#allocation6 + $0x1d8] sm:$0xff]
    %v1899 = vld [vmem:[#allocation6 + $0x1e0] sm:$0xff]
    %v1900 = vld [vmem:[#allocation6 + $0x1e8] sm:$0xff]
    %v1901 = vld [vmem:[#allocation6 + $0x1f0] sm:$0xff]
    %v1902 = vld [vmem:[#allocation6 + $0x1f8] sm:$0xff]
    %v1903 = vld [vmem:[%s5] sm:$0x3]
    %v1905 = vlaneseq
    %v1906 = vshrl.u32 %v1905, 7
    %v1907 = vsub.s32 0, %v1906
    %v1908 = vrot.slane %v1903, %v1907
    %v1909 = vlaneseq
    %v1910 = vshrl.u32 %v1909, 7
    %v1911 = vsub.s32 1, %v1910
    %v1912 = vrot.slane %v1903, %v1911
    %v1979 = vunpack.c.l.b16 %v1839
    %v1980 = vunpack.c.h.b16 %v1839
    %v1981 = vunpack.c.l.b16 %v1840
    %v1982 = vunpack.c.h.b16 %v1840
    %v1983 = vunpack.c.l.b16 %v1841
    %v1984 = vunpack.c.h.b16 %v1841
    %v1985 = vunpack.c.l.b16 %v1842
    %v1986 = vunpack.c.h.b16 %v1842
    %v1987 = vunpack.c.l.b16 %v1843
    %v1988 = vunpack.c.h.b16 %v1843
    %v1989 = vunpack.c.l.b16 %v1844
    %v1990 = vunpack.c.h.b16 %v1844
    %v1991 = vunpack.c.l.b16 %v1845
    %v1992 = vunpack.c.h.b16 %v1845
    %v1993 = vunpack.c.l.b16 %v1846
    %v1994 = vunpack.c.h.b16 %v1846
    %v1995 = vunpack.c.l.b16 %v1847
    %v1996 = vunpack.c.h.b16 %v1847
    %v1997 = vunpack.c.l.b16 %v1848
    %v1998 = vunpack.c.h.b16 %v1848
    %v1999 = vunpack.c.l.b16 %v1849
    %v2000 = vunpack.c.h.b16 %v1849
    %v2001 = vunpack.c.l.b16 %v1850
    %v2002 = vunpack.c.h.b16 %v1850
    %v2003 = vunpack.c.l.b16 %v1851
    %v2004 = vunpack.c.h.b16 %v1851
    %v2005 = vunpack.c.l.b16 %v1852
    %v2006 = vunpack.c.h.b16 %v1852
    %v2007 = vunpack.c.l.b16 %v1853
    %v2008 = vunpack.c.h.b16 %v1853
    %v2009 = vunpack.c.l.b16 %v1854
    %v2010 = vunpack.c.h.b16 %v1854
    %v2011 = vunpack.c.l.b16 %v1855
    %v2012 = vunpack.c.h.b16 %v1855
    %v2013 = vunpack.c.l.b16 %v1856
    %v2014 = vunpack.c.h.b16 %v1856
    %v2015 = vunpack.c.l.b16 %v1857
    %v2016 = vunpack.c.h.b16 %v1857
    %v2017 = vunpack.c.l.b16 %v1858
    %v2018 = vunpack.c.h.b16 %v1858
    %v2019 = vunpack.c.l.b16 %v1859
    %v2020 = vunpack.c.h.b16 %v1859
    %v2021 = vunpack.c.l.b16 %v1860
    %v2022 = vunpack.c.h.b16 %v1860
    %v2023 = vunpack.c.l.b16 %v1861
    %v2024 = vunpack.c.h.b16 %v1861
    %v2025 = vunpack.c.l.b16 %v1862
    %v2026 = vunpack.c.h.b16 %v1862
    %v2027 = vunpack.c.l.b16 %v1863
    %v2028 = vunpack.c.h.b16 %v1863
    %v2029 = vunpack.c.l.b16 %v1864
    %v2030 = vunpack.c.h.b16 %v1864
    %v2031 = vunpack.c.l.b16 %v1865
    %v2032 = vunpack.c.h.b16 %v1865
    %v2033 = vunpack.c.l.b16 %v1866
    %v2034 = vunpack.c.h.b16 %v1866
    %v2035 = vunpack.c.l.b16 %v1867
    %v2036 = vunpack.c.h.b16 %v1867
    %v2037 = vunpack.c.l.b16 %v1868
    %v2038 = vunpack.c.h.b16 %v1868
    %v2039 = vunpack.c.l.b16 %v1869
    %v2040 = vunpack.c.h.b16 %v1869
    %v2041 = vunpack.c.l.b16 %v1870
    %v2042 = vunpack.c.h.b16 %v1870
    %v2043 = vunpack.c.l.b16 %v1871
    %v2044 = vunpack.c.h.b16 %v1871
    %v2045 = vunpack.c.l.b16 %v1872
    %v2046 = vunpack.c.h.b16 %v1872
    %v2047 = vunpack.c.l.b16 %v1873
    %v2048 = vunpack.c.h.b16 %v1873
    %v2049 = vunpack.c.l.b16 %v1874
    %v2050 = vunpack.c.h.b16 %v1874
    %v2051 = vunpack.c.l.b16 %v1875
    %v2052 = vunpack.c.h.b16 %v1875
    %v2053 = vunpack.c.l.b16 %v1876
    %v2054 = vunpack.c.h.b16 %v1876
    %v2055 = vunpack.c.l.b16 %v1877
    %v2056 = vunpack.c.h.b16 %v1877
    %v2057 = vunpack.c.l.b16 %v1878
    %v2058 = vunpack.c.h.b16 %v1878
    %v2059 = vunpack.c.l.b16 %v1879
    %v2060 = vunpack.c.h.b16 %v1879
    %v2061 = vunpack.c.l.b16 %v1880
    %v2062 = vunpack.c.h.b16 %v1880
    %v2063 = vunpack.c.l.b16 %v1881
    %v2064 = vunpack.c.h.b16 %v1881
    %v2065 = vunpack.c.l.b16 %v1882
    %v2066 = vunpack.c.h.b16 %v1882
    %v2067 = vunpack.c.l.b16 %v1883
    %v2068 = vunpack.c.h.b16 %v1883
    %v2069 = vunpack.c.l.b16 %v1884
    %v2070 = vunpack.c.h.b16 %v1884
    %v2071 = vunpack.c.l.b16 %v1885
    %v2072 = vunpack.c.h.b16 %v1885
    %v2073 = vunpack.c.l.b16 %v1886
    %v2074 = vunpack.c.h.b16 %v1886
    %v2075 = vunpack.c.l.b16 %v1887
    %v2076 = vunpack.c.h.b16 %v1887
    %v2077 = vunpack.c.l.b16 %v1888
    %v2078 = vunpack.c.h.b16 %v1888
    %v2079 = vunpack.c.l.b16 %v1889
    %v2080 = vunpack.c.h.b16 %v1889
    %v2081 = vunpack.c.l.b16 %v1890
    %v2082 = vunpack.c.h.b16 %v1890
    %v2083 = vunpack.c.l.b16 %v1891
    %v2084 = vunpack.c.h.b16 %v1891
    %v2085 = vunpack.c.l.b16 %v1892
    %v2086 = vunpack.c.h.b16 %v1892
    %v2087 = vunpack.c.l.b16 %v1893
    %v2088 = vunpack.c.h.b16 %v1893
    %v2089 = vunpack.c.l.b16 %v1894
    %v2090 = vunpack.c.h.b16 %v1894
    %v2091 = vunpack.c.l.b16 %v1895
    %v2092 = vunpack.c.h.b16 %v1895
    %v2093 = vunpack.c.l.b16 %v1896
    %v2094 = vunpack.c.h.b16 %v1896
    %v2095 = vunpack.c.l.b16 %v1897
    %v2096 = vunpack.c.h.b16 %v1897
    %v2097 = vunpack.c.l.b16 %v1898
    %v2098 = vunpack.c.h.b16 %v1898
    %v2099 = vunpack.c.l.b16 %v1899
    %v2100 = vunpack.c.h.b16 %v1899
    %v2101 = vunpack.c.l.b16 %v1900
    %v2102 = vunpack.c.h.b16 %v1900
    %v2103 = vunpack.c.l.b16 %v1901
    %v2104 = vunpack.c.h.b16 %v1901
    %v2105 = vunpack.c.l.b16 %v1902
    %v2106 = vunpack.c.h.b16 %v1902
    %v2107 = vpack.c.b16 %v1981, %v1979
    %v2108 = vpack.c.b16 %v1982, %v1980
    %v2109 = vpack.c.b16 %v1985, %v1983
    %v2110 = vpack.c.b16 %v1986, %v1984
    %v2111 = vpack.c.b16 %v1989, %v1987
    %v2112 = vpack.c.b16 %v1990, %v1988
    %v2113 = vpack.c.b16 %v1993, %v1991
    %v2114 = vpack.c.b16 %v1994, %v1992
    %v2115 = vpack.c.b16 %v1997, %v1995
    %v2116 = vpack.c.b16 %v1998, %v1996
    %v2117 = vpack.c.b16 %v2001, %v1999
    %v2118 = vpack.c.b16 %v2002, %v2000
    %v2119 = vpack.c.b16 %v2005, %v2003
    %v2120 = vpack.c.b16 %v2006, %v2004
    %v2121 = vpack.c.b16 %v2009, %v2007
    %v2122 = vpack.c.b16 %v2010, %v2008
    %v2123 = vpack.c.b16 %v2013, %v2011
    %v2124 = vpack.c.b16 %v2014, %v2012
    %v2125 = vpack.c.b16 %v2017, %v2015
    %v2126 = vpack.c.b16 %v2018, %v2016
    %v2127 = vpack.c.b16 %v2021, %v2019
    %v2128 = vpack.c.b16 %v2022, %v2020
    %v2129 = vpack.c.b16 %v2025, %v2023
    %v2130 = vpack.c.b16 %v2026, %v2024
    %v2131 = vpack.c.b16 %v2029, %v2027
    %v2132 = vpack.c.b16 %v2030, %v2028
    %v2133 = vpack.c.b16 %v2033, %v2031
    %v2134 = vpack.c.b16 %v2034, %v2032
    %v2135 = vpack.c.b16 %v2037, %v2035
    %v2136 = vpack.c.b16 %v2038, %v2036
    %v2137 = vpack.c.b16 %v2041, %v2039
    %v2138 = vpack.c.b16 %v2042, %v2040
    %v2139 = vpack.c.b16 %v2045, %v2043
    %v2140 = vpack.c.b16 %v2046, %v2044
    %v2141 = vpack.c.b16 %v2049, %v2047
    %v2142 = vpack.c.b16 %v2050, %v2048
    %v2143 = vpack.c.b16 %v2053, %v2051
    %v2144 = vpack.c.b16 %v2054, %v2052
    %v2145 = vpack.c.b16 %v2057, %v2055
    %v2146 = vpack.c.b16 %v2058, %v2056
    %v2147 = vpack.c.b16 %v2061, %v2059
    %v2148 = vpack.c.b16 %v2062, %v2060
    %v2149 = vpack.c.b16 %v2065, %v2063
    %v2150 = vpack.c.b16 %v2066, %v2064
    %v2151 = vpack.c.b16 %v2069, %v2067
    %v2152 = vpack.c.b16 %v2070, %v2068
    %v2153 = vpack.c.b16 %v2073, %v2071
    %v2154 = vpack.c.b16 %v2074, %v2072
    %v2155 = vpack.c.b16 %v2077, %v2075
    %v2156 = vpack.c.b16 %v2078, %v2076
    %v2157 = vpack.c.b16 %v2081, %v2079
    %v2158 = vpack.c.b16 %v2082, %v2080
    %v2159 = vpack.c.b16 %v2085, %v2083
    %v2160 = vpack.c.b16 %v2086, %v2084
    %v2161 = vpack.c.b16 %v2089, %v2087
    %v2162 = vpack.c.b16 %v2090, %v2088
    %v2163 = vpack.c.b16 %v2093, %v2091
    %v2164 = vpack.c.b16 %v2094, %v2092
    %v2165 = vpack.c.b16 %v2097, %v2095
    %v2166 = vpack.c.b16 %v2098, %v2096
    %v2167 = vpack.c.b16 %v2101, %v2099
    %v2168 = vpack.c.b16 %v2102, %v2100
    %v2169 = vpack.c.b16 %v2105, %v2103
    %v2170 = vpack.c.b16 %v2106, %v2104
    %2235 = vmatprep.subr.bf16.mxu0 %v2122
    %2236 = vmatpush1.bf16.msra.mxu0 %v2121
    %2237 = vmatprep.subr.bf16.mxu0 %v2120
    %2238 = vmatpush1.bf16.msra.mxu0 %v2119
    %2239 = vmatprep.subr.bf16.mxu0 %v2118
    %2240 = vmatpush1.bf16.msra.mxu0 %v2117
    %2241 = vmatprep.subr.bf16.mxu0 %v2116
    %2242 = vmatpush1.bf16.msra.mxu0 %v2115
    %2243 = vmatprep.subr.bf16.mxu0 %v2114
    %2244 = vmatpush1.bf16.msra.mxu0 %v2113
    %2245 = vmatprep.subr.bf16.mxu0 %v2112
    %2246 = vmatpush1.bf16.msra.mxu0 %v2111
    %2247 = vmatprep.subr.bf16.mxu0 %v2110
    %2248 = vmatpush1.bf16.msra.mxu0 %v2109
    %2249 = vmatprep.subr.bf16.mxu0 %v2108
    %2250 = vmatpush1.bf16.msra.mxu0 %v2107
    %2251 = vmatprep.subr.bf16.mxu0 %v2138
    %2252 = vmatpush2.bf16.msra.mxu0 %v2137
    %2253 = vmatprep.subr.bf16.mxu0 %v2136
    %2254 = vmatpush2.bf16.msra.mxu0 %v2135
    %2255 = vmatprep.subr.bf16.mxu0 %v2134
    %2256 = vmatpush2.bf16.msra.mxu0 %v2133
    %2257 = vmatprep.subr.bf16.mxu0 %v2132
    %2258 = vmatpush2.bf16.msra.mxu0 %v2131
    %2259 = vmatprep.subr.bf16.mxu0 %v2130
    %2260 = vmatpush2.bf16.msra.mxu0 %v2129
    %2261 = vmatprep.subr.bf16.mxu0 %v2128
    %2262 = vmatpush2.bf16.msra.mxu0 %v2127
    %2263 = vmatprep.subr.bf16.mxu0 %v2126
    %2264 = vmatpush2.bf16.msra.mxu0 %v2125
    %2265 = vmatprep.subr.bf16.mxu0 %v2124
    %2266 = vmatpush2.bf16.msra.mxu0 %v2123
    %2267 = vmatprep.mubr.bf16.mxu0 %v1836
    %2268 = vmatmul.mubr.bf16.gmra.mxu0 %v1835
    %v2269 = vpop.f32.mrf.mxu0
    %v2270 = vadd.f32 %v1908, %v2269
    %v2271 = vpop.f32.mrf.mxu0
    %v2272 = vadd.f32 %v1912, %v2271
    %v2273 = vpop.f32.mrf.mxu0
    %v2274 = vpop.f32.mrf.mxu0
    %2275 = vdwg.mxu0
    %2276 = vmatprep.subr.bf16.mxu0 %v2154
    %2277 = vmatpush1.bf16.msra.mxu0 %v2153
    %2278 = vmatprep.subr.bf16.mxu0 %v2152
    %2279 = vmatpush1.bf16.msra.mxu0 %v2151
    %2280 = vmatprep.subr.bf16.mxu0 %v2150
    %2281 = vmatpush1.bf16.msra.mxu0 %v2149
    %2282 = vmatprep.subr.bf16.mxu0 %v2148
    %2283 = vmatpush1.bf16.msra.mxu0 %v2147
    %2284 = vmatprep.subr.bf16.mxu0 %v2146
    %2285 = vmatpush1.bf16.msra.mxu0 %v2145
    %2286 = vmatprep.subr.bf16.mxu0 %v2144
    %2287 = vmatpush1.bf16.msra.mxu0 %v2143
    %2288 = vmatprep.subr.bf16.mxu0 %v2142
    %2289 = vmatpush1.bf16.msra.mxu0 %v2141
    %2290 = vmatprep.subr.bf16.mxu0 %v2140
    %2291 = vmatpush1.bf16.msra.mxu0 %v2139
    %2292 = vmatprep.subr.bf16.mxu0 %v2170
    %2293 = vmatpush2.bf16.msra.mxu0 %v2169
    %2294 = vmatprep.subr.bf16.mxu0 %v2168
    %2295 = vmatpush2.bf16.msra.mxu0 %v2167
    %2296 = vmatprep.subr.bf16.mxu0 %v2166
    %2297 = vmatpush2.bf16.msra.mxu0 %v2165
    %2298 = vmatprep.subr.bf16.mxu0 %v2164
    %2299 = vmatpush2.bf16.msra.mxu0 %v2163
    %2300 = vmatprep.subr.bf16.mxu0 %v2162
    %2301 = vmatpush2.bf16.msra.mxu0 %v2161
    %2302 = vmatprep.subr.bf16.mxu0 %v2160
    %2303 = vmatpush2.bf16.msra.mxu0 %v2159
    %2304 = vmatprep.subr.bf16.mxu0 %v2158
    %2305 = vmatpush2.bf16.msra.mxu0 %v2157
    %2306 = vmatprep.subr.bf16.mxu0 %v2156
    %2307 = vmatpush2.bf16.msra.mxu0 %v2155
    %2308 = vmatprep.mubr.bf16.mxu0 %v1838
    %2309 = vmatmul.mubr.bf16.gmra.mxu0 %v1837
    %v2310 = vpop.f32.mrf.mxu0
    %v2311 = vadd.f32 %v2270, %v2310
    %v2312 = vpop.f32.mrf.mxu0
    %v2313 = vadd.f32 %v2272, %v2312
    %v2314 = vpop.f32.mrf.mxu0
    %v2315 = vpop.f32.mrf.mxu0
    %2316 = vdwg.mxu0
    %v2317 = vmax.f32 %v2311, 0.0
    %v2318 = vmax.f32 %v2313, 0.0
    %v2319 = vpack.c.bf16 %v2317, %v2317
    %v2320 = vpack.c.bf16 %v2318, %v2318
    %v2321 = vld [vmem:[%s6] sm:$0xf]
    %v2322 = vld [vmem:[%s6 + $0x4] sm:$0xf]
    %v2323 = vld [vmem:[%s6 + $0x8] sm:$0xf]
    %v2324 = vld [vmem:[%s6 + $0xc] sm:$0xf]
    %v2325 = vld [vmem:[%s6 + $0x10] sm:$0xf]
    %v2326 = vld [vmem:[%s6 + $0x14] sm:$0xf]
    %v2327 = vld [vmem:[%s6 + $0x18] sm:$0xf]
    %v2328 = vld [vmem:[%s6 + $0x1c] sm:$0xf]
    %v2329 = vld [vmem:[%s6 + $0x20] sm:$0xf]
    %v2330 = vld [vmem:[%s6 + $0x24] sm:$0xf]
    %v2331 = vld [vmem:[%s6 + $0x28] sm:$0xf]
    %v2332 = vld [vmem:[%s6 + $0x2c] sm:$0xf]
    %v2333 = vld [vmem:[%s6 + $0x30] sm:$0xf]
    %v2334 = vld [vmem:[%s6 + $0x34] sm:$0xf]
    %v2335 = vld [vmem:[%s6 + $0x38] sm:$0xf]
    %v2336 = vld [vmem:[%s6 + $0x3c] sm:$0xf]
    %v2337 = vld [vmem:[%s6 + $0x40] sm:$0xf]
    %v2338 = vld [vmem:[%s6 + $0x44] sm:$0xf]
    %v2339 = vld [vmem:[%s6 + $0x48] sm:$0xf]
    %v2340 = vld [vmem:[%s6 + $0x4c] sm:$0xf]
    %v2341 = vld [vmem:[%s6 + $0x50] sm:$0xf]
    %v2342 = vld [vmem:[%s6 + $0x54] sm:$0xf]
    %v2343 = vld [vmem:[%s6 + $0x58] sm:$0xf]
    %v2344 = vld [vmem:[%s6 + $0x5c] sm:$0xf]
    %v2345 = vld [vmem:[%s6 + $0x60] sm:$0xf]
    %v2346 = vld [vmem:[%s6 + $0x64] sm:$0xf]
    %v2347 = vld [vmem:[%s6 + $0x68] sm:$0xf]
    %v2348 = vld [vmem:[%s6 + $0x6c] sm:$0xf]
    %v2349 = vld [vmem:[%s6 + $0x70] sm:$0xf]
    %v2350 = vld [vmem:[%s6 + $0x74] sm:$0xf]
    %v2351 = vld [vmem:[%s6 + $0x78] sm:$0xf]
    %v2352 = vld [vmem:[%s6 + $0x7c] sm:$0xf]
    %v2353 = vld [vmem:[%s7] sm:$0x1]
    %v2355 = vlaneseq
    %v2356 = vshrl.u32 %v2355, 7
    %v2357 = vsub.s32 0, %v2356
    %v2358 = vrot.slane %v2353, %v2357
    %v2392 = vunpack.c.l.b16 %v2321
    %v2393 = vunpack.c.l.b16 %v2322
    %v2394 = vunpack.c.l.b16 %v2323
    %v2395 = vunpack.c.l.b16 %v2324
    %v2396 = vunpack.c.l.b16 %v2325
    %v2397 = vunpack.c.l.b16 %v2326
    %v2398 = vunpack.c.l.b16 %v2327
    %v2399 = vunpack.c.l.b16 %v2328
    %v2400 = vunpack.c.l.b16 %v2329
    %v2401 = vunpack.c.l.b16 %v2330
    %v2402 = vunpack.c.l.b16 %v2331
    %v2403 = vunpack.c.l.b16 %v2332
    %v2404 = vunpack.c.l.b16 %v2333
    %v2405 = vunpack.c.l.b16 %v2334
    %v2406 = vunpack.c.l.b16 %v2335
    %v2407 = vunpack.c.l.b16 %v2336
    %v2408 = vunpack.c.l.b16 %v2337
    %v2409 = vunpack.c.l.b16 %v2338
    %v2410 = vunpack.c.l.b16 %v2339
    %v2411 = vunpack.c.l.b16 %v2340
    %v2412 = vunpack.c.l.b16 %v2341
    %v2413 = vunpack.c.l.b16 %v2342
    %v2414 = vunpack.c.l.b16 %v2343
    %v2415 = vunpack.c.l.b16 %v2344
    %v2416 = vunpack.c.l.b16 %v2345
    %v2417 = vunpack.c.l.b16 %v2346
    %v2418 = vunpack.c.l.b16 %v2347
    %v2419 = vunpack.c.l.b16 %v2348
    %v2420 = vunpack.c.l.b16 %v2349
    %v2421 = vunpack.c.l.b16 %v2350
    %v2422 = vunpack.c.l.b16 %v2351
    %v2423 = vunpack.c.l.b16 %v2352
    %v2424 = vpack.c.b16 %v2393, %v2392
    %v2425 = vpack.c.b16 %v2395, %v2394
    %v2426 = vpack.c.b16 %v2397, %v2396
    %v2427 = vpack.c.b16 %v2399, %v2398
    %v2428 = vpack.c.b16 %v2401, %v2400
    %v2429 = vpack.c.b16 %v2403, %v2402
    %v2430 = vpack.c.b16 %v2405, %v2404
    %v2431 = vpack.c.b16 %v2407, %v2406
    %v2432 = vpack.c.b16 %v2409, %v2408
    %v2433 = vpack.c.b16 %v2411, %v2410
    %v2434 = vpack.c.b16 %v2413, %v2412
    %v2435 = vpack.c.b16 %v2415, %v2414
    %v2436 = vpack.c.b16 %v2417, %v2416
    %v2437 = vpack.c.b16 %v2419, %v2418
    %v2438 = vpack.c.b16 %v2421, %v2420
    %v2439 = vpack.c.b16 %v2423, %v2422
    %2456 = vmatprep.subr.bf16.mxu0 0
    %2457 = vmatpush1.bf16.msra.mxu0 %v2431
    %2458 = vmatprep.subr.bf16.mxu0 0
    %2459 = vmatpush1.bf16.msra.mxu0 %v2430
    %2460 = vmatprep.subr.bf16.mxu0 0
    %2461 = vmatpush1.bf16.msra.mxu0 %v2429
    %2462 = vmatprep.subr.bf16.mxu0 0
    %2463 = vmatpush1.bf16.msra.mxu0 %v2428
    %2464 = vmatprep.subr.bf16.mxu0 0
    %2465 = vmatpush1.bf16.msra.mxu0 %v2427
    %2466 = vmatprep.subr.bf16.mxu0 0
    %2467 = vmatpush1.bf16.msra.mxu0 %v2426
    %2468 = vmatprep.subr.bf16.mxu0 0
    %2469 = vmatpush1.bf16.msra.mxu0 %v2425
    %2470 = vmatprep.subr.bf16.mxu0 0
    %2471 = vmatpush1.bf16.msra.mxu0 %v2424
    %2472 = vmatprep.subr.bf16.mxu0 0
    %2473 = vmatpush2.bf16.msra.mxu0 %v2439
    %2474 = vmatprep.subr.bf16.mxu0 0
    %2475 = vmatpush2.bf16.msra.mxu0 %v2438
    %2476 = vmatprep.subr.bf16.mxu0 0
    %2477 = vmatpush2.bf16.msra.mxu0 %v2437
    %2478 = vmatprep.subr.bf16.mxu0 0
    %2479 = vmatpush2.bf16.msra.mxu0 %v2436
    %2480 = vmatprep.subr.bf16.mxu0 0
    %2481 = vmatpush2.bf16.msra.mxu0 %v2435
    %2482 = vmatprep.subr.bf16.mxu0 0
    %2483 = vmatpush2.bf16.msra.mxu0 %v2434
    %2484 = vmatprep.subr.bf16.mxu0 0
    %2485 = vmatpush2.bf16.msra.mxu0 %v2433
    %2486 = vmatprep.subr.bf16.mxu0 0
    %2487 = vmatpush2.bf16.msra.mxu0 %v2432
    %2488 = vmatprep.mubr.bf16.mxu0 %v2320
    %2489 = vmatmul.mubr.bf16.gmra.mxu0 %v2319
    %v2490 = vpop.f32.mrf.mxu0
    %v2491 = vadd.f32 %v2358, %v2490
    %v2492 = vpop.f32.mrf.mxu0
    %v2493 = vpop.f32.mrf.mxu0
    %v2494 = vpop.f32.mrf.mxu0
    %2495 = vdwg.mxu0
    %v2496 = vld [vmem:[%s1] sm:$0xff]
    %v2497 = vadd.f32 %v2491, %v2496
    %v2498 = vlaneseq
    %v2499 = vand.u32 %v2498, 127
    %v2500 = vcvt.s32.f32 %v2499
    %vm2501 = vcmp.ge.s32.totalorder %v2499, 0
    %vm2502 = vcmp.lt.s32.totalorder %v2499, 10
    %vm2503 = vmand %vm2501, %vm2502
    %v2504 = vsel %vm2503, %v2491, -inf
    %vm2505 = vcmask 162816
    %v2506 = vsel %vm2505, %v2504, -inf
    %2507 = vmax.xlane.f32.xlu0 %v2506
    %v2508 = vpop.xlane.xlu0 %2507
    %v2509 = vsel %vm2503, %v2497, -inf
    %v2510 = vsel %vm2505, %v2509, -inf
    %2511 = vmax.xlane.f32.xlu0 %v2510
    %v2512 = vpop.xlane.xlu0 %2511
    %v2513 = vsel %vm2503, %v2508, -inf
    %v2514 = vsel %vm2503, %v2512, -inf
    %vm2515 = vcmp.ge.s32.totalorder %v2499, 10
    %vm2516 = vcmp.lt.s32.totalorder %v2499, 20
    %vm2517 = vmand %vm2515, %vm2516
    %v2518 = vsel %vm2517, %v2491, -inf
    %v2519 = vsel %vm2505, %v2518, -inf
    %2520 = vmax.xlane.f32.xlu0 %v2519
    %v2521 = vpop.xlane.xlu0 %2520
    %v2522 = vsel %vm2517, %v2497, -inf
    %v2523 = vsel %vm2505, %v2522, -inf
    %2524 = vmax.xlane.f32.xlu0 %v2523
    %v2525 = vpop.xlane.xlu0 %2524
    %v2526 = vsel %vm2517, %v2521, %v2513
    %v2527 = vsel %vm2517, %v2525, %v2514
    %v2528 = vsub.f32 %v2491, %v2526
    %v2529 = vmul.f32 %v2528, 1.442695
    %v2530 = vpow.pop %v2529
    %v2531 = vsel %vm2503, %v2530, 0.0
    %v2532 = vsel %vm2505, %v2531, 0.0
    %2533 = vadd.xlane.f32.xlu0 %v2532
    %v2534 = vpop.xlane.xlu0 %2533
    %vm2535 = vcmp.ge.f32.partialorder %v2497, %v2527
    %vm2536 = vmand %vm2503, %vm2535
    %v2537 = vsel %vm2536, %v2500, 20.0
    %v2538 = vsel %vm2505, %v2537, inf
    %2539 = vmin.xlane.f32.xlu0 %v2538
    %v2540 = vpop.xlane.xlu0 %2539
    %v2541 = vsel %vm2503, %v2534, 1.0
    %v2542 = vsel %vm2503, %v2540, 0.0
    %v2543 = vsel %vm2517, %v2530, 0.0
    %v2544 = vsel %vm2505, %v2543, 0.0
    %2545 = vadd.xlane.f32.xlu0 %v2544
    %v2546 = vpop.xlane.xlu0 %2545
    %vm2547 = vmand %vm2517, %vm2535
    %v2548 = vsel %vm2547, %v2500, 20.0
    %v2549 = vsel %vm2505, %v2548, inf
    %2550 = vmin.xlane.f32.xlu0 %v2549
    %v2551 = vpop.xlane.xlu0 %2550
    %v2552 = vsel %vm2517, %v2546, %v2541
    %v2553 = vsel %vm2517, %v2551, %v2542
    %v2554 = vrcp.pop %v2552
    %v2555 = vmul.f32 %v2530, %v2554
    %2556 = vst.msk [vmem:[#allocation14] sm:$0xff] %vm2505, %v2555
    %vm2557 = vcmp.eq.f32.partialorder %v2500, %v2553
    %v2558 = vsel %vm2557, 1, 0
    %v2559 = vcvt.s32.f32 %v2558
    %v2560 = vpack.c.bf16 %v2559, %v2559
    %vm2561 = vcmask 158720
    %2562 = vst.msk [vmem:[#allocation2] sm:$0xf] %vm2561, %v2560
    %v2563 = vpack.c.bf16 %v2555, %v2555
    %2564 = vst.msk [vmem:[#allocation2 + $0x4] sm:$0xf] %vm2561, %v2563
    %v2565 = vld [vmem:[#allocation2] sm:$0xf]
    %v2566 = vld [vmem:[#allocation2 + $0x4] sm:$0xf]
    %v2567 = vld [vmem:[%s8] sm:$0xff]
    %v2568 = vld [vmem:[%s8 + $0x8] sm:$0xff]
    %v2569 = vld [vmem:[%s8 + $0x10] sm:$0x33]
    %v2570 = vld [vmem:[%s9] sm:$0x3]
    %v2572 = vlaneseq
    %v2573 = vshrl.u32 %v2572, 7
    %v2574 = vsub.s32 0, %v2573
    %v2575 = vrot.slane %v2570, %v2574
    %v2576 = vlaneseq
    %v2577 = vshrl.u32 %v2576, 7
    %v2578 = vsub.s32 1, %v2577
    %v2579 = vrot.slane %v2570, %v2578
    %v2584 = vunpack.c.l.b16 %v2565
    %v2585 = vunpack.c.l.b16 %v2566
    %v2586 = vpack.c.b16 %v2585, %v2584
    %v2590 = vunpack.c.l.b16 %v2567
    %v2591 = vunpack.c.h.b16 %v2567
    %v2592 = vunpack.c.l.b16 %v2568
    %v2593 = vunpack.c.h.b16 %v2568
    %v2594 = vunpack.c.l.b16 %v2569
    %v2595 = vunpack.c.h.b16 %v2569
    %v2596 = vpack.c.b16 %v2592, %v2590
    %v2597 = vpack.c.b16 %v2593, %v2591
    %v2598 = vpack.c.b16 %v2594, %v2594
    %v2599 = vpack.c.b16 %v2595, %v2595
    %v2603 = vsel %vm2505, %v2586, 0
    %vm2605 = vcmask 1041408
    %v2607 = vsel %vm2605, %v2598, 0
    %v2610 = vsel %vm2605, %v2599, 0
    %2612 = vmatprep.subr.bf16.mxu0 0
    %2613 = vmatpush1.bf16.msra.mxu0 0
    %2614 = vmatprep.subr.bf16.mxu0 0
    %2615 = vmatpush1.bf16.msra.mxu0 0
    %2616 = vmatprep.subr.bf16.mxu0 0
    %2617 = vmatpush1.bf16.msra.mxu0 0
    %2618 = vmatprep.subr.bf16.mxu0 0
    %2619 = vmatpush1.bf16.msra.mxu0 0
    %2620 = vmatprep.subr.bf16.mxu0 0
    %2621 = vmatpush1.bf16.msra.mxu0 0
    %2622 = vmatprep.subr.bf16.mxu0 0
    %2623 = vmatpush1.bf16.msra.mxu0 0
    %2624 = vmatprep.subr.bf16.mxu0 %v2610
    %2625 = vmatpush1.bf16.msra.mxu0 %v2607
    %2626 = vmatprep.subr.bf16.mxu0 %v2597
    %2627 = vmatpush1.bf16.msra.mxu0 %v2596
    %2628 = vmatprep.subr.bf16.mxu0 0
    %2629 = vmatpush2.bf16.msra.mxu0 0
    %2630 = vmatprep.subr.bf16.mxu0 0
    %2631 = vmatpush2.bf16.msra.mxu0 0
    %2632 = vmatprep.subr.bf16.mxu0 0
    %2633 = vmatpush2.bf16.msra.mxu0 0
    %2634 = vmatprep.subr.bf16.mxu0 0
    %2635 = vmatpush2.bf16.msra.mxu0 0
    %2636 = vmatprep.subr.bf16.mxu0 0
    %2637 = vmatpush2.bf16.msra.mxu0 0
    %2638 = vmatprep.subr.bf16.mxu0 0
    %2639 = vmatpush2.bf16.msra.mxu0 0
    %2640 = vmatprep.subr.bf16.mxu0 0
    %2641 = vmatpush2.bf16.msra.mxu0 0
    %2642 = vmatprep.subr.bf16.mxu0 0
    %2643 = vmatpush2.bf16.msra.mxu0 0
    %2644 = vmatprep.mubr.bf16.mxu0 0
    %2645 = vmatmul.mubr.bf16.gmra.mxu0 %v2603
    %v2646 = vpop.f32.mrf.mxu0
    %v2647 = vadd.f32 %v2575, %v2646
    %v2648 = vpop.f32.mrf.mxu0
    %v2649 = vadd.f32 %v2579, %v2648
    %v2650 = vpop.f32.mrf.mxu0
    %v2651 = vadd.f32 %v2575, %v2650
    %v2652 = vpop.f32.mrf.mxu0
    %v2653 = vadd.f32 %v2579, %v2652
    %2654 = vdwg.mxu0
    %v2655 = vmax.f32 %v2647, 0.0
    %v2656 = vmax.f32 %v2649, 0.0
    %v2657 = vmax.f32 %v2651, 0.0
    %v2658 = vmax.f32 %v2653, 0.0
    %v2659 = vpack.c.bf16 %v2657, %v2655
    %v2660 = vpack.c.bf16 %v2658, %v2656
    %v2661 = vld [vmem:[#allocation8] sm:$0xff]
    %v2662 = vld [vmem:[#allocation8 + $0x8] sm:$0xff]
    %v2663 = vld [vmem:[#allocation8 + $0x10] sm:$0xff]
    %v2664 = vld [vmem:[#allocation8 + $0x18] sm:$0xff]
    %v2665 = vld [vmem:[#allocation8 + $0x20] sm:$0xff]
    %v2666 = vld [vmem:[#allocation8 + $0x28] sm:$0xff]
    %v2667 = vld [vmem:[#allocation8 + $0x30] sm:$0xff]
    %v2668 = vld [vmem:[#allocation8 + $0x38] sm:$0xff]
    %v2669 = vld [vmem:[#allocation8 + $0x40] sm:$0xff]
    %v2670 = vld [vmem:[#allocation8 + $0x48] sm:$0xff]
    %v2671 = vld [vmem:[#allocation8 + $0x50] sm:$0xff]
    %v2672 = vld [vmem:[#allocation8 + $0x58] sm:$0xff]
    %v2673 = vld [vmem:[#allocation8 + $0x60] sm:$0xff]
    %v2674 = vld [vmem:[#allocation8 + $0x68] sm:$0xff]
    %v2675 = vld [vmem:[#allocation8 + $0x70] sm:$0xff]
    %v2676 = vld [vmem:[#allocation8 + $0x78] sm:$0xff]
    %v2677 = vld [vmem:[#allocation8 + $0x80] sm:$0xff]
    %v2678 = vld [vmem:[#allocation8 + $0x88] sm:$0xff]
    %v2679 = vld [vmem:[#allocation8 + $0x90] sm:$0xff]
    %v2680 = vld [vmem:[#allocation8 + $0x98] sm:$0xff]
    %v2681 = vld [vmem:[#allocation8 + $0xa0] sm:$0xff]
    %v2682 = vld [vmem:[#allocation8 + $0xa8] sm:$0xff]
    %v2683 = vld [vmem:[#allocation8 + $0xb0] sm:$0xff]
    %v2684 = vld [vmem:[#allocation8 + $0xb8] sm:$0xff]
    %v2685 = vld [vmem:[#allocation8 + $0xc0] sm:$0xff]
    %v2686 = vld [vmem:[#allocation8 + $0xc8] sm:$0xff]
    %v2687 = vld [vmem:[#allocation8 + $0xd0] sm:$0xff]
    %v2688 = vld [vmem:[#allocation8 + $0xd8] sm:$0xff]
    %v2689 = vld [vmem:[#allocation8 + $0xe0] sm:$0xff]
    %v2690 = vld [vmem:[#allocation8 + $0xe8] sm:$0xff]
    %v2691 = vld [vmem:[#allocation8 + $0xf0] sm:$0xff]
    %v2692 = vld [vmem:[#allocation8 + $0xf8] sm:$0xff]
    %v2693 = vld [vmem:[#allocation8 + $0x100] sm:$0xff]
    %v2694 = vld [vmem:[#allocation8 + $0x108] sm:$0xff]
    %v2695 = vld [vmem:[#allocation8 + $0x110] sm:$0xff]
    %v2696 = vld [vmem:[#allocation8 + $0x118] sm:$0xff]
    %v2697 = vld [vmem:[#allocation8 + $0x120] sm:$0xff]
    %v2698 = vld [vmem:[#allocation8 + $0x128] sm:$0xff]
    %v2699 = vld [vmem:[#allocation8 + $0x130] sm:$0xff]
    %v2700 = vld [vmem:[#allocation8 + $0x138] sm:$0xff]
    %v2701 = vld [vmem:[#allocation8 + $0x140] sm:$0xff]
    %v2702 = vld [vmem:[#allocation8 + $0x148] sm:$0xff]
    %v2703 = vld [vmem:[#allocation8 + $0x150] sm:$0xff]
    %v2704 = vld [vmem:[#allocation8 + $0x158] sm:$0xff]
    %v2705 = vld [vmem:[#allocation8 + $0x160] sm:$0xff]
    %v2706 = vld [vmem:[#allocation8 + $0x168] sm:$0xff]
    %v2707 = vld [vmem:[#allocation8 + $0x170] sm:$0xff]
    %v2708 = vld [vmem:[#allocation8 + $0x178] sm:$0xff]
    %v2709 = vld [vmem:[#allocation8 + $0x180] sm:$0xff]
    %v2710 = vld [vmem:[#allocation8 + $0x188] sm:$0xff]
    %v2711 = vld [vmem:[#allocation8 + $0x190] sm:$0xff]
    %v2712 = vld [vmem:[#allocation8 + $0x198] sm:$0xff]
    %v2713 = vld [vmem:[#allocation8 + $0x1a0] sm:$0xff]
    %v2714 = vld [vmem:[#allocation8 + $0x1a8] sm:$0xff]
    %v2715 = vld [vmem:[#allocation8 + $0x1b0] sm:$0xff]
    %v2716 = vld [vmem:[#allocation8 + $0x1b8] sm:$0xff]
    %v2717 = vld [vmem:[#allocation8 + $0x1c0] sm:$0xff]
    %v2718 = vld [vmem:[#allocation8 + $0x1c8] sm:$0xff]
    %v2719 = vld [vmem:[#allocation8 + $0x1d0] sm:$0xff]
    %v2720 = vld [vmem:[#allocation8 + $0x1d8] sm:$0xff]
    %v2721 = vld [vmem:[#allocation8 + $0x1e0] sm:$0xff]
    %v2722 = vld [vmem:[#allocation8 + $0x1e8] sm:$0xff]
    %v2723 = vld [vmem:[#allocation8 + $0x1f0] sm:$0xff]
    %v2724 = vld [vmem:[#allocation8 + $0x1f8] sm:$0xff]
    %v2725 = vld [vmem:[%s11] sm:$0xf]
    %v2727 = vlaneseq
    %v2728 = vshrl.u32 %v2727, 7
    %v2729 = vsub.s32 0, %v2728
    %v2730 = vrot.slane %v2725, %v2729
    %v2731 = vlaneseq
    %v2732 = vshrl.u32 %v2731, 7
    %v2733 = vsub.s32 1, %v2732
    %v2734 = vrot.slane %v2725, %v2733
    %v2735 = vlaneseq
    %v2736 = vshrl.u32 %v2735, 7
    %v2737 = vsub.s32 2, %v2736
    %v2738 = vrot.slane %v2725, %v2737
    %v2739 = vlaneseq
    %v2740 = vshrl.u32 %v2739, 7
    %v2741 = vsub.s32 3, %v2740
    %v2742 = vrot.slane %v2725, %v2741
    %v2811 = vunpack.c.l.b16 %v2661
    %v2812 = vunpack.c.h.b16 %v2661
    %v2813 = vunpack.c.l.b16 %v2662
    %v2814 = vunpack.c.h.b16 %v2662
    %v2815 = vunpack.c.l.b16 %v2663
    %v2816 = vunpack.c.h.b16 %v2663
    %v2817 = vunpack.c.l.b16 %v2664
    %v2818 = vunpack.c.h.b16 %v2664
    %v2819 = vunpack.c.l.b16 %v2665
    %v2820 = vunpack.c.h.b16 %v2665
    %v2821 = vunpack.c.l.b16 %v2666
    %v2822 = vunpack.c.h.b16 %v2666
    %v2823 = vunpack.c.l.b16 %v2667
    %v2824 = vunpack.c.h.b16 %v2667
    %v2825 = vunpack.c.l.b16 %v2668
    %v2826 = vunpack.c.h.b16 %v2668
    %v2827 = vunpack.c.l.b16 %v2669
    %v2828 = vunpack.c.h.b16 %v2669
    %v2829 = vunpack.c.l.b16 %v2670
    %v2830 = vunpack.c.h.b16 %v2670
    %v2831 = vunpack.c.l.b16 %v2671
    %v2832 = vunpack.c.h.b16 %v2671
    %v2833 = vunpack.c.l.b16 %v2672
    %v2834 = vunpack.c.h.b16 %v2672
    %v2835 = vunpack.c.l.b16 %v2673
    %v2836 = vunpack.c.h.b16 %v2673
    %v2837 = vunpack.c.l.b16 %v2674
    %v2838 = vunpack.c.h.b16 %v2674
    %v2839 = vunpack.c.l.b16 %v2675
    %v2840 = vunpack.c.h.b16 %v2675
    %v2841 = vunpack.c.l.b16 %v2676
    %v2842 = vunpack.c.h.b16 %v2676
    %v2843 = vunpack.c.l.b16 %v2677
    %v2844 = vunpack.c.h.b16 %v2677
    %v2845 = vunpack.c.l.b16 %v2678
    %v2846 = vunpack.c.h.b16 %v2678
    %v2847 = vunpack.c.l.b16 %v2679
    %v2848 = vunpack.c.h.b16 %v2679
    %v2849 = vunpack.c.l.b16 %v2680
    %v2850 = vunpack.c.h.b16 %v2680
    %v2851 = vunpack.c.l.b16 %v2681
    %v2852 = vunpack.c.h.b16 %v2681
    %v2853 = vunpack.c.l.b16 %v2682
    %v2854 = vunpack.c.h.b16 %v2682
    %v2855 = vunpack.c.l.b16 %v2683
    %v2856 = vunpack.c.h.b16 %v2683
    %v2857 = vunpack.c.l.b16 %v2684
    %v2858 = vunpack.c.h.b16 %v2684
    %v2859 = vunpack.c.l.b16 %v2685
    %v2860 = vunpack.c.h.b16 %v2685
    %v2861 = vunpack.c.l.b16 %v2686
    %v2862 = vunpack.c.h.b16 %v2686
    %v2863 = vunpack.c.l.b16 %v2687
    %v2864 = vunpack.c.h.b16 %v2687
    %v2865 = vunpack.c.l.b16 %v2688
    %v2866 = vunpack.c.h.b16 %v2688
    %v2867 = vunpack.c.l.b16 %v2689
    %v2868 = vunpack.c.h.b16 %v2689
    %v2869 = vunpack.c.l.b16 %v2690
    %v2870 = vunpack.c.h.b16 %v2690
    %v2871 = vunpack.c.l.b16 %v2691
    %v2872 = vunpack.c.h.b16 %v2691
    %v2873 = vunpack.c.l.b16 %v2692
    %v2874 = vunpack.c.h.b16 %v2692
    %v2875 = vunpack.c.l.b16 %v2693
    %v2876 = vunpack.c.h.b16 %v2693
    %v2877 = vunpack.c.l.b16 %v2694
    %v2878 = vunpack.c.h.b16 %v2694
    %v2879 = vunpack.c.l.b16 %v2695
    %v2880 = vunpack.c.h.b16 %v2695
    %v2881 = vunpack.c.l.b16 %v2696
    %v2882 = vunpack.c.h.b16 %v2696
    %v2883 = vunpack.c.l.b16 %v2697
    %v2884 = vunpack.c.h.b16 %v2697
    %v2885 = vunpack.c.l.b16 %v2698
    %v2886 = vunpack.c.h.b16 %v2698
    %v2887 = vunpack.c.l.b16 %v2699
    %v2888 = vunpack.c.h.b16 %v2699
    %v2889 = vunpack.c.l.b16 %v2700
    %v2890 = vunpack.c.h.b16 %v2700
    %v2891 = vunpack.c.l.b16 %v2701
    %v2892 = vunpack.c.h.b16 %v2701
    %v2893 = vunpack.c.l.b16 %v2702
    %v2894 = vunpack.c.h.b16 %v2702
    %v2895 = vunpack.c.l.b16 %v2703
    %v2896 = vunpack.c.h.b16 %v2703
    %v2897 = vunpack.c.l.b16 %v2704
    %v2898 = vunpack.c.h.b16 %v2704
    %v2899 = vunpack.c.l.b16 %v2705
    %v2900 = vunpack.c.h.b16 %v2705
    %v2901 = vunpack.c.l.b16 %v2706
    %v2902 = vunpack.c.h.b16 %v2706
    %v2903 = vunpack.c.l.b16 %v2707
    %v2904 = vunpack.c.h.b16 %v2707
    %v2905 = vunpack.c.l.b16 %v2708
    %v2906 = vunpack.c.h.b16 %v2708
    %v2907 = vunpack.c.l.b16 %v2709
    %v2908 = vunpack.c.h.b16 %v2709
    %v2909 = vunpack.c.l.b16 %v2710
    %v2910 = vunpack.c.h.b16 %v2710
    %v2911 = vunpack.c.l.b16 %v2711
    %v2912 = vunpack.c.h.b16 %v2711
    %v2913 = vunpack.c.l.b16 %v2712
    %v2914 = vunpack.c.h.b16 %v2712
    %v2915 = vunpack.c.l.b16 %v2713
    %v2916 = vunpack.c.h.b16 %v2713
    %v2917 = vunpack.c.l.b16 %v2714
    %v2918 = vunpack.c.h.b16 %v2714
    %v2919 = vunpack.c.l.b16 %v2715
    %v2920 = vunpack.c.h.b16 %v2715
    %v2921 = vunpack.c.l.b16 %v2716
    %v2922 = vunpack.c.h.b16 %v2716
    %v2923 = vunpack.c.l.b16 %v2717
    %v2924 = vunpack.c.h.b16 %v2717
    %v2925 = vunpack.c.l.b16 %v2718
    %v2926 = vunpack.c.h.b16 %v2718
    %v2927 = vunpack.c.l.b16 %v2719
    %v2928 = vunpack.c.h.b16 %v2719
    %v2929 = vunpack.c.l.b16 %v2720
    %v2930 = vunpack.c.h.b16 %v2720
    %v2931 = vunpack.c.l.b16 %v2721
    %v2932 = vunpack.c.h.b16 %v2721
    %v2933 = vunpack.c.l.b16 %v2722
    %v2934 = vunpack.c.h.b16 %v2722
    %v2935 = vunpack.c.l.b16 %v2723
    %v2936 = vunpack.c.h.b16 %v2723
    %v2937 = vunpack.c.l.b16 %v2724
    %v2938 = vunpack.c.h.b16 %v2724
    %v2939 = vpack.c.b16 %v2815, %v2811
    %v2940 = vpack.c.b16 %v2816, %v2812
    %v2941 = vpack.c.b16 %v2817, %v2813
    %v2942 = vpack.c.b16 %v2818, %v2814
    %v2943 = vpack.c.b16 %v2823, %v2819
    %v2944 = vpack.c.b16 %v2824, %v2820
    %v2945 = vpack.c.b16 %v2825, %v2821
    %v2946 = vpack.c.b16 %v2826, %v2822
    %v2947 = vpack.c.b16 %v2831, %v2827
    %v2948 = vpack.c.b16 %v2832, %v2828
    %v2949 = vpack.c.b16 %v2833, %v2829
    %v2950 = vpack.c.b16 %v2834, %v2830
    %v2951 = vpack.c.b16 %v2839, %v2835
    %v2952 = vpack.c.b16 %v2840, %v2836
    %v2953 = vpack.c.b16 %v2841, %v2837
    %v2954 = vpack.c.b16 %v2842, %v2838
    %v2955 = vpack.c.b16 %v2847, %v2843
    %v2956 = vpack.c.b16 %v2848, %v2844
    %v2957 = vpack.c.b16 %v2849, %v2845
    %v2958 = vpack.c.b16 %v2850, %v2846
    %v2959 = vpack.c.b16 %v2855, %v2851
    %v2960 = vpack.c.b16 %v2856, %v2852
    %v2961 = vpack.c.b16 %v2857, %v2853
    %v2962 = vpack.c.b16 %v2858, %v2854
    %v2963 = vpack.c.b16 %v2863, %v2859
    %v2964 = vpack.c.b16 %v2864, %v2860
    %v2965 = vpack.c.b16 %v2865, %v2861
    %v2966 = vpack.c.b16 %v2866, %v2862
    %v2967 = vpack.c.b16 %v2871, %v2867
    %v2968 = vpack.c.b16 %v2872, %v2868
    %v2969 = vpack.c.b16 %v2873, %v2869
    %v2970 = vpack.c.b16 %v2874, %v2870
    %v2971 = vpack.c.b16 %v2879, %v2875
    %v2972 = vpack.c.b16 %v2880, %v2876
    %v2973 = vpack.c.b16 %v2881, %v2877
    %v2974 = vpack.c.b16 %v2882, %v2878
    %v2975 = vpack.c.b16 %v2887, %v2883
    %v2976 = vpack.c.b16 %v2888, %v2884
    %v2977 = vpack.c.b16 %v2889, %v2885
    %v2978 = vpack.c.b16 %v2890, %v2886
    %v2979 = vpack.c.b16 %v2895, %v2891
    %v2980 = vpack.c.b16 %v2896, %v2892
    %v2981 = vpack.c.b16 %v2897, %v2893
    %v2982 = vpack.c.b16 %v2898, %v2894
    %v2983 = vpack.c.b16 %v2903, %v2899
    %v2984 = vpack.c.b16 %v2904, %v2900
    %v2985 = vpack.c.b16 %v2905, %v2901
    %v2986 = vpack.c.b16 %v2906, %v2902
    %v2987 = vpack.c.b16 %v2911, %v2907
    %v2988 = vpack.c.b16 %v2912, %v2908
    %v2989 = vpack.c.b16 %v2913, %v2909
    %v2990 = vpack.c.b16 %v2914, %v2910
    %v2991 = vpack.c.b16 %v2919, %v2915
    %v2992 = vpack.c.b16 %v2920, %v2916
    %v2993 = vpack.c.b16 %v2921, %v2917
    %v2994 = vpack.c.b16 %v2922, %v2918
    %v2995 = vpack.c.b16 %v2927, %v2923
    %v2996 = vpack.c.b16 %v2928, %v2924
    %v2997 = vpack.c.b16 %v2929, %v2925
    %v2998 = vpack.c.b16 %v2930, %v2926
    %v2999 = vpack.c.b16 %v2935, %v2931
    %v3000 = vpack.c.b16 %v2936, %v2932
    %v3001 = vpack.c.b16 %v2937, %v2933
    %v3002 = vpack.c.b16 %v2938, %v2934
    %3067 = vmatprep.subr.bf16.mxu0 %v2968
    %3068 = vmatpush1.bf16.msra.mxu0 %v2967
    %3069 = vmatprep.subr.bf16.mxu0 %v2964
    %3070 = vmatpush1.bf16.msra.mxu0 %v2963
    %3071 = vmatprep.subr.bf16.mxu0 %v2960
    %3072 = vmatpush1.bf16.msra.mxu0 %v2959
    %3073 = vmatprep.subr.bf16.mxu0 %v2956
    %3074 = vmatpush1.bf16.msra.mxu0 %v2955
    %3075 = vmatprep.subr.bf16.mxu0 %v2952
    %3076 = vmatpush1.bf16.msra.mxu0 %v2951
    %3077 = vmatprep.subr.bf16.mxu0 %v2948
    %3078 = vmatpush1.bf16.msra.mxu0 %v2947
    %3079 = vmatprep.subr.bf16.mxu0 %v2944
    %3080 = vmatpush1.bf16.msra.mxu0 %v2943
    %3081 = vmatprep.subr.bf16.mxu0 %v2940
    %3082 = vmatpush1.bf16.msra.mxu0 %v2939
    %3083 = vmatprep.subr.bf16.mxu0 %v3000
    %3084 = vmatpush2.bf16.msra.mxu0 %v2999
    %3085 = vmatprep.subr.bf16.mxu0 %v2996
    %3086 = vmatpush2.bf16.msra.mxu0 %v2995
    %3087 = vmatprep.subr.bf16.mxu0 %v2992
    %3088 = vmatpush2.bf16.msra.mxu0 %v2991
    %3089 = vmatprep.subr.bf16.mxu0 %v2988
    %3090 = vmatpush2.bf16.msra.mxu0 %v2987
    %3091 = vmatprep.subr.bf16.mxu0 %v2984
    %3092 = vmatpush2.bf16.msra.mxu0 %v2983
    %3093 = vmatprep.subr.bf16.mxu0 %v2980
    %3094 = vmatpush2.bf16.msra.mxu0 %v2979
    %3095 = vmatprep.subr.bf16.mxu0 %v2976
    %3096 = vmatpush2.bf16.msra.mxu0 %v2975
    %3097 = vmatprep.subr.bf16.mxu0 %v2972
    %3098 = vmatpush2.bf16.msra.mxu0 %v2971
    %3099 = vmatprep.mubr.bf16.mxu0 %v2660
    %3100 = vmatmul.mubr.bf16.gmra.mxu0 %v2659
    %v3101 = vpop.f32.mrf.mxu0
    %v3102 = vadd.f32 %v2730, %v3101
    %v3103 = vpop.f32.mrf.mxu0
    %v3104 = vadd.f32 %v2734, %v3103
    %v3105 = vpop.f32.mrf.mxu0
    %v3106 = vadd.f32 %v2730, %v3105
    %v3107 = vpop.f32.mrf.mxu0
    %v3108 = vadd.f32 %v2734, %v3107
    %3109 = vdwg.mxu0
    %3110 = vmatprep.subr.bf16.mxu0 %v2970
    %3111 = vmatpush1.bf16.msra.mxu0 %v2969
    %3112 = vmatprep.subr.bf16.mxu0 %v2966
    %3113 = vmatpush1.bf16.msra.mxu0 %v2965
    %3114 = vmatprep.subr.bf16.mxu0 %v2962
    %3115 = vmatpush1.bf16.msra.mxu0 %v2961
    %3116 = vmatprep.subr.bf16.mxu0 %v2958
    %3117 = vmatpush1.bf16.msra.mxu0 %v2957
    %3118 = vmatprep.subr.bf16.mxu0 %v2954
    %3119 = vmatpush1.bf16.msra.mxu0 %v2953
    %3120 = vmatprep.subr.bf16.mxu0 %v2950
    %3121 = vmatpush1.bf16.msra.mxu0 %v2949
    %3122 = vmatprep.subr.bf16.mxu0 %v2946
    %3123 = vmatpush1.bf16.msra.mxu0 %v2945
    %3124 = vmatprep.subr.bf16.mxu0 %v2942
    %3125 = vmatpush1.bf16.msra.mxu0 %v2941
    %3126 = vmatprep.subr.bf16.mxu0 %v3002
    %3127 = vmatpush2.bf16.msra.mxu0 %v3001
    %3128 = vmatprep.subr.bf16.mxu0 %v2998
    %3129 = vmatpush2.bf16.msra.mxu0 %v2997
    %3130 = vmatprep.subr.bf16.mxu0 %v2994
    %3131 = vmatpush2.bf16.msra.mxu0 %v2993
    %3132 = vmatprep.subr.bf16.mxu0 %v2990
    %3133 = vmatpush2.bf16.msra.mxu0 %v2989
    %3134 = vmatprep.subr.bf16.mxu0 %v2986
    %3135 = vmatpush2.bf16.msra.mxu0 %v2985
    %3136 = vmatprep.subr.bf16.mxu0 %v2982
    %3137 = vmatpush2.bf16.msra.mxu0 %v2981
    %3138 = vmatprep.subr.bf16.mxu0 %v2978
    %3139 = vmatpush2.bf16.msra.mxu0 %v2977
    %3140 = vmatprep.subr.bf16.mxu0 %v2974
    %3141 = vmatpush2.bf16.msra.mxu0 %v2973
    %3142 = vmatprep.mubr.bf16.mxu0 %v2660
    %3143 = vmatmul.mubr.bf16.gmra.mxu0 %v2659
    %v3144 = vpop.f32.mrf.mxu0
    %v3145 = vadd.f32 %v2738, %v3144
    %v3146 = vpop.f32.mrf.mxu0
    %v3147 = vadd.f32 %v2742, %v3146
    %v3148 = vpop.f32.mrf.mxu0
    %v3149 = vadd.f32 %v2738, %v3148
    %v3150 = vpop.f32.mrf.mxu0
    %v3151 = vadd.f32 %v2742, %v3150
    %3152 = vdwg.mxu0
    %v3153 = vmax.f32 %v3102, 0.0
    %v3154 = vmax.f32 %v3104, 0.0
    %v3155 = vmax.f32 %v3145, 0.0
    %v3156 = vmax.f32 %v3147, 0.0
    %v3157 = vmax.f32 %v3106, 0.0
    %v3158 = vmax.f32 %v3108, 0.0
    %v3159 = vmax.f32 %v3149, 0.0
    %v3160 = vmax.f32 %v3151, 0.0
    %v3161 = vpack.c.bf16 %v3157, %v3153
    %v3162 = vpack.c.bf16 %v3158, %v3154
    %v3163 = vpack.c.bf16 %v3159, %v3155
    %v3164 = vpack.c.bf16 %v3160, %v3156
    %v3165 = vld [vmem:[#allocation9] sm:$0xff]
    %v3166 = vld [vmem:[#allocation9 + $0x8] sm:$0xff]
    %v3167 = vld [vmem:[#allocation9 + $0x10] sm:$0xff]
    %v3168 = vld [vmem:[#allocation9 + $0x18] sm:$0xf]
    %v3169 = vld [vmem:[#allocation9 + $0x1c] sm:$0xff]
    %v3170 = vld [vmem:[#allocation9 + $0x24] sm:$0xff]
    %v3171 = vld [vmem:[#allocation9 + $0x2c] sm:$0xff]
    %v3172 = vld [vmem:[#allocation9 + $0x34] sm:$0xf]
    %v3173 = vld [vmem:[#allocation9 + $0x38] sm:$0xff]
    %v3174 = vld [vmem:[#allocation9 + $0x40] sm:$0xff]
    %v3175 = vld [vmem:[#allocation9 + $0x48] sm:$0xff]
    %v3176 = vld [vmem:[#allocation9 + $0x50] sm:$0xf]
    %v3177 = vld [vmem:[#allocation9 + $0x54] sm:$0xff]
    %v3178 = vld [vmem:[#allocation9 + $0x5c] sm:$0xff]
    %v3179 = vld [vmem:[#allocation9 + $0x64] sm:$0xff]
    %v3180 = vld [vmem:[#allocation9 + $0x6c] sm:$0xf]
    %v3181 = vld [vmem:[#allocation9 + $0x70] sm:$0xff]
    %v3182 = vld [vmem:[#allocation9 + $0x78] sm:$0xff]
    %v3183 = vld [vmem:[#allocation9 + $0x80] sm:$0xff]
    %v3184 = vld [vmem:[#allocation9 + $0x88] sm:$0xf]
    %v3185 = vld [vmem:[#allocation9 + $0x8c] sm:$0xff]
    %v3186 = vld [vmem:[#allocation9 + $0x94] sm:$0xff]
    %v3187 = vld [vmem:[#allocation9 + $0x9c] sm:$0xff]
    %v3188 = vld [vmem:[#allocation9 + $0xa4] sm:$0xf]
    %v3189 = vld [vmem:[#allocation9 + $0xa8] sm:$0xff]
    %v3190 = vld [vmem:[#allocation9 + $0xb0] sm:$0xff]
    %v3191 = vld [vmem:[#allocation9 + $0xb8] sm:$0xff]
    %v3192 = vld [vmem:[#allocation9 + $0xc0] sm:$0xf]
    %v3193 = vld [vmem:[#allocation9 + $0xc4] sm:$0xff]
    %v3194 = vld [vmem:[#allocation9 + $0xcc] sm:$0xff]
    %v3195 = vld [vmem:[#allocation9 + $0xd4] sm:$0xff]
    %v3196 = vld [vmem:[#allocation9 + $0xdc] sm:$0xf]
    %v3197 = vld [vmem:[#allocation9 + $0xe0] sm:$0xff]
    %v3198 = vld [vmem:[#allocation9 + $0xe8] sm:$0xff]
    %v3199 = vld [vmem:[#allocation9 + $0xf0] sm:$0xff]
    %v3200 = vld [vmem:[#allocation9 + $0xf8] sm:$0xf]
    %v3201 = vld [vmem:[#allocation9 + $0xfc] sm:$0xff]
    %v3202 = vld [vmem:[#allocation9 + $0x104] sm:$0xff]
    %v3203 = vld [vmem:[#allocation9 + $0x10c] sm:$0xff]
    %v3204 = vld [vmem:[#allocation9 + $0x114] sm:$0xf]
    %v3205 = vld [vmem:[#allocation9 + $0x118] sm:$0xff]
    %v3206 = vld [vmem:[#allocation9 + $0x120] sm:$0xff]
    %v3207 = vld [vmem:[#allocation9 + $0x128] sm:$0xff]
    %v3208 = vld [vmem:[#allocation9 + $0x130] sm:$0xf]
    %v3209 = vld [vmem:[#allocation9 + $0x134] sm:$0xff]
    %v3210 = vld [vmem:[#allocation9 + $0x13c] sm:$0xff]
    %v3211 = vld [vmem:[#allocation9 + $0x144] sm:$0xff]
    %v3212 = vld [vmem:[#allocation9 + $0x14c] sm:$0xf]
    %v3213 = vld [vmem:[#allocation9 + $0x150] sm:$0xff]
    %v3214 = vld [vmem:[#allocation9 + $0x158] sm:$0xff]
    %v3215 = vld [vmem:[#allocation9 + $0x160] sm:$0xff]
    %v3216 = vld [vmem:[#allocation9 + $0x168] sm:$0xf]
    %v3217 = vld [vmem:[#allocation9 + $0x16c] sm:$0xff]
    %v3218 = vld [vmem:[#allocation9 + $0x174] sm:$0xff]
    %v3219 = vld [vmem:[#allocation9 + $0x17c] sm:$0xff]
    %v3220 = vld [vmem:[#allocation9 + $0x184] sm:$0xf]
    %v3221 = vld [vmem:[#allocation9 + $0x188] sm:$0xff]
    %v3222 = vld [vmem:[#allocation9 + $0x190] sm:$0xff]
    %v3223 = vld [vmem:[#allocation9 + $0x198] sm:$0xff]
    %v3224 = vld [vmem:[#allocation9 + $0x1a0] sm:$0xf]
    %v3225 = vld [vmem:[#allocation9 + $0x1a4] sm:$0xff]
    %v3226 = vld [vmem:[#allocation9 + $0x1ac] sm:$0xff]
    %v3227 = vld [vmem:[#allocation9 + $0x1b4] sm:$0xff]
    %v3228 = vld [vmem:[#allocation9 + $0x1bc] sm:$0xf]
    %v3229 = vld [vmem:[#allocation9 + $0x1c0] sm:$0xff]
    %v3230 = vld [vmem:[#allocation9 + $0x1c8] sm:$0xff]
    %v3231 = vld [vmem:[#allocation9 + $0x1d0] sm:$0xff]
    %v3232 = vld [vmem:[#allocation9 + $0x1d8] sm:$0xf]
    %v3233 = vld [vmem:[#allocation9 + $0x1dc] sm:$0xff]
    %v3234 = vld [vmem:[#allocation9 + $0x1e4] sm:$0xff]
    %v3235 = vld [vmem:[#allocation9 + $0x1ec] sm:$0xff]
    %v3236 = vld [vmem:[#allocation9 + $0x1f4] sm:$0xf]
    %v3237 = vld [vmem:[#allocation9 + $0x1f8] sm:$0xff]
    %v3238 = vld [vmem:[#allocation9 + $0x200] sm:$0xff]
    %v3239 = vld [vmem:[#allocation9 + $0x208] sm:$0xff]
    %v3240 = vld [vmem:[#allocation9 + $0x210] sm:$0xf]
    %v3241 = vld [vmem:[#allocation9 + $0x214] sm:$0xff]
    %v3242 = vld [vmem:[#allocation9 + $0x21c] sm:$0xff]
    %v3243 = vld [vmem:[#allocation9 + $0x224] sm:$0xff]
    %v3244 = vld [vmem:[#allocation9 + $0x22c] sm:$0xf]
    %v3245 = vld [vmem:[#allocation9 + $0x230] sm:$0xff]
    %v3246 = vld [vmem:[#allocation9 + $0x238] sm:$0xff]
    %v3247 = vld [vmem:[#allocation9 + $0x240] sm:$0xff]
    %v3248 = vld [vmem:[#allocation9 + $0x248] sm:$0xf]
    %v3249 = vld [vmem:[#allocation9 + $0x24c] sm:$0xff]
    %v3250 = vld [vmem:[#allocation9 + $0x254] sm:$0xff]
    %v3251 = vld [vmem:[#allocation9 + $0x25c] sm:$0xff]
    %v3252 = vld [vmem:[#allocation9 + $0x264] sm:$0xf]
    %v3253 = vld [vmem:[#allocation9 + $0x268] sm:$0xff]
    %v3254 = vld [vmem:[#allocation9 + $0x270] sm:$0xff]
    %v3255 = vld [vmem:[#allocation9 + $0x278] sm:$0xff]
    %v3256 = vld [vmem:[#allocation9 + $0x280] sm:$0xf]
    %v3257 = vld [vmem:[#allocation9 + $0x284] sm:$0xff]
    %v3258 = vld [vmem:[#allocation9 + $0x28c] sm:$0xff]
    %v3259 = vld [vmem:[#allocation9 + $0x294] sm:$0xff]
    %v3260 = vld [vmem:[#allocation9 + $0x29c] sm:$0xf]
    %v3261 = vld [vmem:[#allocation9 + $0x2a0] sm:$0xff]
    %v3262 = vld [vmem:[#allocation9 + $0x2a8] sm:$0xff]
    %v3263 = vld [vmem:[#allocation9 + $0x2b0] sm:$0xff]
    %v3264 = vld [vmem:[#allocation9 + $0x2b8] sm:$0xf]
    %v3265 = vld [vmem:[#allocation9 + $0x2bc] sm:$0xff]
    %v3266 = vld [vmem:[#allocation9 + $0x2c4] sm:$0xff]
    %v3267 = vld [vmem:[#allocation9 + $0x2cc] sm:$0xff]
    %v3268 = vld [vmem:[#allocation9 + $0x2d4] sm:$0xf]
    %v3269 = vld [vmem:[#allocation9 + $0x2d8] sm:$0xff]
    %v3270 = vld [vmem:[#allocation9 + $0x2e0] sm:$0xff]
    %v3271 = vld [vmem:[#allocation9 + $0x2e8] sm:$0xff]
    %v3272 = vld [vmem:[#allocation9 + $0x2f0] sm:$0xf]
    %v3273 = vld [vmem:[#allocation9 + $0x2f4] sm:$0xff]
    %v3274 = vld [vmem:[#allocation9 + $0x2fc] sm:$0xff]
    %v3275 = vld [vmem:[#allocation9 + $0x304] sm:$0xff]
    %v3276 = vld [vmem:[#allocation9 + $0x30c] sm:$0xf]
    %v3277 = vld [vmem:[#allocation9 + $0x310] sm:$0xff]
    %v3278 = vld [vmem:[#allocation9 + $0x318] sm:$0xff]
    %v3279 = vld [vmem:[#allocation9 + $0x320] sm:$0xff]
    %v3280 = vld [vmem:[#allocation9 + $0x328] sm:$0xf]
    %v3281 = vld [vmem:[#allocation9 + $0x32c] sm:$0xff]
    %v3282 = vld [vmem:[#allocation9 + $0x334] sm:$0xff]
    %v3283 = vld [vmem:[#allocation9 + $0x33c] sm:$0xff]
    %v3284 = vld [vmem:[#allocation9 + $0x344] sm:$0xf]
    %v3285 = vld [vmem:[#allocation9 + $0x348] sm:$0xff]
    %v3286 = vld [vmem:[#allocation9 + $0x350] sm:$0xff]
    %v3287 = vld [vmem:[#allocation9 + $0x358] sm:$0xff]
    %v3288 = vld [vmem:[#allocation9 + $0x360] sm:$0xf]
    %v3289 = vld [vmem:[#allocation9 + $0x364] sm:$0xff]
    %v3290 = vld [vmem:[#allocation9 + $0x36c] sm:$0xff]
    %v3291 = vld [vmem:[#allocation9 + $0x374] sm:$0xff]
    %v3292 = vld [vmem:[#allocation9 + $0x37c] sm:$0xf]
    %v3293 = vld [vmem:[#allocation9 + $0x380] sm:$0xff]
    %v3294 = vld [vmem:[#allocation9 + $0x388] sm:$0xff]
    %v3295 = vld [vmem:[#allocation9 + $0x390] sm:$0xff]
    %v3296 = vld [vmem:[#allocation9 + $0x398] sm:$0xf]
    %v3297 = vld [vmem:[#allocation9 + $0x39c] sm:$0xff]
    %v3298 = vld [vmem:[#allocation9 + $0x3a4] sm:$0xff]
    %v3299 = vld [vmem:[#allocation9 + $0x3ac] sm:$0xff]
    %v3300 = vld [vmem:[#allocation9 + $0x3b4] sm:$0xf]
    %v3301 = vld [vmem:[#allocation9 + $0x3b8] sm:$0xff]
    %v3302 = vld [vmem:[#allocation9 + $0x3c0] sm:$0xff]
    %v3303 = vld [vmem:[#allocation9 + $0x3c8] sm:$0xff]
    %v3304 = vld [vmem:[#allocation9 + $0x3d0] sm:$0xf]
    %v3305 = vld [vmem:[#allocation9 + $0x3d4] sm:$0xff]
    %v3306 = vld [vmem:[#allocation9 + $0x3dc] sm:$0xff]
    %v3307 = vld [vmem:[#allocation9 + $0x3e4] sm:$0xff]
    %v3308 = vld [vmem:[#allocation9 + $0x3ec] sm:$0xf]
    %v3309 = vld [vmem:[#allocation9 + $0x3f0] sm:$0xff]
    %v3310 = vld [vmem:[#allocation9 + $0x3f8] sm:$0xff]
    %v3311 = vld [vmem:[#allocation9 + $0x400] sm:$0xff]
    %v3312 = vld [vmem:[#allocation9 + $0x408] sm:$0xf]
    %v3313 = vld [vmem:[#allocation9 + $0x40c] sm:$0xff]
    %v3314 = vld [vmem:[#allocation9 + $0x414] sm:$0xff]
    %v3315 = vld [vmem:[#allocation9 + $0x41c] sm:$0xff]
    %v3316 = vld [vmem:[#allocation9 + $0x424] sm:$0xf]
    %v3317 = vld [vmem:[#allocation9 + $0x428] sm:$0xff]
    %v3318 = vld [vmem:[#allocation9 + $0x430] sm:$0xff]
    %v3319 = vld [vmem:[#allocation9 + $0x438] sm:$0xff]
    %v3320 = vld [vmem:[#allocation9 + $0x440] sm:$0xf]
    %v3321 = vld [vmem:[#allocation9 + $0x444] sm:$0xff]
    %v3322 = vld [vmem:[#allocation9 + $0x44c] sm:$0xff]
    %v3323 = vld [vmem:[#allocation9 + $0x454] sm:$0xff]
    %v3324 = vld [vmem:[#allocation9 + $0x45c] sm:$0xf]
    %v3325 = vld [vmem:[#allocation9 + $0x460] sm:$0xff]
    %v3326 = vld [vmem:[#allocation9 + $0x468] sm:$0xff]
    %v3327 = vld [vmem:[#allocation9 + $0x470] sm:$0xff]
    %v3328 = vld [vmem:[#allocation9 + $0x478] sm:$0xf]
    %v3329 = vld [vmem:[#allocation9 + $0x47c] sm:$0xff]
    %v3330 = vld [vmem:[#allocation9 + $0x484] sm:$0xff]
    %v3331 = vld [vmem:[#allocation9 + $0x48c] sm:$0xff]
    %v3332 = vld [vmem:[#allocation9 + $0x494] sm:$0xf]
    %v3333 = vld [vmem:[#allocation9 + $0x498] sm:$0xff]
    %v3334 = vld [vmem:[#allocation9 + $0x4a0] sm:$0xff]
    %v3335 = vld [vmem:[#allocation9 + $0x4a8] sm:$0xff]
    %v3336 = vld [vmem:[#allocation9 + $0x4b0] sm:$0xf]
    %v3337 = vld [vmem:[#allocation9 + $0x4b4] sm:$0xff]
    %v3338 = vld [vmem:[#allocation9 + $0x4bc] sm:$0xff]
    %v3339 = vld [vmem:[#allocation9 + $0x4c4] sm:$0xff]
    %v3340 = vld [vmem:[#allocation9 + $0x4cc] sm:$0xf]
    %v3341 = vld [vmem:[#allocation9 + $0x4d0] sm:$0xff]
    %v3342 = vld [vmem:[#allocation9 + $0x4d8] sm:$0xff]
    %v3343 = vld [vmem:[#allocation9 + $0x4e0] sm:$0xff]
    %v3344 = vld [vmem:[#allocation9 + $0x4e8] sm:$0xf]
    %v3345 = vld [vmem:[#allocation9 + $0x4ec] sm:$0xff]
    %v3346 = vld [vmem:[#allocation9 + $0x4f4] sm:$0xff]
    %v3347 = vld [vmem:[#allocation9 + $0x4fc] sm:$0xff]
    %v3348 = vld [vmem:[#allocation9 + $0x504] sm:$0xf]
    %v3349 = vld [vmem:[#allocation9 + $0x508] sm:$0xff]
    %v3350 = vld [vmem:[#allocation9 + $0x510] sm:$0xff]
    %v3351 = vld [vmem:[#allocation9 + $0x518] sm:$0xff]
    %v3352 = vld [vmem:[#allocation9 + $0x520] sm:$0xf]
    %v3353 = vld [vmem:[#allocation9 + $0x524] sm:$0xff]
    %v3354 = vld [vmem:[#allocation9 + $0x52c] sm:$0xff]
    %v3355 = vld [vmem:[#allocation9 + $0x534] sm:$0xff]
    %v3356 = vld [vmem:[#allocation9 + $0x53c] sm:$0xf]
    %v3357 = vld [vmem:[#allocation9 + $0x540] sm:$0xff]
    %v3358 = vld [vmem:[#allocation9 + $0x548] sm:$0xff]
    %v3359 = vld [vmem:[#allocation9 + $0x550] sm:$0xff]
    %v3360 = vld [vmem:[#allocation9 + $0x558] sm:$0xf]
    %v3361 = vld [vmem:[#allocation9 + $0x55c] sm:$0xff]
    %v3362 = vld [vmem:[#allocation9 + $0x564] sm:$0xff]
    %v3363 = vld [vmem:[#allocation9 + $0x56c] sm:$0xff]
    %v3364 = vld [vmem:[#allocation9 + $0x574] sm:$0xf]
    %v3365 = vld [vmem:[#allocation9 + $0x578] sm:$0xff]
    %v3366 = vld [vmem:[#allocation9 + $0x580] sm:$0xff]
    %v3367 = vld [vmem:[#allocation9 + $0x588] sm:$0xff]
    %v3368 = vld [vmem:[#allocation9 + $0x590] sm:$0xf]
    %v3369 = vld [vmem:[#allocation9 + $0x594] sm:$0xff]
    %v3370 = vld [vmem:[#allocation9 + $0x59c] sm:$0xff]
    %v3371 = vld [vmem:[#allocation9 + $0x5a4] sm:$0xff]
    %v3372 = vld [vmem:[#allocation9 + $0x5ac] sm:$0xf]
    %v3373 = vld [vmem:[#allocation9 + $0x5b0] sm:$0xff]
    %v3374 = vld [vmem:[#allocation9 + $0x5b8] sm:$0xff]
    %v3375 = vld [vmem:[#allocation9 + $0x5c0] sm:$0xff]
    %v3376 = vld [vmem:[#allocation9 + $0x5c8] sm:$0xf]
    %v3377 = vld [vmem:[#allocation9 + $0x5cc] sm:$0xff]
    %v3378 = vld [vmem:[#allocation9 + $0x5d4] sm:$0xff]
    %v3379 = vld [vmem:[#allocation9 + $0x5dc] sm:$0xff]
    %v3380 = vld [vmem:[#allocation9 + $0x5e4] sm:$0xf]
    %v3381 = vld [vmem:[#allocation9 + $0x5e8] sm:$0xff]
    %v3382 = vld [vmem:[#allocation9 + $0x5f0] sm:$0xff]
    %v3383 = vld [vmem:[#allocation9 + $0x5f8] sm:$0xff]
    %v3384 = vld [vmem:[#allocation9 + $0x600] sm:$0xf]
    %v3385 = vld [vmem:[#allocation9 + $0x604] sm:$0xff]
    %v3386 = vld [vmem:[#allocation9 + $0x60c] sm:$0xff]
    %v3387 = vld [vmem:[#allocation9 + $0x614] sm:$0xff]
    %v3388 = vld [vmem:[#allocation9 + $0x61c] sm:$0xf]
    %v3389 = vld [vmem:[#allocation9 + $0x620] sm:$0xff]
    %v3390 = vld [vmem:[#allocation9 + $0x628] sm:$0xff]
    %v3391 = vld [vmem:[#allocation9 + $0x630] sm:$0xff]
    %v3392 = vld [vmem:[#allocation9 + $0x638] sm:$0xf]
    %v3393 = vld [vmem:[#allocation9 + $0x63c] sm:$0xff]
    %v3394 = vld [vmem:[#allocation9 + $0x644] sm:$0xff]
    %v3395 = vld [vmem:[#allocation9 + $0x64c] sm:$0xff]
    %v3396 = vld [vmem:[#allocation9 + $0x654] sm:$0xf]
    %v3397 = vld [vmem:[#allocation9 + $0x658] sm:$0xff]
    %v3398 = vld [vmem:[#allocation9 + $0x660] sm:$0xff]
    %v3399 = vld [vmem:[#allocation9 + $0x668] sm:$0xff]
    %v3400 = vld [vmem:[#allocation9 + $0x670] sm:$0xf]
    %v3401 = vld [vmem:[#allocation9 + $0x674] sm:$0xff]
    %v3402 = vld [vmem:[#allocation9 + $0x67c] sm:$0xff]
    %v3403 = vld [vmem:[#allocation9 + $0x684] sm:$0xff]
    %v3404 = vld [vmem:[#allocation9 + $0x68c] sm:$0xf]
    %v3405 = vld [vmem:[#allocation9 + $0x690] sm:$0xff]
    %v3406 = vld [vmem:[#allocation9 + $0x698] sm:$0xff]
    %v3407 = vld [vmem:[#allocation9 + $0x6a0] sm:$0xff]
    %v3408 = vld [vmem:[#allocation9 + $0x6a8] sm:$0xf]
    %v3409 = vld [vmem:[#allocation9 + $0x6ac] sm:$0xff]
    %v3410 = vld [vmem:[#allocation9 + $0x6b4] sm:$0xff]
    %v3411 = vld [vmem:[#allocation9 + $0x6bc] sm:$0xff]
    %v3412 = vld [vmem:[#allocation9 + $0x6c4] sm:$0xf]
    %v3413 = vld [vmem:[#allocation9 + $0x6c8] sm:$0xff]
    %v3414 = vld [vmem:[#allocation9 + $0x6d0] sm:$0xff]
    %v3415 = vld [vmem:[#allocation9 + $0x6d8] sm:$0xff]
    %v3416 = vld [vmem:[#allocation9 + $0x6e0] sm:$0xf]
    %v3417 = vld [vmem:[#allocation9 + $0x6e4] sm:$0xff]
    %v3418 = vld [vmem:[#allocation9 + $0x6ec] sm:$0xff]
    %v3419 = vld [vmem:[#allocation9 + $0x6f4] sm:$0xff]
    %v3420 = vld [vmem:[#allocation9 + $0x6fc] sm:$0xf]
    %v3421 = vld [vmem:[%s13] sm:$0xff]
    %v3423 = vlaneseq
    %v3424 = vshrl.u32 %v3423, 7
    %v3425 = vsub.s32 0, %v3424
    %v3426 = vrot.slane %v3421, %v3425
    %v3427 = vlaneseq
    %v3428 = vshrl.u32 %v3427, 7
    %v3429 = vsub.s32 1, %v3428
    %v3430 = vrot.slane %v3421, %v3429
    %v3431 = vlaneseq
    %v3432 = vshrl.u32 %v3431, 7
    %v3433 = vsub.s32 2, %v3432
    %v3434 = vrot.slane %v3421, %v3433
    %v3435 = vlaneseq
    %v3436 = vshrl.u32 %v3435, 7
    %v3437 = vsub.s32 3, %v3436
    %v3438 = vrot.slane %v3421, %v3437
    %v3439 = vlaneseq
    %v3440 = vshrl.u32 %v3439, 7
    %v3441 = vsub.s32 4, %v3440
    %v3442 = vrot.slane %v3421, %v3441
    %v3443 = vlaneseq
    %v3444 = vshrl.u32 %v3443, 7
    %v3445 = vsub.s32 5, %v3444
    %v3446 = vrot.slane %v3421, %v3445
    %v3447 = vlaneseq
    %v3448 = vshrl.u32 %v3447, 7
    %v3449 = vsub.s32 6, %v3448
    %v3450 = vrot.slane %v3421, %v3449
    %v3714 = vunpack.c.l.b16 %v3165
    %v3715 = vunpack.c.h.b16 %v3165
    %v3716 = vunpack.c.l.b16 %v3166
    %v3717 = vunpack.c.h.b16 %v3166
    %v3718 = vunpack.c.l.b16 %v3167
    %v3719 = vunpack.c.h.b16 %v3167
    %v3720 = vunpack.c.l.b16 %v3168
    %v3721 = vunpack.c.l.b16 %v3169
    %v3722 = vunpack.c.h.b16 %v3169
    %v3723 = vunpack.c.l.b16 %v3170
    %v3724 = vunpack.c.h.b16 %v3170
    %v3725 = vunpack.c.l.b16 %v3171
    %v3726 = vunpack.c.h.b16 %v3171
    %v3727 = vunpack.c.l.b16 %v3172
    %v3728 = vunpack.c.l.b16 %v3173
    %v3729 = vunpack.c.h.b16 %v3173
    %v3730 = vunpack.c.l.b16 %v3174
    %v3731 = vunpack.c.h.b16 %v3174
    %v3732 = vunpack.c.l.b16 %v3175
    %v3733 = vunpack.c.h.b16 %v3175
    %v3734 = vunpack.c.l.b16 %v3176
    %v3735 = vunpack.c.l.b16 %v3177
    %v3736 = vunpack.c.h.b16 %v3177
    %v3737 = vunpack.c.l.b16 %v3178
    %v3738 = vunpack.c.h.b16 %v3178
    %v3739 = vunpack.c.l.b16 %v3179
    %v3740 = vunpack.c.h.b16 %v3179
    %v3741 = vunpack.c.l.b16 %v3180
    %v3742 = vunpack.c.l.b16 %v3181
    %v3743 = vunpack.c.h.b16 %v3181
    %v3744 = vunpack.c.l.b16 %v3182
    %v3745 = vunpack.c.h.b16 %v3182
    %v3746 = vunpack.c.l.b16 %v3183
    %v3747 = vunpack.c.h.b16 %v3183
    %v3748 = vunpack.c.l.b16 %v3184
    %v3749 = vunpack.c.l.b16 %v3185
    %v3750 = vunpack.c.h.b16 %v3185
    %v3751 = vunpack.c.l.b16 %v3186
    %v3752 = vunpack.c.h.b16 %v3186
    %v3753 = vunpack.c.l.b16 %v3187
    %v3754 = vunpack.c.h.b16 %v3187
    %v3755 = vunpack.c.l.b16 %v3188
    %v3756 = vunpack.c.l.b16 %v3189
    %v3757 = vunpack.c.h.b16 %v3189
    %v3758 = vunpack.c.l.b16 %v3190
    %v3759 = vunpack.c.h.b16 %v3190
    %v3760 = vunpack.c.l.b16 %v3191
    %v3761 = vunpack.c.h.b16 %v3191
    %v3762 = vunpack.c.l.b16 %v3192
    %v3763 = vunpack.c.l.b16 %v3193
    %v3764 = vunpack.c.h.b16 %v3193
    %v3765 = vunpack.c.l.b16 %v3194
    %v3766 = vunpack.c.h.b16 %v3194
    %v3767 = vunpack.c.l.b16 %v3195
    %v3768 = vunpack.c.h.b16 %v3195
    %v3769 = vunpack.c.l.b16 %v3196
    %v3770 = vunpack.c.l.b16 %v3197
    %v3771 = vunpack.c.h.b16 %v3197
    %v3772 = vunpack.c.l.b16 %v3198
    %v3773 = vunpack.c.h.b16 %v3198
    %v3774 = vunpack.c.l.b16 %v3199
    %v3775 = vunpack.c.h.b16 %v3199
    %v3776 = vunpack.c.l.b16 %v3200
    %v3777 = vunpack.c.l.b16 %v3201
    %v3778 = vunpack.c.h.b16 %v3201
    %v3779 = vunpack.c.l.b16 %v3202
    %v3780 = vunpack.c.h.b16 %v3202
    %v3781 = vunpack.c.l.b16 %v3203
    %v3782 = vunpack.c.h.b16 %v3203
    %v3783 = vunpack.c.l.b16 %v3204
    %v3784 = vunpack.c.l.b16 %v3205
    %v3785 = vunpack.c.h.b16 %v3205
    %v3786 = vunpack.c.l.b16 %v3206
    %v3787 = vunpack.c.h.b16 %v3206
    %v3788 = vunpack.c.l.b16 %v3207
    %v3789 = vunpack.c.h.b16 %v3207
    %v3790 = vunpack.c.l.b16 %v3208
    %v3791 = vunpack.c.l.b16 %v3209
    %v3792 = vunpack.c.h.b16 %v3209
    %v3793 = vunpack.c.l.b16 %v3210
    %v3794 = vunpack.c.h.b16 %v3210
    %v3795 = vunpack.c.l.b16 %v3211
    %v3796 = vunpack.c.h.b16 %v3211
    %v3797 = vunpack.c.l.b16 %v3212
    %v3798 = vunpack.c.l.b16 %v3213
    %v3799 = vunpack.c.h.b16 %v3213
    %v3800 = vunpack.c.l.b16 %v3214
    %v3801 = vunpack.c.h.b16 %v3214
    %v3802 = vunpack.c.l.b16 %v3215
    %v3803 = vunpack.c.h.b16 %v3215
    %v3804 = vunpack.c.l.b16 %v3216
    %v3805 = vunpack.c.l.b16 %v3217
    %v3806 = vunpack.c.h.b16 %v3217
    %v3807 = vunpack.c.l.b16 %v3218
    %v3808 = vunpack.c.h.b16 %v3218
    %v3809 = vunpack.c.l.b16 %v3219
    %v3810 = vunpack.c.h.b16 %v3219
    %v3811 = vunpack.c.l.b16 %v3220
    %v3812 = vunpack.c.l.b16 %v3221
    %v3813 = vunpack.c.h.b16 %v3221
    %v3814 = vunpack.c.l.b16 %v3222
    %v3815 = vunpack.c.h.b16 %v3222
    %v3816 = vunpack.c.l.b16 %v3223
    %v3817 = vunpack.c.h.b16 %v3223
    %v3818 = vunpack.c.l.b16 %v3224
    %v3819 = vunpack.c.l.b16 %v3225
    %v3820 = vunpack.c.h.b16 %v3225
    %v3821 = vunpack.c.l.b16 %v3226
    %v3822 = vunpack.c.h.b16 %v3226
    %v3823 = vunpack.c.l.b16 %v3227
    %v3824 = vunpack.c.h.b16 %v3227
    %v3825 = vunpack.c.l.b16 %v3228
    %v3826 = vunpack.c.l.b16 %v3229
    %v3827 = vunpack.c.h.b16 %v3229
    %v3828 = vunpack.c.l.b16 %v3230
    %v3829 = vunpack.c.h.b16 %v3230
    %v3830 = vunpack.c.l.b16 %v3231
    %v3831 = vunpack.c.h.b16 %v3231
    %v3832 = vunpack.c.l.b16 %v3232
    %v3833 = vunpack.c.l.b16 %v3233
    %v3834 = vunpack.c.h.b16 %v3233
    %v3835 = vunpack.c.l.b16 %v3234
    %v3836 = vunpack.c.h.b16 %v3234
    %v3837 = vunpack.c.l.b16 %v3235
    %v3838 = vunpack.c.h.b16 %v3235
    %v3839 = vunpack.c.l.b16 %v3236
    %v3840 = vunpack.c.l.b16 %v3237
    %v3841 = vunpack.c.h.b16 %v3237
    %v3842 = vunpack.c.l.b16 %v3238
    %v3843 = vunpack.c.h.b16 %v3238
    %v3844 = vunpack.c.l.b16 %v3239
    %v3845 = vunpack.c.h.b16 %v3239
    %v3846 = vunpack.c.l.b16 %v3240
    %v3847 = vunpack.c.l.b16 %v3241
    %v3848 = vunpack.c.h.b16 %v3241
    %v3849 = vunpack.c.l.b16 %v3242
    %v3850 = vunpack.c.h.b16 %v3242
    %v3851 = vunpack.c.l.b16 %v3243
    %v3852 = vunpack.c.h.b16 %v3243
    %v3853 = vunpack.c.l.b16 %v3244
    %v3854 = vunpack.c.l.b16 %v3245
    %v3855 = vunpack.c.h.b16 %v3245
    %v3856 = vunpack.c.l.b16 %v3246
    %v3857 = vunpack.c.h.b16 %v3246
    %v3858 = vunpack.c.l.b16 %v3247
    %v3859 = vunpack.c.h.b16 %v3247
    %v3860 = vunpack.c.l.b16 %v3248
    %v3861 = vunpack.c.l.b16 %v3249
    %v3862 = vunpack.c.h.b16 %v3249
    %v3863 = vunpack.c.l.b16 %v3250
    %v3864 = vunpack.c.h.b16 %v3250
    %v3865 = vunpack.c.l.b16 %v3251
    %v3866 = vunpack.c.h.b16 %v3251
    %v3867 = vunpack.c.l.b16 %v3252
    %v3868 = vunpack.c.l.b16 %v3253
    %v3869 = vunpack.c.h.b16 %v3253
    %v3870 = vunpack.c.l.b16 %v3254
    %v3871 = vunpack.c.h.b16 %v3254
    %v3872 = vunpack.c.l.b16 %v3255
    %v3873 = vunpack.c.h.b16 %v3255
    %v3874 = vunpack.c.l.b16 %v3256
    %v3875 = vunpack.c.l.b16 %v3257
    %v3876 = vunpack.c.h.b16 %v3257
    %v3877 = vunpack.c.l.b16 %v3258
    %v3878 = vunpack.c.h.b16 %v3258
    %v3879 = vunpack.c.l.b16 %v3259
    %v3880 = vunpack.c.h.b16 %v3259
    %v3881 = vunpack.c.l.b16 %v3260
    %v3882 = vunpack.c.l.b16 %v3261
    %v3883 = vunpack.c.h.b16 %v3261
    %v3884 = vunpack.c.l.b16 %v3262
    %v3885 = vunpack.c.h.b16 %v3262
    %v3886 = vunpack.c.l.b16 %v3263
    %v3887 = vunpack.c.h.b16 %v3263
    %v3888 = vunpack.c.l.b16 %v3264
    %v3889 = vunpack.c.l.b16 %v3265
    %v3890 = vunpack.c.h.b16 %v3265
    %v3891 = vunpack.c.l.b16 %v3266
    %v3892 = vunpack.c.h.b16 %v3266
    %v3893 = vunpack.c.l.b16 %v3267
    %v3894 = vunpack.c.h.b16 %v3267
    %v3895 = vunpack.c.l.b16 %v3268
    %v3896 = vunpack.c.l.b16 %v3269
    %v3897 = vunpack.c.h.b16 %v3269
    %v3898 = vunpack.c.l.b16 %v3270
    %v3899 = vunpack.c.h.b16 %v3270
    %v3900 = vunpack.c.l.b16 %v3271
    %v3901 = vunpack.c.h.b16 %v3271
    %v3902 = vunpack.c.l.b16 %v3272
    %v3903 = vunpack.c.l.b16 %v3273
    %v3904 = vunpack.c.h.b16 %v3273
    %v3905 = vunpack.c.l.b16 %v3274
    %v3906 = vunpack.c.h.b16 %v3274
    %v3907 = vunpack.c.l.b16 %v3275
    %v3908 = vunpack.c.h.b16 %v3275
    %v3909 = vunpack.c.l.b16 %v3276
    %v3910 = vunpack.c.l.b16 %v3277
    %v3911 = vunpack.c.h.b16 %v3277
    %v3912 = vunpack.c.l.b16 %v3278
    %v3913 = vunpack.c.h.b16 %v3278
    %v3914 = vunpack.c.l.b16 %v3279
    %v3915 = vunpack.c.h.b16 %v3279
    %v3916 = vunpack.c.l.b16 %v3280
    %v3917 = vunpack.c.l.b16 %v3281
    %v3918 = vunpack.c.h.b16 %v3281
    %v3919 = vunpack.c.l.b16 %v3282
    %v3920 = vunpack.c.h.b16 %v3282
    %v3921 = vunpack.c.l.b16 %v3283
    %v3922 = vunpack.c.h.b16 %v3283
    %v3923 = vunpack.c.l.b16 %v3284
    %v3924 = vunpack.c.l.b16 %v3285
    %v3925 = vunpack.c.h.b16 %v3285
    %v3926 = vunpack.c.l.b16 %v3286
    %v3927 = vunpack.c.h.b16 %v3286
    %v3928 = vunpack.c.l.b16 %v3287
    %v3929 = vunpack.c.h.b16 %v3287
    %v3930 = vunpack.c.l.b16 %v3288
    %v3931 = vunpack.c.l.b16 %v3289
    %v3932 = vunpack.c.h.b16 %v3289
    %v3933 = vunpack.c.l.b16 %v3290
    %v3934 = vunpack.c.h.b16 %v3290
    %v3935 = vunpack.c.l.b16 %v3291
    %v3936 = vunpack.c.h.b16 %v3291
    %v3937 = vunpack.c.l.b16 %v3292
    %v3938 = vunpack.c.l.b16 %v3293
    %v3939 = vunpack.c.h.b16 %v3293
    %v3940 = vunpack.c.l.b16 %v3294
    %v3941 = vunpack.c.h.b16 %v3294
    %v3942 = vunpack.c.l.b16 %v3295
    %v3943 = vunpack.c.h.b16 %v3295
    %v3944 = vunpack.c.l.b16 %v3296
    %v3945 = vunpack.c.l.b16 %v3297
    %v3946 = vunpack.c.h.b16 %v3297
    %v3947 = vunpack.c.l.b16 %v3298
    %v3948 = vunpack.c.h.b16 %v3298
    %v3949 = vunpack.c.l.b16 %v3299
    %v3950 = vunpack.c.h.b16 %v3299
    %v3951 = vunpack.c.l.b16 %v3300
    %v3952 = vunpack.c.l.b16 %v3301
    %v3953 = vunpack.c.h.b16 %v3301
    %v3954 = vunpack.c.l.b16 %v3302
    %v3955 = vunpack.c.h.b16 %v3302
    %v3956 = vunpack.c.l.b16 %v3303
    %v3957 = vunpack.c.h.b16 %v3303
    %v3958 = vunpack.c.l.b16 %v3304
    %v3959 = vunpack.c.l.b16 %v3305
    %v3960 = vunpack.c.h.b16 %v3305
    %v3961 = vunpack.c.l.b16 %v3306
    %v3962 = vunpack.c.h.b16 %v3306
    %v3963 = vunpack.c.l.b16 %v3307
    %v3964 = vunpack.c.h.b16 %v3307
    %v3965 = vunpack.c.l.b16 %v3308
    %v3966 = vunpack.c.l.b16 %v3309
    %v3967 = vunpack.c.h.b16 %v3309
    %v3968 = vunpack.c.l.b16 %v3310
    %v3969 = vunpack.c.h.b16 %v3310
    %v3970 = vunpack.c.l.b16 %v3311
    %v3971 = vunpack.c.h.b16 %v3311
    %v3972 = vunpack.c.l.b16 %v3312
    %v3973 = vunpack.c.l.b16 %v3313
    %v3974 = vunpack.c.h.b16 %v3313
    %v3975 = vunpack.c.l.b16 %v3314
    %v3976 = vunpack.c.h.b16 %v3314
    %v3977 = vunpack.c.l.b16 %v3315
    %v3978 = vunpack.c.h.b16 %v3315
    %v3979 = vunpack.c.l.b16 %v3316
    %v3980 = vunpack.c.l.b16 %v3317
    %v3981 = vunpack.c.h.b16 %v3317
    %v3982 = vunpack.c.l.b16 %v3318
    %v3983 = vunpack.c.h.b16 %v3318
    %v3984 = vunpack.c.l.b16 %v3319
    %v3985 = vunpack.c.h.b16 %v3319
    %v3986 = vunpack.c.l.b16 %v3320
    %v3987 = vunpack.c.l.b16 %v3321
    %v3988 = vunpack.c.h.b16 %v3321
    %v3989 = vunpack.c.l.b16 %v3322
    %v3990 = vunpack.c.h.b16 %v3322
    %v3991 = vunpack.c.l.b16 %v3323
    %v3992 = vunpack.c.h.b16 %v3323
    %v3993 = vunpack.c.l.b16 %v3324
    %v3994 = vunpack.c.l.b16 %v3325
    %v3995 = vunpack.c.h.b16 %v3325
    %v3996 = vunpack.c.l.b16 %v3326
    %v3997 = vunpack.c.h.b16 %v3326
    %v3998 = vunpack.c.l.b16 %v3327
    %v3999 = vunpack.c.h.b16 %v3327
    %v4000 = vunpack.c.l.b16 %v3328
    %v4001 = vunpack.c.l.b16 %v3329
    %v4002 = vunpack.c.h.b16 %v3329
    %v4003 = vunpack.c.l.b16 %v3330
    %v4004 = vunpack.c.h.b16 %v3330
    %v4005 = vunpack.c.l.b16 %v3331
    %v4006 = vunpack.c.h.b16 %v3331
    %v4007 = vunpack.c.l.b16 %v3332
    %v4008 = vunpack.c.l.b16 %v3333
    %v4009 = vunpack.c.h.b16 %v3333
    %v4010 = vunpack.c.l.b16 %v3334
    %v4011 = vunpack.c.h.b16 %v3334
    %v4012 = vunpack.c.l.b16 %v3335
    %v4013 = vunpack.c.h.b16 %v3335
    %v4014 = vunpack.c.l.b16 %v3336
    %v4015 = vunpack.c.l.b16 %v3337
    %v4016 = vunpack.c.h.b16 %v3337
    %v4017 = vunpack.c.l.b16 %v3338
    %v4018 = vunpack.c.h.b16 %v3338
    %v4019 = vunpack.c.l.b16 %v3339
    %v4020 = vunpack.c.h.b16 %v3339
    %v4021 = vunpack.c.l.b16 %v3340
    %v4022 = vunpack.c.l.b16 %v3341
    %v4023 = vunpack.c.h.b16 %v3341
    %v4024 = vunpack.c.l.b16 %v3342
    %v4025 = vunpack.c.h.b16 %v3342
    %v4026 = vunpack.c.l.b16 %v3343
    %v4027 = vunpack.c.h.b16 %v3343
    %v4028 = vunpack.c.l.b16 %v3344
    %v4029 = vunpack.c.l.b16 %v3345
    %v4030 = vunpack.c.h.b16 %v3345
    %v4031 = vunpack.c.l.b16 %v3346
    %v4032 = vunpack.c.h.b16 %v3346
    %v4033 = vunpack.c.l.b16 %v3347
    %v4034 = vunpack.c.h.b16 %v3347
    %v4035 = vunpack.c.l.b16 %v3348
    %v4036 = vunpack.c.l.b16 %v3349
    %v4037 = vunpack.c.h.b16 %v3349
    %v4038 = vunpack.c.l.b16 %v3350
    %v4039 = vunpack.c.h.b16 %v3350
    %v4040 = vunpack.c.l.b16 %v3351
    %v4041 = vunpack.c.h.b16 %v3351
    %v4042 = vunpack.c.l.b16 %v3352
    %v4043 = vunpack.c.l.b16 %v3353
    %v4044 = vunpack.c.h.b16 %v3353
    %v4045 = vunpack.c.l.b16 %v3354
    %v4046 = vunpack.c.h.b16 %v3354
    %v4047 = vunpack.c.l.b16 %v3355
    %v4048 = vunpack.c.h.b16 %v3355
    %v4049 = vunpack.c.l.b16 %v3356
    %v4050 = vunpack.c.l.b16 %v3357
    %v4051 = vunpack.c.h.b16 %v3357
    %v4052 = vunpack.c.l.b16 %v3358
    %v4053 = vunpack.c.h.b16 %v3358
    %v4054 = vunpack.c.l.b16 %v3359
    %v4055 = vunpack.c.h.b16 %v3359
    %v4056 = vunpack.c.l.b16 %v3360
    %v4057 = vunpack.c.l.b16 %v3361
    %v4058 = vunpack.c.h.b16 %v3361
    %v4059 = vunpack.c.l.b16 %v3362
    %v4060 = vunpack.c.h.b16 %v3362
    %v4061 = vunpack.c.l.b16 %v3363
    %v4062 = vunpack.c.h.b16 %v3363
    %v4063 = vunpack.c.l.b16 %v3364
    %v4064 = vunpack.c.l.b16 %v3365
    %v4065 = vunpack.c.h.b16 %v3365
    %v4066 = vunpack.c.l.b16 %v3366
    %v4067 = vunpack.c.h.b16 %v3366
    %v4068 = vunpack.c.l.b16 %v3367
    %v4069 = vunpack.c.h.b16 %v3367
    %v4070 = vunpack.c.l.b16 %v3368
    %v4071 = vunpack.c.l.b16 %v3369
    %v4072 = vunpack.c.h.b16 %v3369
    %v4073 = vunpack.c.l.b16 %v3370
    %v4074 = vunpack.c.h.b16 %v3370
    %v4075 = vunpack.c.l.b16 %v3371
    %v4076 = vunpack.c.h.b16 %v3371
    %v4077 = vunpack.c.l.b16 %v3372
    %v4078 = vunpack.c.l.b16 %v3373
    %v4079 = vunpack.c.h.b16 %v3373
    %v4080 = vunpack.c.l.b16 %v3374
    %v4081 = vunpack.c.h.b16 %v3374
    %v4082 = vunpack.c.l.b16 %v3375
    %v4083 = vunpack.c.h.b16 %v3375
    %v4084 = vunpack.c.l.b16 %v3376
    %v4085 = vunpack.c.l.b16 %v3377
    %v4086 = vunpack.c.h.b16 %v3377
    %v4087 = vunpack.c.l.b16 %v3378
    %v4088 = vunpack.c.h.b16 %v3378
    %v4089 = vunpack.c.l.b16 %v3379
    %v4090 = vunpack.c.h.b16 %v3379
    %v4091 = vunpack.c.l.b16 %v3380
    %v4092 = vunpack.c.l.b16 %v3381
    %v4093 = vunpack.c.h.b16 %v3381
    %v4094 = vunpack.c.l.b16 %v3382
    %v4095 = vunpack.c.h.b16 %v3382
    %v4096 = vunpack.c.l.b16 %v3383
    %v4097 = vunpack.c.h.b16 %v3383
    %v4098 = vunpack.c.l.b16 %v3384
    %v4099 = vunpack.c.l.b16 %v3385
    %v4100 = vunpack.c.h.b16 %v3385
    %v4101 = vunpack.c.l.b16 %v3386
    %v4102 = vunpack.c.h.b16 %v3386
    %v4103 = vunpack.c.l.b16 %v3387
    %v4104 = vunpack.c.h.b16 %v3387
    %v4105 = vunpack.c.l.b16 %v3388
    %v4106 = vunpack.c.l.b16 %v3389
    %v4107 = vunpack.c.h.b16 %v3389
    %v4108 = vunpack.c.l.b16 %v3390
    %v4109 = vunpack.c.h.b16 %v3390
    %v4110 = vunpack.c.l.b16 %v3391
    %v4111 = vunpack.c.h.b16 %v3391
    %v4112 = vunpack.c.l.b16 %v3392
    %v4113 = vunpack.c.l.b16 %v3393
    %v4114 = vunpack.c.h.b16 %v3393
    %v4115 = vunpack.c.l.b16 %v3394
    %v4116 = vunpack.c.h.b16 %v3394
    %v4117 = vunpack.c.l.b16 %v3395
    %v4118 = vunpack.c.h.b16 %v3395
    %v4119 = vunpack.c.l.b16 %v3396
    %v4120 = vunpack.c.l.b16 %v3397
    %v4121 = vunpack.c.h.b16 %v3397
    %v4122 = vunpack.c.l.b16 %v3398
    %v4123 = vunpack.c.h.b16 %v3398
    %v4124 = vunpack.c.l.b16 %v3399
    %v4125 = vunpack.c.h.b16 %v3399
    %v4126 = vunpack.c.l.b16 %v3400
    %v4127 = vunpack.c.l.b16 %v3401
    %v4128 = vunpack.c.h.b16 %v3401
    %v4129 = vunpack.c.l.b16 %v3402
    %v4130 = vunpack.c.h.b16 %v3402
    %v4131 = vunpack.c.l.b16 %v3403
    %v4132 = vunpack.c.h.b16 %v3403
    %v4133 = vunpack.c.l.b16 %v3404
    %v4134 = vunpack.c.l.b16 %v3405
    %v4135 = vunpack.c.h.b16 %v3405
    %v4136 = vunpack.c.l.b16 %v3406
    %v4137 = vunpack.c.h.b16 %v3406
    %v4138 = vunpack.c.l.b16 %v3407
    %v4139 = vunpack.c.h.b16 %v3407
    %v4140 = vunpack.c.l.b16 %v3408
    %v4141 = vunpack.c.l.b16 %v3409
    %v4142 = vunpack.c.h.b16 %v3409
    %v4143 = vunpack.c.l.b16 %v3410
    %v4144 = vunpack.c.h.b16 %v3410
    %v4145 = vunpack.c.l.b16 %v3411
    %v4146 = vunpack.c.h.b16 %v3411
    %v4147 = vunpack.c.l.b16 %v3412
    %v4148 = vunpack.c.l.b16 %v3413
    %v4149 = vunpack.c.h.b16 %v3413
    %v4150 = vunpack.c.l.b16 %v3414
    %v4151 = vunpack.c.h.b16 %v3414
    %v4152 = vunpack.c.l.b16 %v3415
    %v4153 = vunpack.c.h.b16 %v3415
    %v4154 = vunpack.c.l.b16 %v3416
    %v4155 = vunpack.c.l.b16 %v3417
    %v4156 = vunpack.c.h.b16 %v3417
    %v4157 = vunpack.c.l.b16 %v3418
    %v4158 = vunpack.c.h.b16 %v3418
    %v4159 = vunpack.c.l.b16 %v3419
    %v4160 = vunpack.c.h.b16 %v3419
    %v4161 = vunpack.c.l.b16 %v3420
    %v4162 = vpack.c.b16 %v3721, %v3714
    %v4163 = vpack.c.b16 %v3722, %v3715
    %v4164 = vpack.c.b16 %v3723, %v3716
    %v4165 = vpack.c.b16 %v3724, %v3717
    %v4166 = vpack.c.b16 %v3725, %v3718
    %v4167 = vpack.c.b16 %v3726, %v3719
    %v4168 = vpack.c.b16 %v3727, %v3720
    %v4169 = vpack.c.b16 %v3735, %v3728
    %v4170 = vpack.c.b16 %v3736, %v3729
    %v4171 = vpack.c.b16 %v3737, %v3730
    %v4172 = vpack.c.b16 %v3738, %v3731
    %v4173 = vpack.c.b16 %v3739, %v3732
    %v4174 = vpack.c.b16 %v3740, %v3733
    %v4175 = vpack.c.b16 %v3741, %v3734
    %v4176 = vpack.c.b16 %v3749, %v3742
    %v4177 = vpack.c.b16 %v3750, %v3743
    %v4178 = vpack.c.b16 %v3751, %v3744
    %v4179 = vpack.c.b16 %v3752, %v3745
    %v4180 = vpack.c.b16 %v3753, %v3746
    %v4181 = vpack.c.b16 %v3754, %v3747
    %v4182 = vpack.c.b16 %v3755, %v3748
    %v4183 = vpack.c.b16 %v3763, %v3756
    %v4184 = vpack.c.b16 %v3764, %v3757
    %v4185 = vpack.c.b16 %v3765, %v3758
    %v4186 = vpack.c.b16 %v3766, %v3759
    %v4187 = vpack.c.b16 %v3767, %v3760
    %v4188 = vpack.c.b16 %v3768, %v3761
    %v4189 = vpack.c.b16 %v3769, %v3762
    %v4190 = vpack.c.b16 %v3777, %v3770
    %v4191 = vpack.c.b16 %v3778, %v3771
    %v4192 = vpack.c.b16 %v3779, %v3772
    %v4193 = vpack.c.b16 %v3780, %v3773
    %v4194 = vpack.c.b16 %v3781, %v3774
    %v4195 = vpack.c.b16 %v3782, %v3775
    %v4196 = vpack.c.b16 %v3783, %v3776
    %v4197 = vpack.c.b16 %v3791, %v3784
    %v4198 = vpack.c.b16 %v3792, %v3785
    %v4199 = vpack.c.b16 %v3793, %v3786
    %v4200 = vpack.c.b16 %v3794, %v3787
    %v4201 = vpack.c.b16 %v3795, %v3788
    %v4202 = vpack.c.b16 %v3796, %v3789
    %v4203 = vpack.c.b16 %v3797, %v3790
    %v4204 = vpack.c.b16 %v3805, %v3798
    %v4205 = vpack.c.b16 %v3806, %v3799
    %v4206 = vpack.c.b16 %v3807, %v3800
    %v4207 = vpack.c.b16 %v3808, %v3801
    %v4208 = vpack.c.b16 %v3809, %v3802
    %v4209 = vpack.c.b16 %v3810, %v3803
    %v4210 = vpack.c.b16 %v3811, %v3804
    %v4211 = vpack.c.b16 %v3819, %v3812
    %v4212 = vpack.c.b16 %v3820, %v3813
    %v4213 = vpack.c.b16 %v3821, %v3814
    %v4214 = vpack.c.b16 %v3822, %v3815
    %v4215 = vpack.c.b16 %v3823, %v3816
    %v4216 = vpack.c.b16 %v3824, %v3817
    %v4217 = vpack.c.b16 %v3825, %v3818
    %v4218 = vpack.c.b16 %v3833, %v3826
    %v4219 = vpack.c.b16 %v3834, %v3827
    %v4220 = vpack.c.b16 %v3835, %v3828
    %v4221 = vpack.c.b16 %v3836, %v3829
    %v4222 = vpack.c.b16 %v3837, %v3830
    %v4223 = vpack.c.b16 %v3838, %v3831
    %v4224 = vpack.c.b16 %v3839, %v3832
    %v4225 = vpack.c.b16 %v3847, %v3840
    %v4226 = vpack.c.b16 %v3848, %v3841
    %v4227 = vpack.c.b16 %v3849, %v3842
    %v4228 = vpack.c.b16 %v3850, %v3843
    %v4229 = vpack.c.b16 %v3851, %v3844
    %v4230 = vpack.c.b16 %v3852, %v3845
    %v4231 = vpack.c.b16 %v3853, %v3846
    %v4232 = vpack.c.b16 %v3861, %v3854
    %v4233 = vpack.c.b16 %v3862, %v3855
    %v4234 = vpack.c.b16 %v3863, %v3856
    %v4235 = vpack.c.b16 %v3864, %v3857
    %v4236 = vpack.c.b16 %v3865, %v3858
    %v4237 = vpack.c.b16 %v3866, %v3859
    %v4238 = vpack.c.b16 %v3867, %v3860
    %v4239 = vpack.c.b16 %v3875, %v3868
    %v4240 = vpack.c.b16 %v3876, %v3869
    %v4241 = vpack.c.b16 %v3877, %v3870
    %v4242 = vpack.c.b16 %v3878, %v3871
    %v4243 = vpack.c.b16 %v3879, %v3872
    %v4244 = vpack.c.b16 %v3880, %v3873
    %v4245 = vpack.c.b16 %v3881, %v3874
    %v4246 = vpack.c.b16 %v3889, %v3882
    %v4247 = vpack.c.b16 %v3890, %v3883
    %v4248 = vpack.c.b16 %v3891, %v3884
    %v4249 = vpack.c.b16 %v3892, %v3885
    %v4250 = vpack.c.b16 %v3893, %v3886
    %v4251 = vpack.c.b16 %v3894, %v3887
    %v4252 = vpack.c.b16 %v3895, %v3888
    %v4253 = vpack.c.b16 %v3903, %v3896
    %v4254 = vpack.c.b16 %v3904, %v3897
    %v4255 = vpack.c.b16 %v3905, %v3898
    %v4256 = vpack.c.b16 %v3906, %v3899
    %v4257 = vpack.c.b16 %v3907, %v3900
    %v4258 = vpack.c.b16 %v3908, %v3901
    %v4259 = vpack.c.b16 %v3909, %v3902
    %v4260 = vpack.c.b16 %v3917, %v3910
    %v4261 = vpack.c.b16 %v3918, %v3911
    %v4262 = vpack.c.b16 %v3919, %v3912
    %v4263 = vpack.c.b16 %v3920, %v3913
    %v4264 = vpack.c.b16 %v3921, %v3914
    %v4265 = vpack.c.b16 %v3922, %v3915
    %v4266 = vpack.c.b16 %v3923, %v3916
    %v4267 = vpack.c.b16 %v3931, %v3924
    %v4268 = vpack.c.b16 %v3932, %v3925
    %v4269 = vpack.c.b16 %v3933, %v3926
    %v4270 = vpack.c.b16 %v3934, %v3927
    %v4271 = vpack.c.b16 %v3935, %v3928
    %v4272 = vpack.c.b16 %v3936, %v3929
    %v4273 = vpack.c.b16 %v3937, %v3930
    %v4274 = vpack.c.b16 %v3945, %v3938
    %v4275 = vpack.c.b16 %v3946, %v3939
    %v4276 = vpack.c.b16 %v3947, %v3940
    %v4277 = vpack.c.b16 %v3948, %v3941
    %v4278 = vpack.c.b16 %v3949, %v3942
    %v4279 = vpack.c.b16 %v3950, %v3943
    %v4280 = vpack.c.b16 %v3951, %v3944
    %v4281 = vpack.c.b16 %v3959, %v3952
    %v4282 = vpack.c.b16 %v3960, %v3953
    %v4283 = vpack.c.b16 %v3961, %v3954
    %v4284 = vpack.c.b16 %v3962, %v3955
    %v4285 = vpack.c.b16 %v3963, %v3956
    %v4286 = vpack.c.b16 %v3964, %v3957
    %v4287 = vpack.c.b16 %v3965, %v3958
    %v4288 = vpack.c.b16 %v3973, %v3966
    %v4289 = vpack.c.b16 %v3974, %v3967
    %v4290 = vpack.c.b16 %v3975, %v3968
    %v4291 = vpack.c.b16 %v3976, %v3969
    %v4292 = vpack.c.b16 %v3977, %v3970
    %v4293 = vpack.c.b16 %v3978, %v3971
    %v4294 = vpack.c.b16 %v3979, %v3972
    %v4295 = vpack.c.b16 %v3987, %v3980
    %v4296 = vpack.c.b16 %v3988, %v3981
    %v4297 = vpack.c.b16 %v3989, %v3982
    %v4298 = vpack.c.b16 %v3990, %v3983
    %v4299 = vpack.c.b16 %v3991, %v3984
    %v4300 = vpack.c.b16 %v3992, %v3985
    %v4301 = vpack.c.b16 %v3993, %v3986
    %v4302 = vpack.c.b16 %v4001, %v3994
    %v4303 = vpack.c.b16 %v4002, %v3995
    %v4304 = vpack.c.b16 %v4003, %v3996
    %v4305 = vpack.c.b16 %v4004, %v3997
    %v4306 = vpack.c.b16 %v4005, %v3998
    %v4307 = vpack.c.b16 %v4006, %v3999
    %v4308 = vpack.c.b16 %v4007, %v4000
    %v4309 = vpack.c.b16 %v4015, %v4008
    %v4310 = vpack.c.b16 %v4016, %v4009
    %v4311 = vpack.c.b16 %v4017, %v4010
    %v4312 = vpack.c.b16 %v4018, %v4011
    %v4313 = vpack.c.b16 %v4019, %v4012
    %v4314 = vpack.c.b16 %v4020, %v4013
    %v4315 = vpack.c.b16 %v4021, %v4014
    %v4316 = vpack.c.b16 %v4029, %v4022
    %v4317 = vpack.c.b16 %v4030, %v4023
    %v4318 = vpack.c.b16 %v4031, %v4024
    %v4319 = vpack.c.b16 %v4032, %v4025
    %v4320 = vpack.c.b16 %v4033, %v4026
    %v4321 = vpack.c.b16 %v4034, %v4027
    %v4322 = vpack.c.b16 %v4035, %v4028
    %v4323 = vpack.c.b16 %v4043, %v4036
    %v4324 = vpack.c.b16 %v4044, %v4037
    %v4325 = vpack.c.b16 %v4045, %v4038
    %v4326 = vpack.c.b16 %v4046, %v4039
    %v4327 = vpack.c.b16 %v4047, %v4040
    %v4328 = vpack.c.b16 %v4048, %v4041
    %v4329 = vpack.c.b16 %v4049, %v4042
    %v4330 = vpack.c.b16 %v4057, %v4050
    %v4331 = vpack.c.b16 %v4058, %v4051
    %v4332 = vpack.c.b16 %v4059, %v4052
    %v4333 = vpack.c.b16 %v4060, %v4053
    %v4334 = vpack.c.b16 %v4061, %v4054
    %v4335 = vpack.c.b16 %v4062, %v4055
    %v4336 = vpack.c.b16 %v4063, %v4056
    %v4337 = vpack.c.b16 %v4071, %v4064
    %v4338 = vpack.c.b16 %v4072, %v4065
    %v4339 = vpack.c.b16 %v4073, %v4066
    %v4340 = vpack.c.b16 %v4074, %v4067
    %v4341 = vpack.c.b16 %v4075, %v4068
    %v4342 = vpack.c.b16 %v4076, %v4069
    %v4343 = vpack.c.b16 %v4077, %v4070
    %v4344 = vpack.c.b16 %v4085, %v4078
    %v4345 = vpack.c.b16 %v4086, %v4079
    %v4346 = vpack.c.b16 %v4087, %v4080
    %v4347 = vpack.c.b16 %v4088, %v4081
    %v4348 = vpack.c.b16 %v4089, %v4082
    %v4349 = vpack.c.b16 %v4090, %v4083
    %v4350 = vpack.c.b16 %v4091, %v4084
    %v4351 = vpack.c.b16 %v4099, %v4092
    %v4352 = vpack.c.b16 %v4100, %v4093
    %v4353 = vpack.c.b16 %v4101, %v4094
    %v4354 = vpack.c.b16 %v4102, %v4095
    %v4355 = vpack.c.b16 %v4103, %v4096
    %v4356 = vpack.c.b16 %v4104, %v4097
    %v4357 = vpack.c.b16 %v4105, %v4098
    %v4358 = vpack.c.b16 %v4113, %v4106
    %v4359 = vpack.c.b16 %v4114, %v4107
    %v4360 = vpack.c.b16 %v4115, %v4108
    %v4361 = vpack.c.b16 %v4116, %v4109
    %v4362 = vpack.c.b16 %v4117, %v4110
    %v4363 = vpack.c.b16 %v4118, %v4111
    %v4364 = vpack.c.b16 %v4119, %v4112
    %v4365 = vpack.c.b16 %v4127, %v4120
    %v4366 = vpack.c.b16 %v4128, %v4121
    %v4367 = vpack.c.b16 %v4129, %v4122
    %v4368 = vpack.c.b16 %v4130, %v4123
    %v4369 = vpack.c.b16 %v4131, %v4124
    %v4370 = vpack.c.b16 %v4132, %v4125
    %v4371 = vpack.c.b16 %v4133, %v4126
    %v4372 = vpack.c.b16 %v4141, %v4134
    %v4373 = vpack.c.b16 %v4142, %v4135
    %v4374 = vpack.c.b16 %v4143, %v4136
    %v4375 = vpack.c.b16 %v4144, %v4137
    %v4376 = vpack.c.b16 %v4145, %v4138
    %v4377 = vpack.c.b16 %v4146, %v4139
    %v4378 = vpack.c.b16 %v4147, %v4140
    %v4379 = vpack.c.b16 %v4155, %v4148
    %v4380 = vpack.c.b16 %v4156, %v4149
    %v4381 = vpack.c.b16 %v4157, %v4150
    %v4382 = vpack.c.b16 %v4158, %v4151
    %v4383 = vpack.c.b16 %v4159, %v4152
    %v4384 = vpack.c.b16 %v4160, %v4153
    %v4385 = vpack.c.b16 %v4161, %v4154
    %4610 = vmatprep.subr.bf16.mxu0 %v4212
    %4611 = vmatpush1.bf16.msra.mxu0 %v4211
    %4612 = vmatprep.subr.bf16.mxu0 %v4205
    %4613 = vmatpush1.bf16.msra.mxu0 %v4204
    %4614 = vmatprep.subr.bf16.mxu0 %v4198
    %4615 = vmatpush1.bf16.msra.mxu0 %v4197
    %4616 = vmatprep.subr.bf16.mxu0 %v4191
    %4617 = vmatpush1.bf16.msra.mxu0 %v4190
    %4618 = vmatprep.subr.bf16.mxu0 %v4184
    %4619 = vmatpush1.bf16.msra.mxu0 %v4183
    %4620 = vmatprep.subr.bf16.mxu0 %v4177
    %4621 = vmatpush1.bf16.msra.mxu0 %v4176
    %4622 = vmatprep.subr.bf16.mxu0 %v4170
    %4623 = vmatpush1.bf16.msra.mxu0 %v4169
    %4624 = vmatprep.subr.bf16.mxu0 %v4163
    %4625 = vmatpush1.bf16.msra.mxu0 %v4162
    %4626 = vmatprep.subr.bf16.mxu0 %v4268
    %4627 = vmatpush2.bf16.msra.mxu0 %v4267
    %4628 = vmatprep.subr.bf16.mxu0 %v4261
    %4629 = vmatpush2.bf16.msra.mxu0 %v4260
    %4630 = vmatprep.subr.bf16.mxu0 %v4254
    %4631 = vmatpush2.bf16.msra.mxu0 %v4253
    %4632 = vmatprep.subr.bf16.mxu0 %v4247
    %4633 = vmatpush2.bf16.msra.mxu0 %v4246
    %4634 = vmatprep.subr.bf16.mxu0 %v4240
    %4635 = vmatpush2.bf16.msra.mxu0 %v4239
    %4636 = vmatprep.subr.bf16.mxu0 %v4233
    %4637 = vmatpush2.bf16.msra.mxu0 %v4232
    %4638 = vmatprep.subr.bf16.mxu0 %v4226
    %4639 = vmatpush2.bf16.msra.mxu0 %v4225
    %4640 = vmatprep.subr.bf16.mxu0 %v4219
    %4641 = vmatpush2.bf16.msra.mxu0 %v4218
    %4642 = vmatprep.mubr.bf16.mxu0 %v3162
    %4643 = vmatmul.mubr.bf16.gmra.mxu0 %v3161
    %v4644 = vpop.f32.mrf.mxu0
    %v4645 = vadd.f32 %v3426, %v4644
    %v4646 = vpop.f32.mrf.mxu0
    %v4647 = vadd.f32 %v3430, %v4646
    %v4648 = vpop.f32.mrf.mxu0
    %v4649 = vadd.f32 %v3426, %v4648
    %v4650 = vpop.f32.mrf.mxu0
    %v4651 = vadd.f32 %v3430, %v4650
    %4652 = vdwg.mxu0
    %4653 = vmatprep.subr.bf16.mxu0 %v4324
    %4654 = vmatpush1.bf16.msra.mxu0 %v4323
    %4655 = vmatprep.subr.bf16.mxu0 %v4317
    %4656 = vmatpush1.bf16.msra.mxu0 %v4316
    %4657 = vmatprep.subr.bf16.mxu0 %v4310
    %4658 = vmatpush1.bf16.msra.mxu0 %v4309
    %4659 = vmatprep.subr.bf16.mxu0 %v4303
    %4660 = vmatpush1.bf16.msra.mxu0 %v4302
    %4661 = vmatprep.subr.bf16.mxu0 %v4296
    %4662 = vmatpush1.bf16.msra.mxu0 %v4295
    %4663 = vmatprep.subr.bf16.mxu0 %v4289
    %4664 = vmatpush1.bf16.msra.mxu0 %v4288
    %4665 = vmatprep.subr.bf16.mxu0 %v4282
    %4666 = vmatpush1.bf16.msra.mxu0 %v4281
    %4667 = vmatprep.subr.bf16.mxu0 %v4275
    %4668 = vmatpush1.bf16.msra.mxu0 %v4274
    %4669 = vmatprep.subr.bf16.mxu0 %v4380
    %4670 = vmatpush2.bf16.msra.mxu0 %v4379
    %4671 = vmatprep.subr.bf16.mxu0 %v4373
    %4672 = vmatpush2.bf16.msra.mxu0 %v4372
    %4673 = vmatprep.subr.bf16.mxu0 %v4366
    %4674 = vmatpush2.bf16.msra.mxu0 %v4365
    %4675 = vmatprep.subr.bf16.mxu0 %v4359
    %4676 = vmatpush2.bf16.msra.mxu0 %v4358
    %4677 = vmatprep.subr.bf16.mxu0 %v4352
    %4678 = vmatpush2.bf16.msra.mxu0 %v4351
    %4679 = vmatprep.subr.bf16.mxu0 %v4345
    %4680 = vmatpush2.bf16.msra.mxu0 %v4344
    %4681 = vmatprep.subr.bf16.mxu0 %v4338
    %4682 = vmatpush2.bf16.msra.mxu0 %v4337
    %4683 = vmatprep.subr.bf16.mxu0 %v4331
    %4684 = vmatpush2.bf16.msra.mxu0 %v4330
    %4685 = vmatprep.mubr.bf16.mxu0 %v3164
    %4686 = vmatmul.mubr.bf16.gmra.mxu0 %v3163
    %v4687 = vpop.f32.mrf.mxu0
    %v4688 = vadd.f32 %v4645, %v4687
    %v4689 = vpop.f32.mrf.mxu0
    %v4690 = vadd.f32 %v4647, %v4689
    %v4691 = vpop.f32.mrf.mxu0
    %v4692 = vadd.f32 %v4649, %v4691
    %v4693 = vpop.f32.mrf.mxu0
    %v4694 = vadd.f32 %v4651, %v4693
    %4695 = vdwg.mxu0
    %4696 = vmatprep.subr.bf16.mxu0 %v4214
    %4697 = vmatpush1.bf16.msra.mxu0 %v4213
    %4698 = vmatprep.subr.bf16.mxu0 %v4207
    %4699 = vmatpush1.bf16.msra.mxu0 %v4206
    %4700 = vmatprep.subr.bf16.mxu0 %v4200
    %4701 = vmatpush1.bf16.msra.mxu0 %v4199
    %4702 = vmatprep.subr.bf16.mxu0 %v4193
    %4703 = vmatpush1.bf16.msra.mxu0 %v4192
    %4704 = vmatprep.subr.bf16.mxu0 %v4186
    %4705 = vmatpush1.bf16.msra.mxu0 %v4185
    %4706 = vmatprep.subr.bf16.mxu0 %v4179
    %4707 = vmatpush1.bf16.msra.mxu0 %v4178
    %4708 = vmatprep.subr.bf16.mxu0 %v4172
    %4709 = vmatpush1.bf16.msra.mxu0 %v4171
    %4710 = vmatprep.subr.bf16.mxu0 %v4165
    %4711 = vmatpush1.bf16.msra.mxu0 %v4164
    %4712 = vmatprep.subr.bf16.mxu0 %v4270
    %4713 = vmatpush2.bf16.msra.mxu0 %v4269
    %4714 = vmatprep.subr.bf16.mxu0 %v4263
    %4715 = vmatpush2.bf16.msra.mxu0 %v4262
    %4716 = vmatprep.subr.bf16.mxu0 %v4256
    %4717 = vmatpush2.bf16.msra.mxu0 %v4255
    %4718 = vmatprep.subr.bf16.mxu0 %v4249
    %4719 = vmatpush2.bf16.msra.mxu0 %v4248
    %4720 = vmatprep.subr.bf16.mxu0 %v4242
    %4721 = vmatpush2.bf16.msra.mxu0 %v4241
    %4722 = vmatprep.subr.bf16.mxu0 %v4235
    %4723 = vmatpush2.bf16.msra.mxu0 %v4234
    %4724 = vmatprep.subr.bf16.mxu0 %v4228
    %4725 = vmatpush2.bf16.msra.mxu0 %v4227
    %4726 = vmatprep.subr.bf16.mxu0 %v4221
    %4727 = vmatpush2.bf16.msra.mxu0 %v4220
    %4728 = vmatprep.mubr.bf16.mxu0 %v3162
    %4729 = vmatmul.mubr.bf16.gmra.mxu0 %v3161
    %v4730 = vpop.f32.mrf.mxu0
    %v4731 = vadd.f32 %v3434, %v4730
    %v4732 = vpop.f32.mrf.mxu0
    %v4733 = vadd.f32 %v3438, %v4732
    %v4734 = vpop.f32.mrf.mxu0
    %v4735 = vadd.f32 %v3434, %v4734
    %v4736 = vpop.f32.mrf.mxu0
    %v4737 = vadd.f32 %v3438, %v4736
    %4738 = vdwg.mxu0
    %4739 = vmatprep.subr.bf16.mxu0 %v4326
    %4740 = vmatpush1.bf16.msra.mxu0 %v4325
    %4741 = vmatprep.subr.bf16.mxu0 %v4319
    %4742 = vmatpush1.bf16.msra.mxu0 %v4318
    %4743 = vmatprep.subr.bf16.mxu0 %v4312
    %4744 = vmatpush1.bf16.msra.mxu0 %v4311
    %4745 = vmatprep.subr.bf16.mxu0 %v4305
    %4746 = vmatpush1.bf16.msra.mxu0 %v4304
    %4747 = vmatprep.subr.bf16.mxu0 %v4298
    %4748 = vmatpush1.bf16.msra.mxu0 %v4297
    %4749 = vmatprep.subr.bf16.mxu0 %v4291
    %4750 = vmatpush1.bf16.msra.mxu0 %v4290
    %4751 = vmatprep.subr.bf16.mxu0 %v4284
    %4752 = vmatpush1.bf16.msra.mxu0 %v4283
    %4753 = vmatprep.subr.bf16.mxu0 %v4277
    %4754 = vmatpush1.bf16.msra.mxu0 %v4276
    %4755 = vmatprep.subr.bf16.mxu0 %v4382
    %4756 = vmatpush2.bf16.msra.mxu0 %v4381
    %4757 = vmatprep.subr.bf16.mxu0 %v4375
    %4758 = vmatpush2.bf16.msra.mxu0 %v4374
    %4759 = vmatprep.subr.bf16.mxu0 %v4368
    %4760 = vmatpush2.bf16.msra.mxu0 %v4367
    %4761 = vmatprep.subr.bf16.mxu0 %v4361
    %4762 = vmatpush2.bf16.msra.mxu0 %v4360
    %4763 = vmatprep.subr.bf16.mxu0 %v4354
    %4764 = vmatpush2.bf16.msra.mxu0 %v4353
    %4765 = vmatprep.subr.bf16.mxu0 %v4347
    %4766 = vmatpush2.bf16.msra.mxu0 %v4346
    %4767 = vmatprep.subr.bf16.mxu0 %v4340
    %4768 = vmatpush2.bf16.msra.mxu0 %v4339
    %4769 = vmatprep.subr.bf16.mxu0 %v4333
    %4770 = vmatpush2.bf16.msra.mxu0 %v4332
    %4771 = vmatprep.mubr.bf16.mxu0 %v3164
    %4772 = vmatmul.mubr.bf16.gmra.mxu0 %v3163
    %v4773 = vpop.f32.mrf.mxu0
    %v4774 = vadd.f32 %v4731, %v4773
    %v4775 = vpop.f32.mrf.mxu0
    %v4776 = vadd.f32 %v4733, %v4775
    %v4777 = vpop.f32.mrf.mxu0
    %v4778 = vadd.f32 %v4735, %v4777
    %v4779 = vpop.f32.mrf.mxu0
    %v4780 = vadd.f32 %v4737, %v4779
    %4781 = vdwg.mxu0
    %4782 = vmatprep.subr.bf16.mxu0 %v4216
    %4783 = vmatpush1.bf16.msra.mxu0 %v4215
    %4784 = vmatprep.subr.bf16.mxu0 %v4209
    %4785 = vmatpush1.bf16.msra.mxu0 %v4208
    %4786 = vmatprep.subr.bf16.mxu0 %v4202
    %4787 = vmatpush1.bf16.msra.mxu0 %v4201
    %4788 = vmatprep.subr.bf16.mxu0 %v4195
    %4789 = vmatpush1.bf16.msra.mxu0 %v4194
    %4790 = vmatprep.subr.bf16.mxu0 %v4188
    %4791 = vmatpush1.bf16.msra.mxu0 %v4187
    %4792 = vmatprep.subr.bf16.mxu0 %v4181
    %4793 = vmatpush1.bf16.msra.mxu0 %v4180
    %4794 = vmatprep.subr.bf16.mxu0 %v4174
    %4795 = vmatpush1.bf16.msra.mxu0 %v4173
    %4796 = vmatprep.subr.bf16.mxu0 %v4167
    %4797 = vmatpush1.bf16.msra.mxu0 %v4166
    %4798 = vmatprep.subr.bf16.mxu0 %v4272
    %4799 = vmatpush2.bf16.msra.mxu0 %v4271
    %4800 = vmatprep.subr.bf16.mxu0 %v4265
    %4801 = vmatpush2.bf16.msra.mxu0 %v4264
    %4802 = vmatprep.subr.bf16.mxu0 %v4258
    %4803 = vmatpush2.bf16.msra.mxu0 %v4257
    %4804 = vmatprep.subr.bf16.mxu0 %v4251
    %4805 = vmatpush2.bf16.msra.mxu0 %v4250
    %4806 = vmatprep.subr.bf16.mxu0 %v4244
    %4807 = vmatpush2.bf16.msra.mxu0 %v4243
    %4808 = vmatprep.subr.bf16.mxu0 %v4237
    %4809 = vmatpush2.bf16.msra.mxu0 %v4236
    %4810 = vmatprep.subr.bf16.mxu0 %v4230
    %4811 = vmatpush2.bf16.msra.mxu0 %v4229
    %4812 = vmatprep.subr.bf16.mxu0 %v4223
    %4813 = vmatpush2.bf16.msra.mxu0 %v4222
    %4814 = vmatprep.mubr.bf16.mxu0 %v3162
    %4815 = vmatmul.mubr.bf16.gmra.mxu0 %v3161
    %v4816 = vpop.f32.mrf.mxu0
    %v4817 = vadd.f32 %v3442, %v4816
    %v4818 = vpop.f32.mrf.mxu0
    %v4819 = vadd.f32 %v3446, %v4818
    %v4820 = vpop.f32.mrf.mxu0
    %v4821 = vadd.f32 %v3442, %v4820
    %v4822 = vpop.f32.mrf.mxu0
    %v4823 = vadd.f32 %v3446, %v4822
    %4824 = vdwg.mxu0
    %4825 = vmatprep.subr.bf16.mxu0 %v4328
    %4826 = vmatpush1.bf16.msra.mxu0 %v4327
    %4827 = vmatprep.subr.bf16.mxu0 %v4321
    %4828 = vmatpush1.bf16.msra.mxu0 %v4320
    %4829 = vmatprep.subr.bf16.mxu0 %v4314
    %4830 = vmatpush1.bf16.msra.mxu0 %v4313
    %4831 = vmatprep.subr.bf16.mxu0 %v4307
    %4832 = vmatpush1.bf16.msra.mxu0 %v4306
    %4833 = vmatprep.subr.bf16.mxu0 %v4300
    %4834 = vmatpush1.bf16.msra.mxu0 %v4299
    %4835 = vmatprep.subr.bf16.mxu0 %v4293
    %4836 = vmatpush1.bf16.msra.mxu0 %v4292
    %4837 = vmatprep.subr.bf16.mxu0 %v4286
    %4838 = vmatpush1.bf16.msra.mxu0 %v4285
    %4839 = vmatprep.subr.bf16.mxu0 %v4279
    %4840 = vmatpush1.bf16.msra.mxu0 %v4278
    %4841 = vmatprep.subr.bf16.mxu0 %v4384
    %4842 = vmatpush2.bf16.msra.mxu0 %v4383
    %4843 = vmatprep.subr.bf16.mxu0 %v4377
    %4844 = vmatpush2.bf16.msra.mxu0 %v4376
    %4845 = vmatprep.subr.bf16.mxu0 %v4370
    %4846 = vmatpush2.bf16.msra.mxu0 %v4369
    %4847 = vmatprep.subr.bf16.mxu0 %v4363
    %4848 = vmatpush2.bf16.msra.mxu0 %v4362
    %4849 = vmatprep.subr.bf16.mxu0 %v4356
    %4850 = vmatpush2.bf16.msra.mxu0 %v4355
    %4851 = vmatprep.subr.bf16.mxu0 %v4349
    %4852 = vmatpush2.bf16.msra.mxu0 %v4348
    %4853 = vmatprep.subr.bf16.mxu0 %v4342
    %4854 = vmatpush2.bf16.msra.mxu0 %v4341
    %4855 = vmatprep.subr.bf16.mxu0 %v4335
    %4856 = vmatpush2.bf16.msra.mxu0 %v4334
    %4857 = vmatprep.mubr.bf16.mxu0 %v3164
    %4858 = vmatmul.mubr.bf16.gmra.mxu0 %v3163
    %v4859 = vpop.f32.mrf.mxu0
    %v4860 = vadd.f32 %v4817, %v4859
    %v4861 = vpop.f32.mrf.mxu0
    %v4862 = vadd.f32 %v4819, %v4861
    %v4863 = vpop.f32.mrf.mxu0
    %v4864 = vadd.f32 %v4821, %v4863
    %v4865 = vpop.f32.mrf.mxu0
    %v4866 = vadd.f32 %v4823, %v4865
    %4867 = vdwg.mxu0
    %4868 = vmatprep.subr.bf16.mxu0 0
    %4869 = vmatpush1.bf16.msra.mxu0 %v4217
    %4870 = vmatprep.subr.bf16.mxu0 0
    %4871 = vmatpush1.bf16.msra.mxu0 %v4210
    %4872 = vmatprep.subr.bf16.mxu0 0
    %4873 = vmatpush1.bf16.msra.mxu0 %v4203
    %4874 = vmatprep.subr.bf16.mxu0 0
    %4875 = vmatpush1.bf16.msra.mxu0 %v4196
    %4876 = vmatprep.subr.bf16.mxu0 0
    %4877 = vmatpush1.bf16.msra.mxu0 %v4189
    %4878 = vmatprep.subr.bf16.mxu0 0
    %4879 = vmatpush1.bf16.msra.mxu0 %v4182
    %4880 = vmatprep.subr.bf16.mxu0 0
    %4881 = vmatpush1.bf16.msra.mxu0 %v4175
    %4882 = vmatprep.subr.bf16.mxu0 0
    %4883 = vmatpush1.bf16.msra.mxu0 %v4168
    %4884 = vmatprep.subr.bf16.mxu0 0
    %4885 = vmatpush2.bf16.msra.mxu0 %v4273
    %4886 = vmatprep.subr.bf16.mxu0 0
    %4887 = vmatpush2.bf16.msra.mxu0 %v4266
    %4888 = vmatprep.subr.bf16.mxu0 0
    %4889 = vmatpush2.bf16.msra.mxu0 %v4259
    %4890 = vmatprep.subr.bf16.mxu0 0
    %4891 = vmatpush2.bf16.msra.mxu0 %v4252
    %4892 = vmatprep.subr.bf16.mxu0 0
    %4893 = vmatpush2.bf16.msra.mxu0 %v4245
    %4894 = vmatprep.subr.bf16.mxu0 0
    %4895 = vmatpush2.bf16.msra.mxu0 %v4238
    %4896 = vmatprep.subr.bf16.mxu0 0
    %4897 = vmatpush2.bf16.msra.mxu0 %v4231
    %4898 = vmatprep.subr.bf16.mxu0 0
    %4899 = vmatpush2.bf16.msra.mxu0 %v4224
    %4900 = vmatprep.mubr.bf16.mxu0 %v3162
    %4901 = vmatmul.mubr.bf16.gmra.mxu0 %v3161
    %v4902 = vpop.f32.mrf.mxu0
    %v4903 = vadd.f32 %v3450, %v4902
    %v4904 = vpop.f32.mrf.mxu0
    %v4905 = vpop.f32.mrf.mxu0
    %v4906 = vadd.f32 %v3450, %v4905
    %v4907 = vpop.f32.mrf.mxu0
    %4908 = vdwg.mxu0
    %4909 = vmatprep.subr.bf16.mxu0 0
    %4910 = vmatpush1.bf16.msra.mxu0 %v4329
    %4911 = vmatprep.subr.bf16.mxu0 0
    %4912 = vmatpush1.bf16.msra.mxu0 %v4322
    %4913 = vmatprep.subr.bf16.mxu0 0
    %4914 = vmatpush1.bf16.msra.mxu0 %v4315
    %4915 = vmatprep.subr.bf16.mxu0 0
    %4916 = vmatpush1.bf16.msra.mxu0 %v4308
    %4917 = vmatprep.subr.bf16.mxu0 0
    %4918 = vmatpush1.bf16.msra.mxu0 %v4301
    %4919 = vmatprep.subr.bf16.mxu0 0
    %4920 = vmatpush1.bf16.msra.mxu0 %v4294
    %4921 = vmatprep.subr.bf16.mxu0 0
    %4922 = vmatpush1.bf16.msra.mxu0 %v4287
    %4923 = vmatprep.subr.bf16.mxu0 0
    %4924 = vmatpush1.bf16.msra.mxu0 %v4280
    %4925 = vmatprep.subr.bf16.mxu0 0
    %4926 = vmatpush2.bf16.msra.mxu0 %v4385
    %4927 = vmatprep.subr.bf16.mxu0 0
    %4928 = vmatpush2.bf16.msra.mxu0 %v4378
    %4929 = vmatprep.subr.bf16.mxu0 0
    %4930 = vmatpush2.bf16.msra.mxu0 %v4371
    %4931 = vmatprep.subr.bf16.mxu0 0
    %4932 = vmatpush2.bf16.msra.mxu0 %v4364
    %4933 = vmatprep.subr.bf16.mxu0 0
    %4934 = vmatpush2.bf16.msra.mxu0 %v4357
    %4935 = vmatprep.subr.bf16.mxu0 0
    %4936 = vmatpush2.bf16.msra.mxu0 %v4350
    %4937 = vmatprep.subr.bf16.mxu0 0
    %4938 = vmatpush2.bf16.msra.mxu0 %v4343
    %4939 = vmatprep.subr.bf16.mxu0 0
    %4940 = vmatpush2.bf16.msra.mxu0 %v4336
    %4941 = vmatprep.mubr.bf16.mxu0 %v3164
    %4942 = vmatmul.mubr.bf16.gmra.mxu0 %v3163
    %v4943 = vpop.f32.mrf.mxu0
    %v4944 = vadd.f32 %v4903, %v4943
    %v4945 = vpop.f32.mrf.mxu0
    %v4946 = vpop.f32.mrf.mxu0
    %v4947 = vadd.f32 %v4906, %v4946
    %v4948 = vpop.f32.mrf.mxu0
    %4949 = vdwg.mxu0
    %v4950 = vxor.u32 %v4688, 2147483648
    %v4951 = vxor.u32 %v4690, 2147483648
    %v4952 = vxor.u32 %v4774, 2147483648
    %v4953 = vxor.u32 %v4776, 2147483648
    %v4954 = vxor.u32 %v4860, 2147483648
    %v4955 = vxor.u32 %v4862, 2147483648
    %v4956 = vxor.u32 %v4944, 2147483648
    %v4957 = vxor.u32 %v4692, 2147483648
    %v4958 = vxor.u32 %v4694, 2147483648
    %v4959 = vxor.u32 %v4778, 2147483648
    %v4960 = vxor.u32 %v4780, 2147483648
    %v4961 = vxor.u32 %v4864, 2147483648
    %v4962 = vxor.u32 %v4866, 2147483648
    %v4963 = vxor.u32 %v4947, 2147483648
    %v4964 = vmul.f32 %v4950, 1.442695
    %v4965 = vpow.pop %v4964
    %v4966 = vmul.f32 %v4951, 1.442695
    %v4967 = vpow.pop %v4966
    %v4968 = vmul.f32 %v4952, 1.442695
    %v4969 = vpow.pop %v4968
    %v4970 = vmul.f32 %v4953, 1.442695
    %v4971 = vpow.pop %v4970
    %v4972 = vmul.f32 %v4954, 1.442695
    %v4973 = vpow.pop %v4972
    %v4974 = vmul.f32 %v4955, 1.442695
    %v4975 = vpow.pop %v4974
    %v4976 = vmul.f32 %v4956, 1.442695
    %v4977 = vpow.pop %v4976
    %v4978 = vmul.f32 %v4957, 1.442695
    %v4979 = vpow.pop %v4978
    %v4980 = vmul.f32 %v4958, 1.442695
    %v4981 = vpow.pop %v4980
    %v4982 = vmul.f32 %v4959, 1.442695
    %v4983 = vpow.pop %v4982
    %v4984 = vmul.f32 %v4960, 1.442695
    %v4985 = vpow.pop %v4984
    %v4986 = vmul.f32 %v4961, 1.442695
    %v4987 = vpow.pop %v4986
    %v4988 = vmul.f32 %v4962, 1.442695
    %v4989 = vpow.pop %v4988
    %v4990 = vmul.f32 %v4963, 1.442695
    %v4991 = vpow.pop %v4990
    %v4992 = vadd.f32 %v4965, 1.0
    %v4993 = vadd.f32 %v4967, 1.0
    %v4994 = vadd.f32 %v4969, 1.0
    %v4995 = vadd.f32 %v4971, 1.0
    %v4996 = vadd.f32 %v4973, 1.0
    %v4997 = vadd.f32 %v4975, 1.0
    %v4998 = vadd.f32 %v4977, 1.0
    %v4999 = vadd.f32 %v4979, 1.0
    %v5000 = vadd.f32 %v4981, 1.0
    %v5001 = vadd.f32 %v4983, 1.0
    %v5002 = vadd.f32 %v4985, 1.0
    %v5003 = vadd.f32 %v4987, 1.0
    %v5004 = vadd.f32 %v4989, 1.0
    %v5005 = vadd.f32 %v4991, 1.0
    %v5006 = vrcp.pop %v4992
    %v5007 = vmul.f32 1.0, %v5006
    %v5008 = vrcp.pop %v4993
    %v5009 = vmul.f32 1.0, %v5008
    %v5010 = vrcp.pop %v4994
    %v5011 = vmul.f32 1.0, %v5010
    %v5012 = vrcp.pop %v4995
    %v5013 = vmul.f32 1.0, %v5012
    %v5014 = vrcp.pop %v4996
    %v5015 = vmul.f32 1.0, %v5014
    %v5016 = vrcp.pop %v4997
    %v5017 = vmul.f32 1.0, %v5016
    %v5018 = vrcp.pop %v4998
    %v5019 = vmul.f32 1.0, %v5018
    %v5020 = vrcp.pop %v4999
    %v5021 = vmul.f32 1.0, %v5020
    %v5022 = vrcp.pop %v5000
    %v5023 = vmul.f32 1.0, %v5022
    %v5024 = vrcp.pop %v5001
    %v5025 = vmul.f32 1.0, %v5024
    %v5026 = vrcp.pop %v5002
    %v5027 = vmul.f32 1.0, %v5026
    %v5028 = vrcp.pop %v5003
    %v5029 = vmul.f32 1.0, %v5028
    %v5030 = vrcp.pop %v5004
    %v5031 = vmul.f32 1.0, %v5030
    %v5032 = vrcp.pop %v5005
    %v5033 = vmul.f32 1.0, %v5032
    %v5034 = vpack.c.bf16 %v5021, %v5007
    %v5035 = vpack.c.bf16 %v5023, %v5009
    %v5036 = vpack.c.bf16 %v5025, %v5011
    %v5037 = vpack.c.bf16 %v5027, %v5013
    %v5038 = vpack.c.bf16 %v5029, %v5015
    %v5039 = vpack.c.bf16 %v5031, %v5017
    %v5040 = vpack.c.bf16 %v5033, %v5019
    %v5048 = vunpack.c.l.b16 %v5034
    %v5049 = vunpack.c.l.b16 %v5035
    %v5050 = vunpack.c.l.b16 %v5036
    %v5051 = vunpack.c.l.b16 %v5037
    %v5052 = vunpack.c.l.b16 %v5038
    %v5053 = vunpack.c.l.b16 %v5039
    %v5054 = vunpack.c.l.b16 %v5040
    %v5055 = vpack.c.b16 %v5049, %v5048
    %v5056 = vpack.c.b16 %v5051, %v5050
    %v5057 = vpack.c.b16 %v5053, %v5052
    %v5058 = vpack.c.b16 %v5054, %v5054
    %5063 = vst [vmem:[#allocation11] sm:$0xff] %v5055
    %5064 = vst [vmem:[#allocation11 + $0x8] sm:$0xff] %v5056
    %5065 = vst [vmem:[#allocation11 + $0x10] sm:$0xff] %v5057
    %5066 = vst [vmem:[#allocation11 + $0x18] sm:$0xf] %v5058
    %v5067 = vunpack.c.h.b16 %v5034
    %v5068 = vunpack.c.h.b16 %v5035
    %v5069 = vunpack.c.h.b16 %v5036
    %v5070 = vunpack.c.h.b16 %v5037
    %v5071 = vunpack.c.h.b16 %v5038
    %v5072 = vunpack.c.h.b16 %v5039
    %v5073 = vunpack.c.h.b16 %v5040
    %v5074 = vpack.c.b16 %v5068, %v5067
    %v5075 = vpack.c.b16 %v5070, %v5069
    %v5076 = vpack.c.b16 %v5072, %v5071
    %v5077 = vpack.c.b16 %v5073, %v5073
    %5082 = vst [vmem:[#allocation12] sm:$0xff] %v5074
    %5083 = vst [vmem:[#allocation12 + $0x8] sm:$0xff] %v5075
    %5084 = vst [vmem:[#allocation12 + $0x10] sm:$0xff] %v5076
    %5085 = vst [vmem:[#allocation12 + $0x18] sm:$0xf] %v5077
    // Predicated region
    $region74: #{tpu_custom_call.1} parent=1 // pred_check
      _
    $region75: #{tpu_custom_call.1} parent=1 // pred_check_branch
      %5087 = sbr.rel (0) target = $region77
    $region76: #{tpu_custom_call.1} parent=1 // pred_region
      %s5089 = ssub.s32 448, 448
      %5090 = vsyncadd [#allocation5], %s5089
      %s5092 = sshll.u32 [#allocation11], 4
      %s5093 = int_to_ptr.vmem [resolvable:$true] %s5092
      %5095 = dma.vmem_to_hbm [thread:$0]  %s5093, 448, %s14, [#allocation5]
    $region77: #{tpu_custom_call.1} parent=1 // pred_fallthru
      _
    // Predicated region
    $region78: #{tpu_custom_call.1} parent=1 // pred_check
      _
    $region79: #{tpu_custom_call.1} parent=1 // pred_check_branch
      %5097 = sbr.rel (0) target = $region81
    $region80: #{tpu_custom_call.1} parent=1 // pred_region
      %s5099 = ssub.s32 448, 448
      %5100 = vsyncadd [#allocation13], %s5099
      %s5102 = sshll.u32 [#allocation12], 4
      %s5103 = int_to_ptr.vmem [resolvable:$true] %s5102
      %5105 = dma.vmem_to_hbm [thread:$0]  %s5103, 448, %s15, [#allocation13]
    $region81: #{tpu_custom_call.1} parent=1 // pred_fallthru
      _
    // Predicated region
    $region82: #{tpu_custom_call.1} parent=1 // pred_check
      _
    $region83: #{tpu_custom_call.1} parent=1 // pred_check_branch
      %5107 = sbr.rel (0) target = $region85
    $region84: #{tpu_custom_call.1} parent=1 // pred_region
      %s5109 = ssub.s32 128, 128
      %5110 = vsyncadd [#allocation13], %s5109
      %s5112 = sshll.u32 [#allocation14], 4
      %s5113 = int_to_ptr.vmem [resolvable:$true] %s5112
      %5115 = dma.vmem_to_hbm [thread:$0]  %s5113, 128, %s16, [#allocation13]
    $region85: #{tpu_custom_call.1} parent=1 // pred_fallthru
      _
    // Predicated region
    $region86: #{tpu_custom_call.1} parent=1 // pred_check
      _
    $region87: #{tpu_custom_call.1} parent=1 // pred_check_branch
      %5117 = sbr.rel (0) target = $region89
    $region88: #{tpu_custom_call.1} parent=1 // pred_region
      %5118 = dma.done [#allocation5], 448
    $region89: #{tpu_custom_call.1} parent=1 // pred_fallthru
      _
    // Predicated region
    $region90: #{tpu_custom_call.1} parent=1 // pred_check
      _
    $region91: #{tpu_custom_call.1} parent=1 // pred_check_branch
      %5120 = sbr.rel (0) target = $region93
    $region92: #{tpu_custom_call.1} parent=1 // pred_region
      %5121 = dma.done [#allocation13], 448
    $region93: #{tpu_custom_call.1} parent=1 // pred_fallthru
      _
    // Predicated region
    $region94: #{tpu_custom_call.1} parent=1 // pred_check
      _
    $region95: #{tpu_custom_call.1} parent=1 // pred_check_branch
      %5123 = sbr.rel (0) target = $region97
    $region96: #{tpu_custom_call.1} parent=1 // pred_region
      %5124 = dma.done [#allocation13], 128
    $region97: #{tpu_custom_call.1} parent=1 // pred_fallthru
      _
    %5125 = vsyncpa [#allocation4], 1
    %5126 = vsyncpa [#allocation7], 1
    %5127 = vsyncpa [#allocation10], 1
    %5128 = vsyncpa [#allocation5], 1
    %5129 = vsyncpa [#allocation13], 1

</llo_original>
